<compile_context>
chip_gen: v6e
topology: v6e:2x2x1
jax: 0.10.0
libtpu: 0.0.40
codegen_flags: <defaults>
</compile_context>

<pallas_src>
import jax
import jax.numpy as jnp
from jax.experimental import pallas as pl
from jax.experimental.pallas import tpu as pltpu

LANES = 128  # lane-dense channel padding for all kernel outputs


def _round_up(x, m):
    return ((x + m - 1) // m) * m


# --------------------------- Pallas kernels ----------------------------------


def _fused_conv1_conv2_cat_kernel(p1_ref, w1_ref, b1_ref, w2_ref, b2_ref,
                                  cat_ref):
    """conv1 -> tanh -> conv2(1x1) -> tanh -> cat([v4, v1]) in one kernel.

    p1 : (M, 49)   im2col patches of the 1-channel input (7x7, stride 2, pad 3)
    w1 : (49, 64)  conv1 weight, OC zero-padded 24 -> 64
    w2 : (64, 64)  conv2 weight, IC/OC zero-padded 24 -> 64
    cat: (M, 128)  [tanh(conv2(tanh(v1))) | v1], each half 64 lanes wide
                   (real channels at lanes 0..23 and 64..87, the rest zeros).
    """
    v1 = jnp.dot(p1_ref[...], w1_ref[...],
                 preferred_element_type=jnp.float32) + b1_ref[...]
    v2 = jnp.tanh(v1)
    v4 = jnp.tanh(jnp.dot(v2, w2_ref[...],
                          preferred_element_type=jnp.float32) + b2_ref[...])
    cat_ref[...] = jnp.concatenate([v4, v1], axis=-1)


def _matmul_bias_tanh_kernel(p_ref, w_ref, b_ref, act_ref):
    """act = tanh(p @ w + b).  (conv3: the pre-activation output is dead.)"""
    acc = jnp.dot(p_ref[...], w_ref[...], preferred_element_type=jnp.float32)
    act_ref[...] = jnp.tanh(acc + b_ref[...])


def _matmul_bias_kernel(p_ref, w_ref, b_ref, lin_ref):
    """lin = p @ w + b.  (conv4: the module output has no activation.)"""
    acc = jnp.dot(p_ref[...], w_ref[...], preferred_element_type=jnp.float32)
    lin_ref[...] = acc + b_ref[...]


def _single_step_call(kernel, inputs, out_shape):
    """pallas_call with a single grid step; every operand is one full block."""
    in_specs = [
        pl.BlockSpec(a.shape, lambda i, nd=a.ndim: (0,) * nd) for a in inputs
    ]
    out_specs = pl.BlockSpec(out_shape.shape,
                             lambda i, nd=len(out_shape.shape): (0,) * nd)
    return pl.pallas_call(
        kernel,
        out_shape=out_shape,
        grid=(1,),
        in_specs=in_specs,
        out_specs=out_specs,
        compiler_params=pltpu.CompilerParams(
            dimension_semantics=("arbitrary",)),
    )(*inputs)


# ------------------------------ JAX glue --------------------------------------


def _im2col(x_nhwc, kh, kw, stride, padding):
    """Explicit im2col: (N,H,W,C) -> (N*OH*OW, kh*kw*C), tap-major/chan-minor."""
    N, H, W, C = x_nhwc.shape
    xp = jnp.pad(x_nhwc,
                 ((0, 0), (padding, padding), (padding, padding), (0, 0)))
    Hp, Wp = H + 2 * padding, W + 2 * padding
    OH = (Hp - kh) // stride + 1
    OW = (Wp - kw) // stride + 1
    taps = []
    for i in range(kh):
        for j in range(kw):
            taps.append(xp[:, i:i + stride * (OH - 1) + 1:stride,
                           j:j + stride * (OW - 1) + 1:stride, :])
    patches = jnp.stack(taps, axis=3).reshape(N * OH * OW, kh * kw * C)
    return patches, OH, OW


def _pad_rows(a, rows):
    if a.shape[0] == rows:
        return a
    return jnp.pad(a, ((0, rows - a.shape[0]), (0, 0)))


def model_tanh_forward(x_nchw, params):
    """Pallas implementation of ModelTanh.forward.  Input/output are NCHW."""
    f32 = jnp.float32
    x = jnp.transpose(x_nchw, (0, 2, 3, 1)).astype(f32)  # NCHW -> NHWC
    N = x.shape[0]

    # --- fused conv1 -> tanh -> conv2(1x1) -> tanh -> channel concat ----------
    p1, OH1, OW1 = _im2col(x, 7, 7, stride=2, padding=3)       # (M1, 49)
    M1 = N * OH1 * OW1
    M1p = _round_up(M1, 8)
    p1 = _pad_rows(p1, M1p)

    w1 = jnp.transpose(params["w1"], (2, 3, 1, 0)).reshape(49, 24)
    w1 = jnp.pad(w1, ((0, 0), (0, 64 - 24)))                   # (49, 64)
    b1 = jnp.pad(params["b1"], (0, 64 - 24)).reshape(1, 64)
    w2 = jnp.pad(params["w2"].reshape(24, 24).T,
                 ((0, 64 - 24), (0, 64 - 24)))                 # (64, 64)
    b2 = jnp.pad(params["b2"], (0, 64 - 24)).reshape(1, 64)

    cat = _single_step_call(
        _fused_conv1_conv2_cat_kernel, (p1, w1, b1, w2, b2),
        jax.ShapeDtypeStruct((M1p, LANES), f32))
    if M1p != M1:
        cat = cat[:M1]
    cat = cat.reshape(N, OH1, OW1, LANES)  # lanes: [v4 0..23 | 0 | v1 64..87 | 0]

    # --- conv3 (1x1, stride 2, pad 1) + tanh -----------------------------------
    # For a 1x1 conv, im2col is just spatial zero-pad + stride-2 subsampling.
    cat_p = jnp.pad(cat, ((0, 0), (1, 1), (1, 1), (0, 0)))
    sub = cat_p[:, ::2, ::2, :]                                # (N, OH3, OW3, 128)
    OH3, OW3 = sub.shape[1], sub.shape[2]
    M3 = N * OH3 * OW3
    M3p = _round_up(M3, 8)
    p3 = _pad_rows(sub.reshape(M3, LANES), M3p)

    w3_2d = params["w3"].reshape(36, 48).T                     # (IC=48, OC=36)
    w3_top = jnp.pad(w3_2d[:24], ((0, 40), (0, 0)))            # v4 lanes 0..23
    w3_bot = jnp.pad(w3_2d[24:], ((0, 40), (0, 0)))            # v1 lanes 64..87
    w3m = jnp.pad(jnp.concatenate([w3_top, w3_bot], axis=0),
                  ((0, 0), (0, LANES - 36)))                   # (128, 128)
    b3 = jnp.pad(params["b3"], (0, LANES - 36)).reshape(1, LANES)

    v6 = _single_step_call(
        _matmul_bias_tanh_kernel, (p3, w3m, b3),
        jax.ShapeDtypeStruct((M3p, LANES), f32))
    if M3p != M3:
        v6 = v6[:M3]
    v6 = v6.reshape(N, OH3, OW3, LANES)                        # real channels 0..35

    # --- conv4 (7x7, stride 2, pad 1): pre-activation output -------------------
    p4, OH4, OW4 = _im2col(v6, 7, 7, stride=2, padding=1)      # (M4, 49*128)
    M4 = N * OH4 * OW4
    M4p = _round_up(M4, 8)
    p4 = _pad_rows(p4, M4p)

    w4 = jnp.transpose(params["w4"], (2, 3, 1, 0))             # (7, 7, 36, 33)
    w4 = jnp.pad(w4, ((0, 0), (0, 0), (0, LANES - 36), (0, LANES - 33)))
    w4m = w4.reshape(49 * LANES, LANES)
    b4 = jnp.pad(params["b4"], (0, LANES - 33)).reshape(1, LANES)

    out = _single_step_call(
        _matmul_bias_kernel, (p4, w4m, b4),
        jax.ShapeDtypeStruct((M4p, LANES), f32))
    out = out[:M4, :33].reshape(N, OH4, OW4, 33)
    return jnp.transpose(out, (0, 3, 1, 2))                    # NHWC -> NCHW


# ------------------------------ params / reference ----------------------------


def init_params(key):
    def conv_init(key, oc, ic, kh, kw):
        k1, k2 = jax.random.split(key)
        fan_in = ic * kh * kw
        w = jax.random.normal(k1, (oc, ic, kh, kw), jnp.float32) / jnp.sqrt(fan_in)
        b = jax.random.normal(k2, (oc,), jnp.float32) * 0.05
        return w, b

    k1, k2, k3, k4 = jax.random.split(key, 4)
    p = {}
    p["w1"], p["b1"] = conv_init(k1, 24, 1, 7, 7)    # Conv2d(1, 24, 7, s=2, p=3)
    p["w2"], p["b2"] = conv_init(k2, 24, 24, 1, 1)   # Conv2d(24, 24, 1)
    p["w3"], p["b3"] = conv_init(k3, 36, 48, 1, 1)   # Conv2d(48->36, 1, s=2, p=1)
    p["w4"], p["b4"] = conv_init(k4, 33, 36, 7, 7)   # Conv2d(36->33, 7, s=2, p=1)
    return p


def reference_forward(x_nchw, params):
    """Pure-JAX (lax.conv) reference for correctness checking."""
    def conv(x, w, b, stride, pad):
        y = jax.lax.conv_general_dilated(
            x, w, (stride, stride), [(pad, pad), (pad, pad)],
            dimension_numbers=("NCHW", "OIHW", "NCHW"))
        return y + b[None, :, None, None]

    v1 = conv(x_nchw, params["w1"], params["b1"], 2, 3)
    v2 = jnp.tanh(v1)
    v3 = conv(v2, params["w2"], params["b2"], 1, 0)
    v4 = jnp.tanh(v3)
    v5 = conv(jnp.concatenate([v4, v1], axis=1), params["w3"], params["b3"], 2, 1)
    v6 = jnp.tanh(v5)
    return conv(v6, params["w4"], params["b4"], 2, 1)


if __name__ == "__main__":
    key = jax.random.PRNGKey(0)
    kx, kp = jax.random.split(key)

    # Small input consistent with the module's (N=1, C=1, H, W) convention.
    x = jax.random.normal(kx, (1, 1, 24, 64), jnp.float32)
    params = init_params(kp)

    out = jax.jit(model_tanh_forward)(x, params)
    out = jax.block_until_ready(out)

    ref = reference_forward(x, params)
    assert out.shape == ref.shape, (out.shape, ref.shape)
    assert jnp.allclose(out, ref, rtol=3e-2, atol=3e-2), "mismatch vs lax.conv reference"

    print("KERNEL_OK")
</pallas_src>

<mosaic_0001>
module attributes {stable_mosaic.version = 11 : i64} {
  func.func @_fused_conv1_conv2_cat_kernel(%arg0: i32, %arg1: memref<384x49xf32, #tpu.memory_space<vmem>>, %arg2: memref<49x64xf32, #tpu.memory_space<vmem>>, %arg3: memref<1x64xf32, #tpu.memory_space<vmem>>, %arg4: memref<64x64xf32, #tpu.memory_space<vmem>>, %arg5: memref<1x64xf32, #tpu.memory_space<vmem>>, %arg6: memref<384x128xf32, #tpu.memory_space<vmem>>) attributes {dimension_semantics = [#tpu.dimension_semantics<arbitrary>], iteration_bounds = array<i64: 1>, scalar_prefetch = 0 : i64, scratch_operands = 0 : i64, tpu.core_type = #tpu.core_type<tc>, window_params = [{pipeline_mode = #tpu.pipeline_mode<synchronous>, transform_indices = @transform_0, window_bounds = array<i64: 384, 49>}, {pipeline_mode = #tpu.pipeline_mode<synchronous>, transform_indices = @transform_1, window_bounds = array<i64: 49, 64>}, {pipeline_mode = #tpu.pipeline_mode<synchronous>, transform_indices = @transform_2, window_bounds = array<i64: 1, 64>}, {pipeline_mode = #tpu.pipeline_mode<synchronous>, transform_indices = @transform_3, window_bounds = array<i64: 64, 64>}, {pipeline_mode = #tpu.pipeline_mode<synchronous>, transform_indices = @transform_4, window_bounds = array<i64: 1, 64>}, {pipeline_mode = #tpu.pipeline_mode<synchronous>, transform_indices = @transform_5, window_bounds = array<i64: 384, 128>}]} {
    %c0 = arith.constant 0 : index
    %c0_0 = arith.constant 0 : index
    %0 = vector.load %arg1[%c0, %c0_0] : memref<384x49xf32, #tpu.memory_space<vmem>>, vector<384x49xf32>
    %c0_1 = arith.constant 0 : index
    %c0_2 = arith.constant 0 : index
    %1 = vector.load %arg2[%c0_1, %c0_2] : memref<49x64xf32, #tpu.memory_space<vmem>>, vector<49x64xf32>
    %cst = arith.constant dense<0.000000e+00> : vector<384x64xf32>
    %2 = tpu.matmul %0, %1, %cst {dimension_numbers = #tpu.dot_dimension_numbers<[1], [0], [0], [1], [0, 0, 1, 1], [], []>} : vector<384x49xf32>, vector<49x64xf32>, vector<384x64xf32> -> vector<384x64xf32>
    %c0_3 = arith.constant 0 : index
    %c0_4 = arith.constant 0 : index
    %3 = vector.load %arg3[%c0_3, %c0_4] : memref<1x64xf32, #tpu.memory_space<vmem>>, vector<1x64xf32>
    %4 = vector.broadcast %3 : vector<1x64xf32> to vector<384x64xf32>
    %5 = arith.addf %2, %4 : vector<384x64xf32>
    %6 = math.tanh %5 : vector<384x64xf32>
    %c0_5 = arith.constant 0 : index
    %c0_6 = arith.constant 0 : index
    %7 = vector.load %arg4[%c0_5, %c0_6] : memref<64x64xf32, #tpu.memory_space<vmem>>, vector<64x64xf32>
    %cst_7 = arith.constant dense<0.000000e+00> : vector<384x64xf32>
    %8 = tpu.matmul %6, %7, %cst_7 {dimension_numbers = #tpu.dot_dimension_numbers<[1], [0], [0], [1], [0, 0, 1, 1], [], []>} : vector<384x64xf32>, vector<64x64xf32>, vector<384x64xf32> -> vector<384x64xf32>
    %c0_8 = arith.constant 0 : index
    %c0_9 = arith.constant 0 : index
    %9 = vector.load %arg5[%c0_8, %c0_9] : memref<1x64xf32, #tpu.memory_space<vmem>>, vector<1x64xf32>
    %10 = vector.broadcast %9 : vector<1x64xf32> to vector<384x64xf32>
    %11 = arith.addf %8, %10 : vector<384x64xf32>
    %12 = math.tanh %11 : vector<384x64xf32>
    %13 = tpu.concatenate %12, %5 in 1 : vector<384x64xf32>, vector<384x64xf32> -> vector<384x128xf32>
    %c0_10 = arith.constant 0 : index
    %c0_11 = arith.constant 0 : index
    %14 = vector.load %arg6[%c0_10, %c0_11] : memref<384x128xf32, #tpu.memory_space<vmem>>, vector<384x128xf32>
    tpu.vector_store %arg6[%c0_10, %c0_11], %13 {strides = array<i32>} : memref<384x128xf32, #tpu.memory_space<vmem>>, vector<384x128xf32>,
    return
  }
  func.func @transform_0(%arg0: i32) -> (i32, i32) {
    %c0_i32 = arith.constant 0 : i32
    %c0_i32_0 = arith.constant 0 : i32
    %c0_i32_1 = arith.constant 0 : i32
    return %c0_i32, %c0_i32_0 : i32, i32
  }
  func.func @transform_1(%arg0: i32) -> (i32, i32) {
    %c0_i32 = arith.constant 0 : i32
    %c0_i32_0 = arith.constant 0 : i32
    %c0_i32_1 = arith.constant 0 : i32
    return %c0_i32, %c0_i32_0 : i32, i32
  }
  func.func @transform_2(%arg0: i32) -> (i32, i32) {
    %c0_i32 = arith.constant 0 : i32
    %c0_i32_0 = arith.constant 0 : i32
    %c0_i32_1 = arith.constant 0 : i32
    return %c0_i32, %c0_i32_0 : i32, i32
  }
  func.func @transform_3(%arg0: i32) -> (i32, i32) {
    %c0_i32 = arith.constant 0 : i32
    %c0_i32_0 = arith.constant 0 : i32
    %c0_i32_1 = arith.constant 0 : i32
    return %c0_i32, %c0_i32_0 : i32, i32
  }
  func.func @transform_4(%arg0: i32) -> (i32, i32) {
    %c0_i32 = arith.constant 0 : i32
    %c0_i32_0 = arith.constant 0 : i32
    %c0_i32_1 = arith.constant 0 : i32
    return %c0_i32, %c0_i32_0 : i32, i32
  }
  func.func @transform_5(%arg0: i32) -> (i32, i32) {
    %c0_i32 = arith.constant 0 : i32
    %c0_i32_0 = arith.constant 0 : i32
    %c0_i32_1 = arith.constant 0 : i32
    return %c0_i32, %c0_i32_0 : i32, i32
  }
}

module attributes {stable_mosaic.version = 11 : i64} {
  func.func @_matmul_bias_tanh_kernel(%arg0: i32, %arg1: memref<120x128xf32, #tpu.memory_space<vmem>>, %arg2: memref<128x128xf32, #tpu.memory_space<vmem>>, %arg3: memref<1x128xf32, #tpu.memory_space<vmem>>, %arg4: memref<120x128xf32, #tpu.memory_space<vmem>>) attributes {dimension_semantics = [#tpu.dimension_semantics<arbitrary>], iteration_bounds = array<i64: 1>, scalar_prefetch = 0 : i64, scratch_operands = 0 : i64, tpu.core_type = #tpu.core_type<tc>, window_params = [{pipeline_mode = #tpu.pipeline_mode<synchronous>, transform_indices = @transform_0, window_bounds = array<i64: 120, 128>}, {pipeline_mode = #tpu.pipeline_mode<synchronous>, transform_indices = @transform_1, window_bounds = array<i64: 128, 128>}, {pipeline_mode = #tpu.pipeline_mode<synchronous>, transform_indices = @transform_2, window_bounds = array<i64: 1, 128>}, {pipeline_mode = #tpu.pipeline_mode<synchronous>, transform_indices = @transform_3, window_bounds = array<i64: 120, 128>}]} {
    %c0 = arith.constant 0 : index
    %c0_0 = arith.constant 0 : index
    %0 = vector.load %arg1[%c0, %c0_0] : memref<120x128xf32, #tpu.memory_space<vmem>>, vector<120x128xf32>
    %c0_1 = arith.constant 0 : index
    %c0_2 = arith.constant 0 : index
    %1 = vector.load %arg2[%c0_1, %c0_2] : memref<128x128xf32, #tpu.memory_space<vmem>>, vector<128x128xf32>
    %cst = arith.constant dense<0.000000e+00> : vector<120x128xf32>
    %2 = tpu.matmul %0, %1, %cst {dimension_numbers = #tpu.dot_dimension_numbers<[1], [0], [0], [1], [0, 0, 1, 1], [], []>} : vector<120x128xf32>, vector<128x128xf32>, vector<120x128xf32> -> vector<120x128xf32>
    %c0_3 = arith.constant 0 : index
    %c0_4 = arith.constant 0 : index
    %3 = vector.load %arg3[%c0_3, %c0_4] : memref<1x128xf32, #tpu.memory_space<vmem>>, vector<1x128xf32>
    %4 = vector.broadcast %3 : vector<1x128xf32> to vector<120x128xf32>
    %5 = arith.addf %2, %4 : vector<120x128xf32>
    %6 = math.tanh %5 : vector<120x128xf32>
    %c0_5 = arith.constant 0 : index
    %c0_6 = arith.constant 0 : index
    %7 = vector.load %arg4[%c0_5, %c0_6] : memref<120x128xf32, #tpu.memory_space<vmem>>, vector<120x128xf32>
    tpu.vector_store %arg4[%c0_5, %c0_6], %6 {strides = array<i32>} : memref<120x128xf32, #tpu.memory_space<vmem>>, vector<120x128xf32>,
    return
  }
  func.func @transform_0(%arg0: i32) -> (i32, i32) {
    %c0_i32 = arith.constant 0 : i32
    %c0_i32_0 = arith.constant 0 : i32
    %c0_i32_1 = arith.constant 0 : i32
    return %c0_i32, %c0_i32_0 : i32, i32
  }
  func.func @transform_1(%arg0: i32) -> (i32, i32) {
    %c0_i32 = arith.constant 0 : i32
    %c0_i32_0 = arith.constant 0 : i32
    %c0_i32_1 = arith.constant 0 : i32
    return %c0_i32, %c0_i32_0 : i32, i32
  }
  func.func @transform_2(%arg0: i32) -> (i32, i32) {
    %c0_i32 = arith.constant 0 : i32
    %c0_i32_0 = arith.constant 0 : i32
    %c0_i32_1 = arith.constant 0 : i32
    return %c0_i32, %c0_i32_0 : i32, i32
  }
  func.func @transform_3(%arg0: i32) -> (i32, i32) {
    %c0_i32 = arith.constant 0 : i32
    %c0_i32_0 = arith.constant 0 : i32
    %c0_i32_1 = arith.constant 0 : i32
    return %c0_i32, %c0_i32_0 : i32, i32
  }
}

module attributes {stable_mosaic.version = 11 : i64} {
  func.func @_matmul_bias_kernel(%arg0: i32, %arg1: memref<16x6272xf32, #tpu.memory_space<vmem>>, %arg2: memref<6272x128xf32, #tpu.memory_space<vmem>>, %arg3: memref<1x128xf32, #tpu.memory_space<vmem>>, %arg4: memref<16x128xf32, #tpu.memory_space<vmem>>) attributes {dimension_semantics = [#tpu.dimension_semantics<arbitrary>], iteration_bounds = array<i64: 1>, scalar_prefetch = 0 : i64, scratch_operands = 0 : i64, tpu.core_type = #tpu.core_type<tc>, window_params = [{pipeline_mode = #tpu.pipeline_mode<synchronous>, transform_indices = @transform_0, window_bounds = array<i64: 16, 6272>}, {pipeline_mode = #tpu.pipeline_mode<synchronous>, transform_indices = @transform_1, window_bounds = array<i64: 6272, 128>}, {pipeline_mode = #tpu.pipeline_mode<synchronous>, transform_indices = @transform_2, window_bounds = array<i64: 1, 128>}, {pipeline_mode = #tpu.pipeline_mode<synchronous>, transform_indices = @transform_3, window_bounds = array<i64: 16, 128>}]} {
    %c0 = arith.constant 0 : index
    %c0_0 = arith.constant 0 : index
    %0 = vector.load %arg1[%c0, %c0_0] : memref<16x6272xf32, #tpu.memory_space<vmem>>, vector<16x6272xf32>
    %c0_1 = arith.constant 0 : index
    %c0_2 = arith.constant 0 : index
    %1 = vector.load %arg2[%c0_1, %c0_2] : memref<6272x128xf32, #tpu.memory_space<vmem>>, vector<6272x128xf32>
    %cst = arith.constant dense<0.000000e+00> : vector<16x128xf32>
    %2 = tpu.matmul %0, %1, %cst {dimension_numbers = #tpu.dot_dimension_numbers<[1], [0], [0], [1], [0, 0, 1, 1], [], []>} : vector<16x6272xf32>, vector<6272x128xf32>, vector<16x128xf32> -> vector<16x128xf32>
    %c0_3 = arith.constant 0 : index
    %c0_4 = arith.constant 0 : index
    %3 = vector.load %arg3[%c0_3, %c0_4] : memref<1x128xf32, #tpu.memory_space<vmem>>, vector<1x128xf32>
    %4 = vector.broadcast %3 : vector<1x128xf32> to vector<16x128xf32>
    %5 = arith.addf %2, %4 : vector<16x128xf32>
    %c0_5 = arith.constant 0 : index
    %c0_6 = arith.constant 0 : index
    %6 = vector.load %arg4[%c0_5, %c0_6] : memref<16x128xf32, #tpu.memory_space<vmem>>, vector<16x128xf32>
    tpu.vector_store %arg4[%c0_5, %c0_6], %5 {strides = array<i32>} : memref<16x128xf32, #tpu.memory_space<vmem>>, vector<16x128xf32>,
    return
  }
  func.func @transform_0(%arg0: i32) -> (i32, i32) {
    %c0_i32 = arith.constant 0 : i32
    %c0_i32_0 = arith.constant 0 : i32
    %c0_i32_1 = arith.constant 0 : i32
    return %c0_i32, %c0_i32_0 : i32, i32
  }
  func.func @transform_1(%arg0: i32) -> (i32, i32) {
    %c0_i32 = arith.constant 0 : i32
    %c0_i32_0 = arith.constant 0 : i32
    %c0_i32_1 = arith.constant 0 : i32
    return %c0_i32, %c0_i32_0 : i32, i32
  }
  func.func @transform_2(%arg0: i32) -> (i32, i32) {
    %c0_i32 = arith.constant 0 : i32
    %c0_i32_0 = arith.constant 0 : i32
    %c0_i32_1 = arith.constant 0 : i32
    return %c0_i32, %c0_i32_0 : i32, i32
  }
  func.func @transform_3(%arg0: i32) -> (i32, i32) {
    %c0_i32 = arith.constant 0 : i32
    %c0_i32_0 = arith.constant 0 : i32
    %c0_i32_1 = arith.constant 0 : i32
    return %c0_i32, %c0_i32_0 : i32, i32
  }
}

</mosaic_0001>

<llo_original>
// kernel: model_tanh_forward.4
$region0: #{model_tanh_forward.4}
  #allocation0 [shape = 'u32[]', space=smem, size = 0x4, offset = 0x4, fixed_abs, tag = 'smem constant byte address 0x4 - core index']
  #allocation1 [shape = 'u32[144,128]{1,0:T(1,128)}', space=vmem, size = 0x12000, scoped, tag = 'internal scratch']
  %s0 = inlined_call_operand.vmem [shape: f32[120,128], index: 0, kind: input, shape index: {}]
  %s1 = inlined_call_operand.vmem [shape: f32[128,128], index: 1, kind: input, shape index: {}]
  %s2 = inlined_call_operand.vmem [shape: f32[1,128], index: 2, kind: input, shape index: {}]
  %s3 = inlined_call_operand.vmem [shape: f32[120,128], index: 3, kind: output, shape index: {}]
  %s4 = sld [smem:[#allocation0]]
  $region22: #{model_tanh_forward.4} parent=0
    _
  %s6 = ssub.s32 1, %s4
  %s7 = scalar_select 0, %s6, %s4
  // Predicated region
  $region2: #{model_tanh_forward.4} parent=0 // pred_check
    _
  $region3: #{model_tanh_forward.4} parent=0 // pred_check_branch
    %9 = sbr.rel (0) target = $region5
  $region4: #{model_tanh_forward.4} parent=0 // pred_region
    _
  $region5: #{model_tanh_forward.4} parent=0 // pred_fallthru
    _
  // Predicated region
  $region6: #{model_tanh_forward.4} parent=0 // pred_check
    _
  $region7: #{model_tanh_forward.4} parent=0 // pred_check_branch
    %11 = sbr.rel (0) target = $region9
  $region8: #{model_tanh_forward.4} parent=0 // pred_region
    _
  $region9: #{model_tanh_forward.4} parent=0 // pred_fallthru
    _
  // Predicated region
  $region10: #{model_tanh_forward.4} parent=0 // pred_check
    _
  $region11: #{model_tanh_forward.4} parent=0 // pred_check_branch
    %13 = sbr.rel (0) target = $region13
  $region12: #{model_tanh_forward.4} parent=0 // pred_region
    _
  $region13: #{model_tanh_forward.4} parent=0 // pred_fallthru
    _
  %v14 = vld [vmem:[%s0] sm:$0xff]
  %v15 = vld [vmem:[%s0 + $0x8] sm:$0xff]
  %v16 = vld [vmem:[%s0 + $0x10] sm:$0xff]
  %v17 = vld [vmem:[%s0 + $0x18] sm:$0xff]
  %v18 = vld [vmem:[%s0 + $0x20] sm:$0xff]
  %v19 = vld [vmem:[%s0 + $0x28] sm:$0xff]
  %v20 = vld [vmem:[%s0 + $0x30] sm:$0xff]
  %v21 = vld [vmem:[%s0 + $0x38] sm:$0xff]
  %v22 = vld [vmem:[%s0 + $0x40] sm:$0xff]
  %v23 = vld [vmem:[%s0 + $0x48] sm:$0xff]
  %v24 = vld [vmem:[%s0 + $0x50] sm:$0xff]
  %v25 = vld [vmem:[%s0 + $0x58] sm:$0xff]
  %v26 = vld [vmem:[%s0 + $0x60] sm:$0xff]
  %v27 = vld [vmem:[%s0 + $0x68] sm:$0xff]
  %v28 = vld [vmem:[%s0 + $0x70] sm:$0xff]
  %v29 = vld [vmem:[%s1] sm:$0xff]
  %v30 = vld [vmem:[%s1 + $0x8] sm:$0xff]
  %v31 = vld [vmem:[%s1 + $0x10] sm:$0xff]
  %v32 = vld [vmem:[%s1 + $0x18] sm:$0xff]
  %v33 = vld [vmem:[%s1 + $0x20] sm:$0xff]
  %v34 = vld [vmem:[%s1 + $0x28] sm:$0xff]
  %v35 = vld [vmem:[%s1 + $0x30] sm:$0xff]
  %v36 = vld [vmem:[%s1 + $0x38] sm:$0xff]
  %v37 = vld [vmem:[%s1 + $0x40] sm:$0xff]
  %v38 = vld [vmem:[%s1 + $0x48] sm:$0xff]
  %v39 = vld [vmem:[%s1 + $0x50] sm:$0xff]
  %v40 = vld [vmem:[%s1 + $0x58] sm:$0xff]
  %v41 = vld [vmem:[%s1 + $0x60] sm:$0xff]
  %v42 = vld [vmem:[%s1 + $0x68] sm:$0xff]
  %v43 = vld [vmem:[%s1 + $0x70] sm:$0xff]
  %v44 = vld [vmem:[%s1 + $0x78] sm:$0xff]
  %v45 = vld [vmem:[%s2] sm:$0x1]
  %v47 = vlaneseq
  %v48 = vshrl.u32 %v47, 7
  %v49 = vsub.s32 0, %v48
  %v50 = vrot.slane %v45, %v49
  %52 = vmatprep.subr.mxu0 0.0
  %53 = vmatpush1.msra.mxu0 %v44
  %54 = vmatprep.subr.mxu0 0.0
  %55 = vmatpush1.msra.mxu0 %v43
  %56 = vmatprep.subr.mxu0 0.0
  %57 = vmatpush1.msra.mxu0 %v42
  %58 = vmatprep.subr.mxu0 0.0
  %59 = vmatpush1.msra.mxu0 %v41
  %60 = vmatprep.subr.mxu0 0.0
  %61 = vmatpush1.msra.mxu0 %v40
  %62 = vmatprep.subr.mxu0 0.0
  %63 = vmatpush1.msra.mxu0 %v39
  %64 = vmatprep.subr.mxu0 0.0
  %65 = vmatpush1.msra.mxu0 %v38
  %66 = vmatprep.subr.mxu0 0.0
  %67 = vmatpush1.msra.mxu0 %v37
  %68 = vmatprep.subr.mxu0 0.0
  %69 = vmatpush1.msra.mxu0 %v36
  %70 = vmatprep.subr.mxu0 0.0
  %71 = vmatpush1.msra.mxu0 %v35
  %72 = vmatprep.subr.mxu0 0.0
  %73 = vmatpush1.msra.mxu0 %v34
  %74 = vmatprep.subr.mxu0 0.0
  %75 = vmatpush1.msra.mxu0 %v33
  %76 = vmatprep.subr.mxu0 0.0
  %77 = vmatpush1.msra.mxu0 %v32
  %78 = vmatprep.subr.mxu0 0.0
  %79 = vmatpush1.msra.mxu0 %v31
  %80 = vmatprep.subr.mxu0 0.0
  %81 = vmatpush1.msra.mxu0 %v30
  %82 = vmatprep.subr.mxu0 0.0
  %83 = vmatpush1.msra.mxu0 %v29
  %84 = vmatprep.subr.mxu0 0.0
  %85 = vmatpush2.msra.mxu0 0.0
  %86 = vmatprep.subr.mxu0 0.0
  %87 = vmatpush2.msra.mxu0 0.0
  %88 = vmatprep.subr.mxu0 0.0
  %89 = vmatpush2.msra.mxu0 0.0
  %90 = vmatprep.subr.mxu0 0.0
  %91 = vmatpush2.msra.mxu0 0.0
  %92 = vmatprep.subr.mxu0 0.0
  %93 = vmatpush2.msra.mxu0 0.0
  %94 = vmatprep.subr.mxu0 0.0
  %95 = vmatpush2.msra.mxu0 0.0
  %96 = vmatprep.subr.mxu0 0.0
  %97 = vmatpush2.msra.mxu0 0.0
  %98 = vmatprep.subr.mxu0 0.0
  %99 = vmatpush2.msra.mxu0 0.0
  %100 = vmatprep.subr.mxu0 0.0
  %101 = vmatpush2.msra.mxu0 0.0
  %102 = vmatprep.subr.mxu0 0.0
  %103 = vmatpush2.msra.mxu0 0.0
  %104 = vmatprep.subr.mxu0 0.0
  %105 = vmatpush2.msra.mxu0 0.0
  %106 = vmatprep.subr.mxu0 0.0
  %107 = vmatpush2.msra.mxu0 0.0
  %108 = vmatprep.subr.mxu0 0.0
  %109 = vmatpush2.msra.mxu0 0.0
  %110 = vmatprep.subr.mxu0 0.0
  %111 = vmatpush2.msra.mxu0 0.0
  %112 = vmatprep.subr.mxu0 0.0
  %113 = vmatpush2.msra.mxu0 0.0
  %114 = vmatprep.subr.mxu0 0.0
  %115 = vmatpush2.msra.mxu0 0.0
  %116 = vmatprep.mubr.f32.mxu0 0.0
  %117 = vmatmul.mubr.f32.gmra.mxu0 %v14
  %v118 = vpop.f32.mrf.mxu0
  %v119 = vadd.f32 %v50, %v118
  %v120 = vpop.f32.mrf.mxu0
  %121 = vmatprep.mubr.f32.mxu0 0.0
  %122 = vmatmul.mubr.f32.gmra.mxu0 %v15
  %v123 = vpop.f32.mrf.mxu0
  %v124 = vadd.f32 %v50, %v123
  %v125 = vpop.f32.mrf.mxu0
  %126 = vmatprep.mubr.f32.mxu0 0.0
  %127 = vmatmul.mubr.f32.gmra.mxu0 %v16
  %v128 = vpop.f32.mrf.mxu0
  %v129 = vadd.f32 %v50, %v128
  %v130 = vpop.f32.mrf.mxu0
  %131 = vmatprep.mubr.f32.mxu0 0.0
  %132 = vmatmul.mubr.f32.gmra.mxu0 %v17
  %v133 = vpop.f32.mrf.mxu0
  %v134 = vadd.f32 %v50, %v133
  %v135 = vpop.f32.mrf.mxu0
  %136 = vmatprep.mubr.f32.mxu0 0.0
  %137 = vmatmul.mubr.f32.gmra.mxu0 %v18
  %v138 = vpop.f32.mrf.mxu0
  %v139 = vadd.f32 %v50, %v138
  %v140 = vpop.f32.mrf.mxu0
  %141 = vmatprep.mubr.f32.mxu0 0.0
  %142 = vmatmul.mubr.f32.gmra.mxu0 %v19
  %v143 = vpop.f32.mrf.mxu0
  %v144 = vadd.f32 %v50, %v143
  %v145 = vpop.f32.mrf.mxu0
  %146 = vmatprep.mubr.f32.mxu0 0.0
  %147 = vmatmul.mubr.f32.gmra.mxu0 %v20
  %v148 = vpop.f32.mrf.mxu0
  %v149 = vadd.f32 %v50, %v148
  %v150 = vpop.f32.mrf.mxu0
  %151 = vmatprep.mubr.f32.mxu0 0.0
  %152 = vmatmul.mubr.f32.gmra.mxu0 %v21
  %v153 = vpop.f32.mrf.mxu0
  %v154 = vadd.f32 %v50, %v153
  %v155 = vpop.f32.mrf.mxu0
  %156 = vmatprep.mubr.f32.mxu0 0.0
  %157 = vmatmul.mubr.f32.gmra.mxu0 %v22
  %v158 = vpop.f32.mrf.mxu0
  %v159 = vadd.f32 %v50, %v158
  %v160 = vpop.f32.mrf.mxu0
  %161 = vmatprep.mubr.f32.mxu0 0.0
  %162 = vmatmul.mubr.f32.gmra.mxu0 %v23
  %v163 = vpop.f32.mrf.mxu0
  %v164 = vadd.f32 %v50, %v163
  %v165 = vpop.f32.mrf.mxu0
  %166 = vmatprep.mubr.f32.mxu0 0.0
  %167 = vmatmul.mubr.f32.gmra.mxu0 %v24
  %v168 = vpop.f32.mrf.mxu0
  %v169 = vadd.f32 %v50, %v168
  %v170 = vpop.f32.mrf.mxu0
  %171 = vmatprep.mubr.f32.mxu0 0.0
  %172 = vmatmul.mubr.f32.gmra.mxu0 %v25
  %v173 = vpop.f32.mrf.mxu0
  %v174 = vadd.f32 %v50, %v173
  %v175 = vpop.f32.mrf.mxu0
  %176 = vmatprep.mubr.f32.mxu0 0.0
  %177 = vmatmul.mubr.f32.gmra.mxu0 %v26
  %v178 = vpop.f32.mrf.mxu0
  %v179 = vadd.f32 %v50, %v178
  %v180 = vpop.f32.mrf.mxu0
  %181 = vmatprep.mubr.f32.mxu0 0.0
  %182 = vmatmul.mubr.f32.gmra.mxu0 %v27
  %v183 = vpop.f32.mrf.mxu0
  %v184 = vadd.f32 %v50, %v183
  %v185 = vpop.f32.mrf.mxu0
  %186 = vmatprep.mubr.f32.mxu0 0.0
  %187 = vmatmul.mubr.f32.gmra.mxu0 %v28
  %v188 = vpop.f32.mrf.mxu0
  %v189 = vadd.f32 %v50, %v188
  %v190 = vpop.f32.mrf.mxu0
  %191 = vdwg.mxu0
  %v192 = vtanh.pop %v119
  %v193 = vtanh.pop %v124
  %v194 = vtanh.pop %v129
  %v195 = vtanh.pop %v134
  %v196 = vtanh.pop %v139
  %v197 = vtanh.pop %v144
  %v198 = vtanh.pop %v149
  %v199 = vtanh.pop %v154
  %v200 = vtanh.pop %v159
  %v201 = vtanh.pop %v164
  %v202 = vtanh.pop %v169
  %v203 = vtanh.pop %v174
  %v204 = vtanh.pop %v179
  %v205 = vtanh.pop %v184
  %v206 = vtanh.pop %v189
  %207 = vst [vmem:[%s3] sm:$0xff] %v192
  %208 = vst [vmem:[%s3 + $0x8] sm:$0xff] %v193
  %209 = vst [vmem:[%s3 + $0x10] sm:$0xff] %v194
  %210 = vst [vmem:[%s3 + $0x18] sm:$0xff] %v195
  %211 = vst [vmem:[%s3 + $0x20] sm:$0xff] %v196
  %212 = vst [vmem:[%s3 + $0x28] sm:$0xff] %v197
  %213 = vst [vmem:[%s3 + $0x30] sm:$0xff] %v198
  %214 = vst [vmem:[%s3 + $0x38] sm:$0xff] %v199
  %215 = vst [vmem:[%s3 + $0x40] sm:$0xff] %v200
  %216 = vst [vmem:[%s3 + $0x48] sm:$0xff] %v201
  %217 = vst [vmem:[%s3 + $0x50] sm:$0xff] %v202
  %218 = vst [vmem:[%s3 + $0x58] sm:$0xff] %v203
  %219 = vst [vmem:[%s3 + $0x60] sm:$0xff] %v204
  %220 = vst [vmem:[%s3 + $0x68] sm:$0xff] %v205
  %221 = vst [vmem:[%s3 + $0x70] sm:$0xff] %v206
  // Predicated region
  $region14: #{model_tanh_forward.4} parent=0 // pred_check
    _
  $region15: #{model_tanh_forward.4} parent=0 // pred_check_branch
    %223 = sbr.rel (0) target = $region17
  $region16: #{model_tanh_forward.4} parent=0 // pred_region
    _
  $region17: #{model_tanh_forward.4} parent=0 // pred_fallthru
    _
  // Predicated region
  $region18: #{model_tanh_forward.4} parent=0 // pred_check
    _
  $region19: #{model_tanh_forward.4} parent=0 // pred_check_branch
    %225 = sbr.rel (0) target = $region21
  $region20: #{model_tanh_forward.4} parent=0 // pred_region
    _
  $region21: #{model_tanh_forward.4} parent=0 // pred_fallthru
    _

// kernel: model_tanh_forward.3
$region0: #{model_tanh_forward.3}
  #allocation0 [shape = 'u32[]', space=smem, size = 0x4, offset = 0x4, fixed_abs, tag = 'smem constant byte address 0x4 - core index']
  #allocation1 [shape = 'u32[144,128]{1,0:T(1,128)}', space=vmem, size = 0x12000, scoped, tag = 'internal scratch']
  %s0 = inlined_call_operand.vmem [shape: f32[384,49], index: 0, kind: input, shape index: {}]
  %s1 = inlined_call_operand.vmem [shape: f32[49,64], index: 1, kind: input, shape index: {}]
  %s2 = inlined_call_operand.vmem [shape: f32[1,64], index: 2, kind: input, shape index: {}]
  %s3 = inlined_call_operand.vmem [shape: f32[64,64], index: 3, kind: input, shape index: {}]
  %s4 = inlined_call_operand.vmem [shape: f32[1,64], index: 4, kind: input, shape index: {}]
  %s5 = inlined_call_operand.vmem [shape: f32[384,128], index: 5, kind: output, shape index: {}]
  %s6 = sld [smem:[#allocation0]]
  $region30: #{model_tanh_forward.3} parent=0
    _
  %s8 = ssub.s32 1, %s6
  %s9 = scalar_select 0, %s8, %s6
  // Predicated region
  $region2: #{model_tanh_forward.3} parent=0 // pred_check
    _
  $region3: #{model_tanh_forward.3} parent=0 // pred_check_branch
    %11 = sbr.rel (0) target = $region5
  $region4: #{model_tanh_forward.3} parent=0 // pred_region
    _
  $region5: #{model_tanh_forward.3} parent=0 // pred_fallthru
    _
  // Predicated region
  $region6: #{model_tanh_forward.3} parent=0 // pred_check
    _
  $region7: #{model_tanh_forward.3} parent=0 // pred_check_branch
    %13 = sbr.rel (0) target = $region9
  $region8: #{model_tanh_forward.3} parent=0 // pred_region
    _
  $region9: #{model_tanh_forward.3} parent=0 // pred_fallthru
    _
  // Predicated region
  $region10: #{model_tanh_forward.3} parent=0 // pred_check
    _
  $region11: #{model_tanh_forward.3} parent=0 // pred_check_branch
    %15 = sbr.rel (0) target = $region13
  $region12: #{model_tanh_forward.3} parent=0 // pred_region
    _
  $region13: #{model_tanh_forward.3} parent=0 // pred_fallthru
    _
  // Predicated region
  $region14: #{model_tanh_forward.3} parent=0 // pred_check
    _
  $region15: #{model_tanh_forward.3} parent=0 // pred_check_branch
    %17 = sbr.rel (0) target = $region17
  $region16: #{model_tanh_forward.3} parent=0 // pred_region
    _
  $region17: #{model_tanh_forward.3} parent=0 // pred_fallthru
    _
  // Predicated region
  $region18: #{model_tanh_forward.3} parent=0 // pred_check
    _
  $region19: #{model_tanh_forward.3} parent=0 // pred_check_branch
    %19 = sbr.rel (0) target = $region21
  $region20: #{model_tanh_forward.3} parent=0 // pred_region
    _
  $region21: #{model_tanh_forward.3} parent=0 // pred_fallthru
    _
  %v20 = vld [vmem:[%s0] sm:$0xff]
  %v21 = vld [vmem:[%s0 + $0x8] sm:$0xff]
  %v22 = vld [vmem:[%s0 + $0x10] sm:$0xff]
  %v23 = vld [vmem:[%s0 + $0x18] sm:$0xff]
  %v24 = vld [vmem:[%s0 + $0x20] sm:$0xff]
  %v25 = vld [vmem:[%s0 + $0x28] sm:$0xff]
  %v26 = vld [vmem:[%s0 + $0x30] sm:$0xff]
  %v27 = vld [vmem:[%s0 + $0x38] sm:$0xff]
  %v28 = vld [vmem:[%s0 + $0x40] sm:$0xff]
  %v29 = vld [vmem:[%s0 + $0x48] sm:$0xff]
  %v30 = vld [vmem:[%s0 + $0x50] sm:$0xff]
  %v31 = vld [vmem:[%s0 + $0x58] sm:$0xff]
  %v32 = vld [vmem:[%s0 + $0x60] sm:$0xff]
  %v33 = vld [vmem:[%s0 + $0x68] sm:$0xff]
  %v34 = vld [vmem:[%s0 + $0x70] sm:$0xff]
  %v35 = vld [vmem:[%s0 + $0x78] sm:$0xff]
  %v36 = vld [vmem:[%s0 + $0x80] sm:$0xff]
  %v37 = vld [vmem:[%s0 + $0x88] sm:$0xff]
  %v38 = vld [vmem:[%s0 + $0x90] sm:$0xff]
  %v39 = vld [vmem:[%s0 + $0x98] sm:$0xff]
  %v40 = vld [vmem:[%s0 + $0xa0] sm:$0xff]
  %v41 = vld [vmem:[%s0 + $0xa8] sm:$0xff]
  %v42 = vld [vmem:[%s0 + $0xb0] sm:$0xff]
  %v43 = vld [vmem:[%s0 + $0xb8] sm:$0xff]
  %v44 = vld [vmem:[%s0 + $0xc0] sm:$0xff]
  %v45 = vld [vmem:[%s0 + $0xc8] sm:$0xff]
  %v46 = vld [vmem:[%s0 + $0xd0] sm:$0xff]
  %v47 = vld [vmem:[%s0 + $0xd8] sm:$0xff]
  %v48 = vld [vmem:[%s0 + $0xe0] sm:$0xff]
  %v49 = vld [vmem:[%s0 + $0xe8] sm:$0xff]
  %v50 = vld [vmem:[%s0 + $0xf0] sm:$0xff]
  %v51 = vld [vmem:[%s0 + $0xf8] sm:$0xff]
  %v52 = vld [vmem:[%s0 + $0x100] sm:$0xff]
  %v53 = vld [vmem:[%s0 + $0x108] sm:$0xff]
  %v54 = vld [vmem:[%s0 + $0x110] sm:$0xff]
  %v55 = vld [vmem:[%s0 + $0x118] sm:$0xff]
  %v56 = vld [vmem:[%s0 + $0x120] sm:$0xff]
  %v57 = vld [vmem:[%s0 + $0x128] sm:$0xff]
  %v58 = vld [vmem:[%s0 + $0x130] sm:$0xff]
  %v59 = vld [vmem:[%s0 + $0x138] sm:$0xff]
  %v60 = vld [vmem:[%s0 + $0x140] sm:$0xff]
  %v61 = vld [vmem:[%s0 + $0x148] sm:$0xff]
  %v62 = vld [vmem:[%s0 + $0x150] sm:$0xff]
  %v63 = vld [vmem:[%s0 + $0x158] sm:$0xff]
  %v64 = vld [vmem:[%s0 + $0x160] sm:$0xff]
  %v65 = vld [vmem:[%s0 + $0x168] sm:$0xff]
  %v66 = vld [vmem:[%s0 + $0x170] sm:$0xff]
  %v67 = vld [vmem:[%s0 + $0x178] sm:$0xff]
  %v68 = vld [vmem:[%s1] sm:$0xff]
  %v69 = vld [vmem:[%s1 + $0x8] sm:$0xff]
  %v70 = vld [vmem:[%s1 + $0x10] sm:$0xff]
  %v71 = vld [vmem:[%s1 + $0x18] sm:$0xff]
  %v72 = vld [vmem:[%s1 + $0x20] sm:$0xff]
  %v73 = vld [vmem:[%s1 + $0x28] sm:$0xff]
  %v74 = vld [vmem:[%s1 + $0x30] sm:$0x1]
  %v75 = vld [vmem:[%s2] sm:$0x1]
  %v77 = vlaneseq
  %v78 = vshrl.u32 %v77, 7
  %v79 = vsub.s32 0, %v78
  %v80 = vrot.slane %v75, %v79
  %vm82 = vcmask 400384
  %v84 = vsel %vm82, %v20, 0
  %v87 = vsel %vm82, %v21, 0
  %v90 = vsel %vm82, %v22, 0
  %v93 = vsel %vm82, %v23, 0
  %v96 = vsel %vm82, %v24, 0
  %v99 = vsel %vm82, %v25, 0
  %v102 = vsel %vm82, %v26, 0
  %v105 = vsel %vm82, %v27, 0
  %v108 = vsel %vm82, %v28, 0
  %v111 = vsel %vm82, %v29, 0
  %v114 = vsel %vm82, %v30, 0
  %v117 = vsel %vm82, %v31, 0
  %v120 = vsel %vm82, %v32, 0
  %v123 = vsel %vm82, %v33, 0
  %v126 = vsel %vm82, %v34, 0
  %v129 = vsel %vm82, %v35, 0
  %v132 = vsel %vm82, %v36, 0
  %v135 = vsel %vm82, %v37, 0
  %v138 = vsel %vm82, %v38, 0
  %v141 = vsel %vm82, %v39, 0
  %v144 = vsel %vm82, %v40, 0
  %v147 = vsel %vm82, %v41, 0
  %v150 = vsel %vm82, %v42, 0
  %v153 = vsel %vm82, %v43, 0
  %v156 = vsel %vm82, %v44, 0
  %v159 = vsel %vm82, %v45, 0
  %v162 = vsel %vm82, %v46, 0
  %v165 = vsel %vm82, %v47, 0
  %v168 = vsel %vm82, %v48, 0
  %v171 = vsel %vm82, %v49, 0
  %v174 = vsel %vm82, %v50, 0
  %v177 = vsel %vm82, %v51, 0
  %v180 = vsel %vm82, %v52, 0
  %v183 = vsel %vm82, %v53, 0
  %v186 = vsel %vm82, %v54, 0
  %v189 = vsel %vm82, %v55, 0
  %v192 = vsel %vm82, %v56, 0
  %v195 = vsel %vm82, %v57, 0
  %v198 = vsel %vm82, %v58, 0
  %v201 = vsel %vm82, %v59, 0
  %v204 = vsel %vm82, %v60, 0
  %v207 = vsel %vm82, %v61, 0
  %v210 = vsel %vm82, %v62, 0
  %v213 = vsel %vm82, %v63, 0
  %v216 = vsel %vm82, %v64, 0
  %v219 = vsel %vm82, %v65, 0
  %v222 = vsel %vm82, %v66, 0
  %v225 = vsel %vm82, %v67, 0
  %vm227 = vcmask 1040384
  %v229 = vsel %vm227, %v74, 0
  %231 = vmatprep.subr.mxu0 0.0
  %232 = vmatpush1.msra.mxu0 0.0
  %233 = vmatprep.subr.mxu0 0.0
  %234 = vmatpush1.msra.mxu0 0.0
  %235 = vmatprep.subr.mxu0 0.0
  %236 = vmatpush1.msra.mxu0 0.0
  %237 = vmatprep.subr.mxu0 0.0
  %238 = vmatpush1.msra.mxu0 0.0
  %239 = vmatprep.subr.mxu0 0.0
  %240 = vmatpush1.msra.mxu0 0.0
  %241 = vmatprep.subr.mxu0 0.0
  %242 = vmatpush1.msra.mxu0 0.0
  %243 = vmatprep.subr.mxu0 0.0
  %244 = vmatpush1.msra.mxu0 0.0
  %245 = vmatprep.subr.mxu0 0.0
  %246 = vmatpush1.msra.mxu0 0.0
  %247 = vmatprep.subr.mxu0 0.0
  %248 = vmatpush1.msra.mxu0 0.0
  %249 = vmatprep.subr.mxu0 0.0
  %250 = vmatpush1.msra.mxu0 %v229
  %251 = vmatprep.subr.mxu0 0.0
  %252 = vmatpush1.msra.mxu0 %v73
  %253 = vmatprep.subr.mxu0 0.0
  %254 = vmatpush1.msra.mxu0 %v72
  %255 = vmatprep.subr.mxu0 0.0
  %256 = vmatpush1.msra.mxu0 %v71
  %257 = vmatprep.subr.mxu0 0.0
  %258 = vmatpush1.msra.mxu0 %v70
  %259 = vmatprep.subr.mxu0 0.0
  %260 = vmatpush1.msra.mxu0 %v69
  %261 = vmatprep.subr.mxu0 0.0
  %262 = vmatpush1.msra.mxu0 %v68
  %263 = vmatprep.subr.mxu0 0.0
  %264 = vmatpush2.msra.mxu0 0.0
  %265 = vmatprep.subr.mxu0 0.0
  %266 = vmatpush2.msra.mxu0 0.0
  %267 = vmatprep.subr.mxu0 0.0
  %268 = vmatpush2.msra.mxu0 0.0
  %269 = vmatprep.subr.mxu0 0.0
  %270 = vmatpush2.msra.mxu0 0.0
  %271 = vmatprep.subr.mxu0 0.0
  %272 = vmatpush2.msra.mxu0 0.0
  %273 = vmatprep.subr.mxu0 0.0
  %274 = vmatpush2.msra.mxu0 0.0
  %275 = vmatprep.subr.mxu0 0.0
  %276 = vmatpush2.msra.mxu0 0.0
  %277 = vmatprep.subr.mxu0 0.0
  %278 = vmatpush2.msra.mxu0 0.0
  %279 = vmatprep.subr.mxu0 0.0
  %280 = vmatpush2.msra.mxu0 0.0
  %281 = vmatprep.subr.mxu0 0.0
  %282 = vmatpush2.msra.mxu0 0.0
  %283 = vmatprep.subr.mxu0 0.0
  %284 = vmatpush2.msra.mxu0 0.0
  %285 = vmatprep.subr.mxu0 0.0
  %286 = vmatpush2.msra.mxu0 0.0
  %287 = vmatprep.subr.mxu0 0.0
  %288 = vmatpush2.msra.mxu0 0.0
  %289 = vmatprep.subr.mxu0 0.0
  %290 = vmatpush2.msra.mxu0 0.0
  %291 = vmatprep.subr.mxu0 0.0
  %292 = vmatpush2.msra.mxu0 0.0
  %293 = vmatprep.subr.mxu0 0.0
  %294 = vmatpush2.msra.mxu0 0.0
  %295 = vmatprep.mubr.f32.mxu0 0.0
  %296 = vmatmul.mubr.f32.gmra.mxu0 %v84
  %v297 = vpop.f32.mrf.mxu0
  %v298 = vadd.f32 %v80, %v297
  %v299 = vpop.f32.mrf.mxu0
  %300 = vmatprep.mubr.f32.mxu0 0.0
  %301 = vmatmul.mubr.f32.gmra.mxu0 %v87
  %v302 = vpop.f32.mrf.mxu0
  %v303 = vadd.f32 %v80, %v302
  %v304 = vpop.f32.mrf.mxu0
  %305 = vmatprep.mubr.f32.mxu0 0.0
  %306 = vmatmul.mubr.f32.gmra.mxu0 %v90
  %v307 = vpop.f32.mrf.mxu0
  %v308 = vadd.f32 %v80, %v307
  %v309 = vpop.f32.mrf.mxu0
  %310 = vmatprep.mubr.f32.mxu0 0.0
  %311 = vmatmul.mubr.f32.gmra.mxu0 %v93
  %v312 = vpop.f32.mrf.mxu0
  %v313 = vadd.f32 %v80, %v312
  %v314 = vpop.f32.mrf.mxu0
  %315 = vmatprep.mubr.f32.mxu0 0.0
  %316 = vmatmul.mubr.f32.gmra.mxu0 %v96
  %v317 = vpop.f32.mrf.mxu0
  %v318 = vadd.f32 %v80, %v317
  %v319 = vpop.f32.mrf.mxu0
  %320 = vmatprep.mubr.f32.mxu0 0.0
  %321 = vmatmul.mubr.f32.gmra.mxu0 %v99
  %v322 = vpop.f32.mrf.mxu0
  %v323 = vadd.f32 %v80, %v322
  %v324 = vpop.f32.mrf.mxu0
  %325 = vmatprep.mubr.f32.mxu0 0.0
  %326 = vmatmul.mubr.f32.gmra.mxu0 %v102
  %v327 = vpop.f32.mrf.mxu0
  %v328 = vadd.f32 %v80, %v327
  %v329 = vpop.f32.mrf.mxu0
  %330 = vmatprep.mubr.f32.mxu0 0.0
  %331 = vmatmul.mubr.f32.gmra.mxu0 %v105
  %v332 = vpop.f32.mrf.mxu0
  %v333 = vadd.f32 %v80, %v332
  %v334 = vpop.f32.mrf.mxu0
  %335 = vmatprep.mubr.f32.mxu0 0.0
  %336 = vmatmul.mubr.f32.gmra.mxu0 %v108
  %v337 = vpop.f32.mrf.mxu0
  %v338 = vadd.f32 %v80, %v337
  %v339 = vpop.f32.mrf.mxu0
  %340 = vmatprep.mubr.f32.mxu0 0.0
  %341 = vmatmul.mubr.f32.gmra.mxu0 %v111
  %v342 = vpop.f32.mrf.mxu0
  %v343 = vadd.f32 %v80, %v342
  %v344 = vpop.f32.mrf.mxu0
  %345 = vmatprep.mubr.f32.mxu0 0.0
  %346 = vmatmul.mubr.f32.gmra.mxu0 %v114
  %v347 = vpop.f32.mrf.mxu0
  %v348 = vadd.f32 %v80, %v347
  %v349 = vpop.f32.mrf.mxu0
  %350 = vmatprep.mubr.f32.mxu0 0.0
  %351 = vmatmul.mubr.f32.gmra.mxu0 %v117
  %v352 = vpop.f32.mrf.mxu0
  %v353 = vadd.f32 %v80, %v352
  %v354 = vpop.f32.mrf.mxu0
  %355 = vmatprep.mubr.f32.mxu0 0.0
  %356 = vmatmul.mubr.f32.gmra.mxu0 %v120
  %v357 = vpop.f32.mrf.mxu0
  %v358 = vadd.f32 %v80, %v357
  %v359 = vpop.f32.mrf.mxu0
  %360 = vmatprep.mubr.f32.mxu0 0.0
  %361 = vmatmul.mubr.f32.gmra.mxu0 %v123
  %v362 = vpop.f32.mrf.mxu0
  %v363 = vadd.f32 %v80, %v362
  %v364 = vpop.f32.mrf.mxu0
  %365 = vmatprep.mubr.f32.mxu0 0.0
  %366 = vmatmul.mubr.f32.gmra.mxu0 %v126
  %v367 = vpop.f32.mrf.mxu0
  %v368 = vadd.f32 %v80, %v367
  %v369 = vpop.f32.mrf.mxu0
  %370 = vmatprep.mubr.f32.mxu0 0.0
  %371 = vmatmul.mubr.f32.gmra.mxu0 %v129
  %v372 = vpop.f32.mrf.mxu0
  %v373 = vadd.f32 %v80, %v372
  %v374 = vpop.f32.mrf.mxu0
  %375 = vmatprep.mubr.f32.mxu0 0.0
  %376 = vmatmul.mubr.f32.gmra.mxu0 %v132
  %v377 = vpop.f32.mrf.mxu0
  %v378 = vadd.f32 %v80, %v377
  %v379 = vpop.f32.mrf.mxu0
  %380 = vmatprep.mubr.f32.mxu0 0.0
  %381 = vmatmul.mubr.f32.gmra.mxu0 %v135
  %v382 = vpop.f32.mrf.mxu0
  %v383 = vadd.f32 %v80, %v382
  %v384 = vpop.f32.mrf.mxu0
  %385 = vmatprep.mubr.f32.mxu0 0.0
  %386 = vmatmul.mubr.f32.gmra.mxu0 %v138
  %v387 = vpop.f32.mrf.mxu0
  %v388 = vadd.f32 %v80, %v387
  %v389 = vpop.f32.mrf.mxu0
  %390 = vmatprep.mubr.f32.mxu0 0.0
  %391 = vmatmul.mubr.f32.gmra.mxu0 %v141
  %v392 = vpop.f32.mrf.mxu0
  %v393 = vadd.f32 %v80, %v392
  %v394 = vpop.f32.mrf.mxu0
  %395 = vmatprep.mubr.f32.mxu0 0.0
  %396 = vmatmul.mubr.f32.gmra.mxu0 %v144
  %v397 = vpop.f32.mrf.mxu0
  %v398 = vadd.f32 %v80, %v397
  %v399 = vpop.f32.mrf.mxu0
  %400 = vmatprep.mubr.f32.mxu0 0.0
  %401 = vmatmul.mubr.f32.gmra.mxu0 %v147
  %v402 = vpop.f32.mrf.mxu0
  %v403 = vadd.f32 %v80, %v402
  %v404 = vpop.f32.mrf.mxu0
  %405 = vmatprep.mubr.f32.mxu0 0.0
  %406 = vmatmul.mubr.f32.gmra.mxu0 %v150
  %v407 = vpop.f32.mrf.mxu0
  %v408 = vadd.f32 %v80, %v407
  %v409 = vpop.f32.mrf.mxu0
  %410 = vmatprep.mubr.f32.mxu0 0.0
  %411 = vmatmul.mubr.f32.gmra.mxu0 %v153
  %v412 = vpop.f32.mrf.mxu0
  %v413 = vadd.f32 %v80, %v412
  %v414 = vpop.f32.mrf.mxu0
  %415 = vmatprep.mubr.f32.mxu0 0.0
  %416 = vmatmul.mubr.f32.gmra.mxu0 %v156
  %v417 = vpop.f32.mrf.mxu0
  %v418 = vadd.f32 %v80, %v417
  %v419 = vpop.f32.mrf.mxu0
  %420 = vmatprep.mubr.f32.mxu0 0.0
  %421 = vmatmul.mubr.f32.gmra.mxu0 %v159
  %v422 = vpop.f32.mrf.mxu0
  %v423 = vadd.f32 %v80, %v422
  %v424 = vpop.f32.mrf.mxu0
  %425 = vmatprep.mubr.f32.mxu0 0.0
  %426 = vmatmul.mubr.f32.gmra.mxu0 %v162
  %v427 = vpop.f32.mrf.mxu0
  %v428 = vadd.f32 %v80, %v427
  %v429 = vpop.f32.mrf.mxu0
  %430 = vmatprep.mubr.f32.mxu0 0.0
  %431 = vmatmul.mubr.f32.gmra.mxu0 %v165
  %v432 = vpop.f32.mrf.mxu0
  %v433 = vadd.f32 %v80, %v432
  %v434 = vpop.f32.mrf.mxu0
  %435 = vmatprep.mubr.f32.mxu0 0.0
  %436 = vmatmul.mubr.f32.gmra.mxu0 %v168
  %v437 = vpop.f32.mrf.mxu0
  %v438 = vadd.f32 %v80, %v437
  %v439 = vpop.f32.mrf.mxu0
  %440 = vmatprep.mubr.f32.mxu0 0.0
  %441 = vmatmul.mubr.f32.gmra.mxu0 %v171
  %v442 = vpop.f32.mrf.mxu0
  %v443 = vadd.f32 %v80, %v442
  %v444 = vpop.f32.mrf.mxu0
  %445 = vmatprep.mubr.f32.mxu0 0.0
  %446 = vmatmul.mubr.f32.gmra.mxu0 %v174
  %v447 = vpop.f32.mrf.mxu0
  %v448 = vadd.f32 %v80, %v447
  %v449 = vpop.f32.mrf.mxu0
  %450 = vmatprep.mubr.f32.mxu0 0.0
  %451 = vmatmul.mubr.f32.gmra.mxu0 %v177
  %v452 = vpop.f32.mrf.mxu0
  %v453 = vadd.f32 %v80, %v452
  %v454 = vpop.f32.mrf.mxu0
  %455 = vmatprep.mubr.f32.mxu0 0.0
  %456 = vmatmul.mubr.f32.gmra.mxu0 %v180
  %v457 = vpop.f32.mrf.mxu0
  %v458 = vadd.f32 %v80, %v457
  %v459 = vpop.f32.mrf.mxu0
  %460 = vmatprep.mubr.f32.mxu0 0.0
  %461 = vmatmul.mubr.f32.gmra.mxu0 %v183
  %v462 = vpop.f32.mrf.mxu0
  %v463 = vadd.f32 %v80, %v462
  %v464 = vpop.f32.mrf.mxu0
  %465 = vmatprep.mubr.f32.mxu0 0.0
  %466 = vmatmul.mubr.f32.gmra.mxu0 %v186
  %v467 = vpop.f32.mrf.mxu0
  %v468 = vadd.f32 %v80, %v467
  %v469 = vpop.f32.mrf.mxu0
  %470 = vmatprep.mubr.f32.mxu0 0.0
  %471 = vmatmul.mubr.f32.gmra.mxu0 %v189
  %v472 = vpop.f32.mrf.mxu0
  %v473 = vadd.f32 %v80, %v472
  %v474 = vpop.f32.mrf.mxu0
  %475 = vmatprep.mubr.f32.mxu0 0.0
  %476 = vmatmul.mubr.f32.gmra.mxu0 %v192
  %v477 = vpop.f32.mrf.mxu0
  %v478 = vadd.f32 %v80, %v477
  %v479 = vpop.f32.mrf.mxu0
  %480 = vmatprep.mubr.f32.mxu0 0.0
  %481 = vmatmul.mubr.f32.gmra.mxu0 %v195
  %v482 = vpop.f32.mrf.mxu0
  %v483 = vadd.f32 %v80, %v482
  %v484 = vpop.f32.mrf.mxu0
  %485 = vmatprep.mubr.f32.mxu0 0.0
  %486 = vmatmul.mubr.f32.gmra.mxu0 %v198
  %v487 = vpop.f32.mrf.mxu0
  %v488 = vadd.f32 %v80, %v487
  %v489 = vpop.f32.mrf.mxu0
  %490 = vmatprep.mubr.f32.mxu0 0.0
  %491 = vmatmul.mubr.f32.gmra.mxu0 %v201
  %v492 = vpop.f32.mrf.mxu0
  %v493 = vadd.f32 %v80, %v492
  %v494 = vpop.f32.mrf.mxu0
  %495 = vmatprep.mubr.f32.mxu0 0.0
  %496 = vmatmul.mubr.f32.gmra.mxu0 %v204
  %v497 = vpop.f32.mrf.mxu0
  %v498 = vadd.f32 %v80, %v497
  %v499 = vpop.f32.mrf.mxu0
  %500 = vmatprep.mubr.f32.mxu0 0.0
  %501 = vmatmul.mubr.f32.gmra.mxu0 %v207
  %v502 = vpop.f32.mrf.mxu0
  %v503 = vadd.f32 %v80, %v502
  %v504 = vpop.f32.mrf.mxu0
  %505 = vmatprep.mubr.f32.mxu0 0.0
  %506 = vmatmul.mubr.f32.gmra.mxu0 %v210
  %v507 = vpop.f32.mrf.mxu0
  %v508 = vadd.f32 %v80, %v507
  %v509 = vpop.f32.mrf.mxu0
  %510 = vmatprep.mubr.f32.mxu0 0.0
  %511 = vmatmul.mubr.f32.gmra.mxu0 %v213
  %v512 = vpop.f32.mrf.mxu0
  %v513 = vadd.f32 %v80, %v512
  %v514 = vpop.f32.mrf.mxu0
  %515 = vmatprep.mubr.f32.mxu0 0.0
  %516 = vmatmul.mubr.f32.gmra.mxu0 %v216
  %v517 = vpop.f32.mrf.mxu0
  %v518 = vadd.f32 %v80, %v517
  %v519 = vpop.f32.mrf.mxu0
  %520 = vmatprep.mubr.f32.mxu0 0.0
  %521 = vmatmul.mubr.f32.gmra.mxu0 %v219
  %v522 = vpop.f32.mrf.mxu0
  %v523 = vadd.f32 %v80, %v522
  %v524 = vpop.f32.mrf.mxu0
  %525 = vmatprep.mubr.f32.mxu0 0.0
  %526 = vmatmul.mubr.f32.gmra.mxu0 %v222
  %v527 = vpop.f32.mrf.mxu0
  %v528 = vadd.f32 %v80, %v527
  %v529 = vpop.f32.mrf.mxu0
  %530 = vmatprep.mubr.f32.mxu0 0.0
  %531 = vmatmul.mubr.f32.gmra.mxu0 %v225
  %v532 = vpop.f32.mrf.mxu0
  %v533 = vadd.f32 %v80, %v532
  %v534 = vpop.f32.mrf.mxu0
  %535 = vdwg.mxu0
  %v536 = vtanh.pop %v298
  %v537 = vtanh.pop %v303
  %v538 = vtanh.pop %v308
  %v539 = vtanh.pop %v313
  %v540 = vtanh.pop %v318
  %v541 = vtanh.pop %v323
  %v542 = vtanh.pop %v328
  %v543 = vtanh.pop %v333
  %v544 = vtanh.pop %v338
  %v545 = vtanh.pop %v343
  %v546 = vtanh.pop %v348
  %v547 = vtanh.pop %v353
  %v548 = vtanh.pop %v358
  %v549 = vtanh.pop %v363
  %v550 = vtanh.pop %v368
  %v551 = vtanh.pop %v373
  %v552 = vtanh.pop %v378
  %v553 = vtanh.pop %v383
  %v554 = vtanh.pop %v388
  %v555 = vtanh.pop %v393
  %v556 = vtanh.pop %v398
  %v557 = vtanh.pop %v403
  %v558 = vtanh.pop %v408
  %v559 = vtanh.pop %v413
  %v560 = vtanh.pop %v418
  %v561 = vtanh.pop %v423
  %v562 = vtanh.pop %v428
  %v563 = vtanh.pop %v433
  %v564 = vtanh.pop %v438
  %v565 = vtanh.pop %v443
  %v566 = vtanh.pop %v448
  %v567 = vtanh.pop %v453
  %v568 = vtanh.pop %v458
  %v569 = vtanh.pop %v463
  %v570 = vtanh.pop %v468
  %v571 = vtanh.pop %v473
  %v572 = vtanh.pop %v478
  %v573 = vtanh.pop %v483
  %v574 = vtanh.pop %v488
  %v575 = vtanh.pop %v493
  %v576 = vtanh.pop %v498
  %v577 = vtanh.pop %v503
  %v578 = vtanh.pop %v508
  %v579 = vtanh.pop %v513
  %v580 = vtanh.pop %v518
  %v581 = vtanh.pop %v523
  %v582 = vtanh.pop %v528
  %v583 = vtanh.pop %v533
  %v584 = vld [vmem:[%s3] sm:$0xff]
  %v585 = vld [vmem:[%s3 + $0x8] sm:$0xff]
  %v586 = vld [vmem:[%s3 + $0x10] sm:$0xff]
  %v587 = vld [vmem:[%s3 + $0x18] sm:$0xff]
  %v588 = vld [vmem:[%s3 + $0x20] sm:$0xff]
  %v589 = vld [vmem:[%s3 + $0x28] sm:$0xff]
  %v590 = vld [vmem:[%s3 + $0x30] sm:$0xff]
  %v591 = vld [vmem:[%s3 + $0x38] sm:$0xff]
  %v592 = vld [vmem:[%s4] sm:$0x1]
  %v594 = vlaneseq
  %v595 = vshrl.u32 %v594, 7
  %v596 = vsub.s32 0, %v595
  %v597 = vrot.slane %v592, %v596
  %vm599 = vcmask 523264
  %v601 = vsel %vm599, %v536, 0
  %v604 = vsel %vm599, %v537, 0
  %v607 = vsel %vm599, %v538, 0
  %v610 = vsel %vm599, %v539, 0
  %v613 = vsel %vm599, %v540, 0
  %v616 = vsel %vm599, %v541, 0
  %v619 = vsel %vm599, %v542, 0
  %v622 = vsel %vm599, %v543, 0
  %v625 = vsel %vm599, %v544, 0
  %v628 = vsel %vm599, %v545, 0
  %v631 = vsel %vm599, %v546, 0
  %v634 = vsel %vm599, %v547, 0
  %v637 = vsel %vm599, %v548, 0
  %v640 = vsel %vm599, %v549, 0
  %v643 = vsel %vm599, %v550, 0
  %v646 = vsel %vm599, %v551, 0
  %v649 = vsel %vm599, %v552, 0
  %v652 = vsel %vm599, %v553, 0
  %v655 = vsel %vm599, %v554, 0
  %v658 = vsel %vm599, %v555, 0
  %v661 = vsel %vm599, %v556, 0
  %v664 = vsel %vm599, %v557, 0
  %v667 = vsel %vm599, %v558, 0
  %v670 = vsel %vm599, %v559, 0
  %v673 = vsel %vm599, %v560, 0
  %v676 = vsel %vm599, %v561, 0
  %v679 = vsel %vm599, %v562, 0
  %v682 = vsel %vm599, %v563, 0
  %v685 = vsel %vm599, %v564, 0
  %v688 = vsel %vm599, %v565, 0
  %v691 = vsel %vm599, %v566, 0
  %v694 = vsel %vm599, %v567, 0
  %v697 = vsel %vm599, %v568, 0
  %v700 = vsel %vm599, %v569, 0
  %v703 = vsel %vm599, %v570, 0
  %v706 = vsel %vm599, %v571, 0
  %v709 = vsel %vm599, %v572, 0
  %v712 = vsel %vm599, %v573, 0
  %v715 = vsel %vm599, %v574, 0
  %v718 = vsel %vm599, %v575, 0
  %v721 = vsel %vm599, %v576, 0
  %v724 = vsel %vm599, %v577, 0
  %v727 = vsel %vm599, %v578, 0
  %v730 = vsel %vm599, %v579, 0
  %v733 = vsel %vm599, %v580, 0
  %v736 = vsel %vm599, %v581, 0
  %v739 = vsel %vm599, %v582, 0
  %v742 = vsel %vm599, %v583, 0
  %744 = vmatprep.subr.mxu0 0.0
  %745 = vmatpush1.msra.mxu0 0.0
  %746 = vmatprep.subr.mxu0 0.0
  %747 = vmatpush1.msra.mxu0 0.0
  %748 = vmatprep.subr.mxu0 0.0
  %749 = vmatpush1.msra.mxu0 0.0
  %750 = vmatprep.subr.mxu0 0.0
  %751 = vmatpush1.msra.mxu0 0.0
  %752 = vmatprep.subr.mxu0 0.0
  %753 = vmatpush1.msra.mxu0 0.0
  %754 = vmatprep.subr.mxu0 0.0
  %755 = vmatpush1.msra.mxu0 0.0
  %756 = vmatprep.subr.mxu0 0.0
  %757 = vmatpush1.msra.mxu0 0.0
  %758 = vmatprep.subr.mxu0 0.0
  %759 = vmatpush1.msra.mxu0 0.0
  %760 = vmatprep.subr.mxu0 0.0
  %761 = vmatpush1.msra.mxu0 %v591
  %762 = vmatprep.subr.mxu0 0.0
  %763 = vmatpush1.msra.mxu0 %v590
  %764 = vmatprep.subr.mxu0 0.0
  %765 = vmatpush1.msra.mxu0 %v589
  %766 = vmatprep.subr.mxu0 0.0
  %767 = vmatpush1.msra.mxu0 %v588
  %768 = vmatprep.subr.mxu0 0.0
  %769 = vmatpush1.msra.mxu0 %v587
  %770 = vmatprep.subr.mxu0 0.0
  %771 = vmatpush1.msra.mxu0 %v586
  %772 = vmatprep.subr.mxu0 0.0
  %773 = vmatpush1.msra.mxu0 %v585
  %774 = vmatprep.subr.mxu0 0.0
  %775 = vmatpush1.msra.mxu0 %v584
  %776 = vmatprep.subr.mxu0 0.0
  %777 = vmatpush2.msra.mxu0 0.0
  %778 = vmatprep.subr.mxu0 0.0
  %779 = vmatpush2.msra.mxu0 0.0
  %780 = vmatprep.subr.mxu0 0.0
  %781 = vmatpush2.msra.mxu0 0.0
  %782 = vmatprep.subr.mxu0 0.0
  %783 = vmatpush2.msra.mxu0 0.0
  %784 = vmatprep.subr.mxu0 0.0
  %785 = vmatpush2.msra.mxu0 0.0
  %786 = vmatprep.subr.mxu0 0.0
  %787 = vmatpush2.msra.mxu0 0.0
  %788 = vmatprep.subr.mxu0 0.0
  %789 = vmatpush2.msra.mxu0 0.0
  %790 = vmatprep.subr.mxu0 0.0
  %791 = vmatpush2.msra.mxu0 0.0
  %792 = vmatprep.subr.mxu0 0.0
  %793 = vmatpush2.msra.mxu0 0.0
  %794 = vmatprep.subr.mxu0 0.0
  %795 = vmatpush2.msra.mxu0 0.0
  %796 = vmatprep.subr.mxu0 0.0
  %797 = vmatpush2.msra.mxu0 0.0
  %798 = vmatprep.subr.mxu0 0.0
  %799 = vmatpush2.msra.mxu0 0.0
  %800 = vmatprep.subr.mxu0 0.0
  %801 = vmatpush2.msra.mxu0 0.0
  %802 = vmatprep.subr.mxu0 0.0
  %803 = vmatpush2.msra.mxu0 0.0
  %804 = vmatprep.subr.mxu0 0.0
  %805 = vmatpush2.msra.mxu0 0.0
  %806 = vmatprep.subr.mxu0 0.0
  %807 = vmatpush2.msra.mxu0 0.0
  %808 = vmatprep.mubr.f32.mxu0 0.0
  %809 = vmatmul.mubr.f32.gmra.mxu0 %v601
  %v810 = vpop.f32.mrf.mxu0
  %v811 = vadd.f32 %v597, %v810
  %v812 = vpop.f32.mrf.mxu0
  %813 = vmatprep.mubr.f32.mxu0 0.0
  %814 = vmatmul.mubr.f32.gmra.mxu0 %v604
  %v815 = vpop.f32.mrf.mxu0
  %v816 = vadd.f32 %v597, %v815
  %v817 = vpop.f32.mrf.mxu0
  %818 = vmatprep.mubr.f32.mxu0 0.0
  %819 = vmatmul.mubr.f32.gmra.mxu0 %v607
  %v820 = vpop.f32.mrf.mxu0
  %v821 = vadd.f32 %v597, %v820
  %v822 = vpop.f32.mrf.mxu0
  %823 = vmatprep.mubr.f32.mxu0 0.0
  %824 = vmatmul.mubr.f32.gmra.mxu0 %v610
  %v825 = vpop.f32.mrf.mxu0
  %v826 = vadd.f32 %v597, %v825
  %v827 = vpop.f32.mrf.mxu0
  %828 = vmatprep.mubr.f32.mxu0 0.0
  %829 = vmatmul.mubr.f32.gmra.mxu0 %v613
  %v830 = vpop.f32.mrf.mxu0
  %v831 = vadd.f32 %v597, %v830
  %v832 = vpop.f32.mrf.mxu0
  %833 = vmatprep.mubr.f32.mxu0 0.0
  %834 = vmatmul.mubr.f32.gmra.mxu0 %v616
  %v835 = vpop.f32.mrf.mxu0
  %v836 = vadd.f32 %v597, %v835
  %v837 = vpop.f32.mrf.mxu0
  %838 = vmatprep.mubr.f32.mxu0 0.0
  %839 = vmatmul.mubr.f32.gmra.mxu0 %v619
  %v840 = vpop.f32.mrf.mxu0
  %v841 = vadd.f32 %v597, %v840
  %v842 = vpop.f32.mrf.mxu0
  %843 = vmatprep.mubr.f32.mxu0 0.0
  %844 = vmatmul.mubr.f32.gmra.mxu0 %v622
  %v845 = vpop.f32.mrf.mxu0
  %v846 = vadd.f32 %v597, %v845
  %v847 = vpop.f32.mrf.mxu0
  %848 = vmatprep.mubr.f32.mxu0 0.0
  %849 = vmatmul.mubr.f32.gmra.mxu0 %v625
  %v850 = vpop.f32.mrf.mxu0
  %v851 = vadd.f32 %v597, %v850
  %v852 = vpop.f32.mrf.mxu0
  %853 = vmatprep.mubr.f32.mxu0 0.0
  %854 = vmatmul.mubr.f32.gmra.mxu0 %v628
  %v855 = vpop.f32.mrf.mxu0
  %v856 = vadd.f32 %v597, %v855
  %v857 = vpop.f32.mrf.mxu0
  %858 = vmatprep.mubr.f32.mxu0 0.0
  %859 = vmatmul.mubr.f32.gmra.mxu0 %v631
  %v860 = vpop.f32.mrf.mxu0
  %v861 = vadd.f32 %v597, %v860
  %v862 = vpop.f32.mrf.mxu0
  %863 = vmatprep.mubr.f32.mxu0 0.0
  %864 = vmatmul.mubr.f32.gmra.mxu0 %v634
  %v865 = vpop.f32.mrf.mxu0
  %v866 = vadd.f32 %v597, %v865
  %v867 = vpop.f32.mrf.mxu0
  %868 = vmatprep.mubr.f32.mxu0 0.0
  %869 = vmatmul.mubr.f32.gmra.mxu0 %v637
  %v870 = vpop.f32.mrf.mxu0
  %v871 = vadd.f32 %v597, %v870
  %v872 = vpop.f32.mrf.mxu0
  %873 = vmatprep.mubr.f32.mxu0 0.0
  %874 = vmatmul.mubr.f32.gmra.mxu0 %v640
  %v875 = vpop.f32.mrf.mxu0
  %v876 = vadd.f32 %v597, %v875
  %v877 = vpop.f32.mrf.mxu0
  %878 = vmatprep.mubr.f32.mxu0 0.0
  %879 = vmatmul.mubr.f32.gmra.mxu0 %v643
  %v880 = vpop.f32.mrf.mxu0
  %v881 = vadd.f32 %v597, %v880
  %v882 = vpop.f32.mrf.mxu0
  %883 = vmatprep.mubr.f32.mxu0 0.0
  %884 = vmatmul.mubr.f32.gmra.mxu0 %v646
  %v885 = vpop.f32.mrf.mxu0
  %v886 = vadd.f32 %v597, %v885
  %v887 = vpop.f32.mrf.mxu0
  %888 = vmatprep.mubr.f32.mxu0 0.0
  %889 = vmatmul.mubr.f32.gmra.mxu0 %v649
  %v890 = vpop.f32.mrf.mxu0
  %v891 = vadd.f32 %v597, %v890
  %v892 = vpop.f32.mrf.mxu0
  %893 = vmatprep.mubr.f32.mxu0 0.0
  %894 = vmatmul.mubr.f32.gmra.mxu0 %v652
  %v895 = vpop.f32.mrf.mxu0
  %v896 = vadd.f32 %v597, %v895
  %v897 = vpop.f32.mrf.mxu0
  %898 = vmatprep.mubr.f32.mxu0 0.0
  %899 = vmatmul.mubr.f32.gmra.mxu0 %v655
  %v900 = vpop.f32.mrf.mxu0
  %v901 = vadd.f32 %v597, %v900
  %v902 = vpop.f32.mrf.mxu0
  %903 = vmatprep.mubr.f32.mxu0 0.0
  %904 = vmatmul.mubr.f32.gmra.mxu0 %v658
  %v905 = vpop.f32.mrf.mxu0
  %v906 = vadd.f32 %v597, %v905
  %v907 = vpop.f32.mrf.mxu0
  %908 = vmatprep.mubr.f32.mxu0 0.0
  %909 = vmatmul.mubr.f32.gmra.mxu0 %v661
  %v910 = vpop.f32.mrf.mxu0
  %v911 = vadd.f32 %v597, %v910
  %v912 = vpop.f32.mrf.mxu0
  %913 = vmatprep.mubr.f32.mxu0 0.0
  %914 = vmatmul.mubr.f32.gmra.mxu0 %v664
  %v915 = vpop.f32.mrf.mxu0
  %v916 = vadd.f32 %v597, %v915
  %v917 = vpop.f32.mrf.mxu0
  %918 = vmatprep.mubr.f32.mxu0 0.0
  %919 = vmatmul.mubr.f32.gmra.mxu0 %v667
  %v920 = vpop.f32.mrf.mxu0
  %v921 = vadd.f32 %v597, %v920
  %v922 = vpop.f32.mrf.mxu0
  %923 = vmatprep.mubr.f32.mxu0 0.0
  %924 = vmatmul.mubr.f32.gmra.mxu0 %v670
  %v925 = vpop.f32.mrf.mxu0
  %v926 = vadd.f32 %v597, %v925
  %v927 = vpop.f32.mrf.mxu0
  %928 = vmatprep.mubr.f32.mxu0 0.0
  %929 = vmatmul.mubr.f32.gmra.mxu0 %v673
  %v930 = vpop.f32.mrf.mxu0
  %v931 = vadd.f32 %v597, %v930
  %v932 = vpop.f32.mrf.mxu0
  %933 = vmatprep.mubr.f32.mxu0 0.0
  %934 = vmatmul.mubr.f32.gmra.mxu0 %v676
  %v935 = vpop.f32.mrf.mxu0
  %v936 = vadd.f32 %v597, %v935
  %v937 = vpop.f32.mrf.mxu0
  %938 = vmatprep.mubr.f32.mxu0 0.0
  %939 = vmatmul.mubr.f32.gmra.mxu0 %v679
  %v940 = vpop.f32.mrf.mxu0
  %v941 = vadd.f32 %v597, %v940
  %v942 = vpop.f32.mrf.mxu0
  %943 = vmatprep.mubr.f32.mxu0 0.0
  %944 = vmatmul.mubr.f32.gmra.mxu0 %v682
  %v945 = vpop.f32.mrf.mxu0
  %v946 = vadd.f32 %v597, %v945
  %v947 = vpop.f32.mrf.mxu0
  %948 = vmatprep.mubr.f32.mxu0 0.0
  %949 = vmatmul.mubr.f32.gmra.mxu0 %v685
  %v950 = vpop.f32.mrf.mxu0
  %v951 = vadd.f32 %v597, %v950
  %v952 = vpop.f32.mrf.mxu0
  %953 = vmatprep.mubr.f32.mxu0 0.0
  %954 = vmatmul.mubr.f32.gmra.mxu0 %v688
  %v955 = vpop.f32.mrf.mxu0
  %v956 = vadd.f32 %v597, %v955
  %v957 = vpop.f32.mrf.mxu0
  %958 = vmatprep.mubr.f32.mxu0 0.0
  %959 = vmatmul.mubr.f32.gmra.mxu0 %v691
  %v960 = vpop.f32.mrf.mxu0
  %v961 = vadd.f32 %v597, %v960
  %v962 = vpop.f32.mrf.mxu0
  %963 = vmatprep.mubr.f32.mxu0 0.0
  %964 = vmatmul.mubr.f32.gmra.mxu0 %v694
  %v965 = vpop.f32.mrf.mxu0
  %v966 = vadd.f32 %v597, %v965
  %v967 = vpop.f32.mrf.mxu0
  %968 = vmatprep.mubr.f32.mxu0 0.0
  %969 = vmatmul.mubr.f32.gmra.mxu0 %v697
  %v970 = vpop.f32.mrf.mxu0
  %v971 = vadd.f32 %v597, %v970
  %v972 = vpop.f32.mrf.mxu0
  %973 = vmatprep.mubr.f32.mxu0 0.0
  %974 = vmatmul.mubr.f32.gmra.mxu0 %v700
  %v975 = vpop.f32.mrf.mxu0
  %v976 = vadd.f32 %v597, %v975
  %v977 = vpop.f32.mrf.mxu0
  %978 = vmatprep.mubr.f32.mxu0 0.0
  %979 = vmatmul.mubr.f32.gmra.mxu0 %v703
  %v980 = vpop.f32.mrf.mxu0
  %v981 = vadd.f32 %v597, %v980
  %v982 = vpop.f32.mrf.mxu0
  %983 = vmatprep.mubr.f32.mxu0 0.0
  %984 = vmatmul.mubr.f32.gmra.mxu0 %v706
  %v985 = vpop.f32.mrf.mxu0
  %v986 = vadd.f32 %v597, %v985
  %v987 = vpop.f32.mrf.mxu0
  %988 = vmatprep.mubr.f32.mxu0 0.0
  %989 = vmatmul.mubr.f32.gmra.mxu0 %v709
  %v990 = vpop.f32.mrf.mxu0
  %v991 = vadd.f32 %v597, %v990
  %v992 = vpop.f32.mrf.mxu0
  %993 = vmatprep.mubr.f32.mxu0 0.0
  %994 = vmatmul.mubr.f32.gmra.mxu0 %v712
  %v995 = vpop.f32.mrf.mxu0
  %v996 = vadd.f32 %v597, %v995
  %v997 = vpop.f32.mrf.mxu0
  %998 = vmatprep.mubr.f32.mxu0 0.0
  %999 = vmatmul.mubr.f32.gmra.mxu0 %v715
  %v1000 = vpop.f32.mrf.mxu0
  %v1001 = vadd.f32 %v597, %v1000
  %v1002 = vpop.f32.mrf.mxu0
  %1003 = vmatprep.mubr.f32.mxu0 0.0
  %1004 = vmatmul.mubr.f32.gmra.mxu0 %v718
  %v1005 = vpop.f32.mrf.mxu0
  %v1006 = vadd.f32 %v597, %v1005
  %v1007 = vpop.f32.mrf.mxu0
  %1008 = vmatprep.mubr.f32.mxu0 0.0
  %1009 = vmatmul.mubr.f32.gmra.mxu0 %v721
  %v1010 = vpop.f32.mrf.mxu0
  %v1011 = vadd.f32 %v597, %v1010
  %v1012 = vpop.f32.mrf.mxu0
  %1013 = vmatprep.mubr.f32.mxu0 0.0
  %1014 = vmatmul.mubr.f32.gmra.mxu0 %v724
  %v1015 = vpop.f32.mrf.mxu0
  %v1016 = vadd.f32 %v597, %v1015
  %v1017 = vpop.f32.mrf.mxu0
  %1018 = vmatprep.mubr.f32.mxu0 0.0
  %1019 = vmatmul.mubr.f32.gmra.mxu0 %v727
  %v1020 = vpop.f32.mrf.mxu0
  %v1021 = vadd.f32 %v597, %v1020
  %v1022 = vpop.f32.mrf.mxu0
  %1023 = vmatprep.mubr.f32.mxu0 0.0
  %1024 = vmatmul.mubr.f32.gmra.mxu0 %v730
  %v1025 = vpop.f32.mrf.mxu0
  %v1026 = vadd.f32 %v597, %v1025
  %v1027 = vpop.f32.mrf.mxu0
  %1028 = vmatprep.mubr.f32.mxu0 0.0
  %1029 = vmatmul.mubr.f32.gmra.mxu0 %v733
  %v1030 = vpop.f32.mrf.mxu0
  %v1031 = vadd.f32 %v597, %v1030
  %v1032 = vpop.f32.mrf.mxu0
  %1033 = vmatprep.mubr.f32.mxu0 0.0
  %1034 = vmatmul.mubr.f32.gmra.mxu0 %v736
  %v1035 = vpop.f32.mrf.mxu0
  %v1036 = vadd.f32 %v597, %v1035
  %v1037 = vpop.f32.mrf.mxu0
  %1038 = vmatprep.mubr.f32.mxu0 0.0
  %1039 = vmatmul.mubr.f32.gmra.mxu0 %v739
  %v1040 = vpop.f32.mrf.mxu0
  %v1041 = vadd.f32 %v597, %v1040
  %v1042 = vpop.f32.mrf.mxu0
  %1043 = vmatprep.mubr.f32.mxu0 0.0
  %1044 = vmatmul.mubr.f32.gmra.mxu0 %v742
  %v1045 = vpop.f32.mrf.mxu0
  %v1046 = vadd.f32 %v597, %v1045
  %v1047 = vpop.f32.mrf.mxu0
  %1048 = vdwg.mxu0
  %v1049 = vtanh.pop %v811
  %v1050 = vtanh.pop %v816
  %v1051 = vtanh.pop %v821
  %v1052 = vtanh.pop %v826
  %v1053 = vtanh.pop %v831
  %v1054 = vtanh.pop %v836
  %v1055 = vtanh.pop %v841
  %v1056 = vtanh.pop %v846
  %v1057 = vtanh.pop %v851
  %v1058 = vtanh.pop %v856
  %v1059 = vtanh.pop %v861
  %v1060 = vtanh.pop %v866
  %v1061 = vtanh.pop %v871
  %v1062 = vtanh.pop %v876
  %v1063 = vtanh.pop %v881
  %v1064 = vtanh.pop %v886
  %v1065 = vtanh.pop %v891
  %v1066 = vtanh.pop %v896
  %v1067 = vtanh.pop %v901
  %v1068 = vtanh.pop %v906
  %v1069 = vtanh.pop %v911
  %v1070 = vtanh.pop %v916
  %v1071 = vtanh.pop %v921
  %v1072 = vtanh.pop %v926
  %v1073 = vtanh.pop %v931
  %v1074 = vtanh.pop %v936
  %v1075 = vtanh.pop %v941
  %v1076 = vtanh.pop %v946
  %v1077 = vtanh.pop %v951
  %v1078 = vtanh.pop %v956
  %v1079 = vtanh.pop %v961
  %v1080 = vtanh.pop %v966
  %v1081 = vtanh.pop %v971
  %v1082 = vtanh.pop %v976
  %v1083 = vtanh.pop %v981
  %v1084 = vtanh.pop %v986
  %v1085 = vtanh.pop %v991
  %v1086 = vtanh.pop %v996
  %v1087 = vtanh.pop %v1001
  %v1088 = vtanh.pop %v1006
  %v1089 = vtanh.pop %v1011
  %v1090 = vtanh.pop %v1016
  %v1091 = vtanh.pop %v1021
  %v1092 = vtanh.pop %v1026
  %v1093 = vtanh.pop %v1031
  %v1094 = vtanh.pop %v1036
  %v1095 = vtanh.pop %v1041
  %v1096 = vtanh.pop %v1046
  %1145 = vrot.lane.b32.xlu0 %v298, 64
  %v1146 = vpop.permute.xlu0 %1145
  %1147 = vrot.lane.b32.xlu0 %v303, 64
  %v1148 = vpop.permute.xlu0 %1147
  %1149 = vrot.lane.b32.xlu0 %v308, 64
  %v1150 = vpop.permute.xlu0 %1149
  %1151 = vrot.lane.b32.xlu0 %v313, 64
  %v1152 = vpop.permute.xlu0 %1151
  %1153 = vrot.lane.b32.xlu0 %v318, 64
  %v1154 = vpop.permute.xlu0 %1153
  %1155 = vrot.lane.b32.xlu0 %v323, 64
  %v1156 = vpop.permute.xlu0 %1155
  %1157 = vrot.lane.b32.xlu0 %v328, 64
  %v1158 = vpop.permute.xlu0 %1157
  %1159 = vrot.lane.b32.xlu0 %v333, 64
  %v1160 = vpop.permute.xlu0 %1159
  %1161 = vrot.lane.b32.xlu0 %v338, 64
  %v1162 = vpop.permute.xlu0 %1161
  %1163 = vrot.lane.b32.xlu0 %v343, 64
  %v1164 = vpop.permute.xlu0 %1163
  %1165 = vrot.lane.b32.xlu0 %v348, 64
  %v1166 = vpop.permute.xlu0 %1165
  %1167 = vrot.lane.b32.xlu0 %v353, 64
  %v1168 = vpop.permute.xlu0 %1167
  %1169 = vrot.lane.b32.xlu0 %v358, 64
  %v1170 = vpop.permute.xlu0 %1169
  %1171 = vrot.lane.b32.xlu0 %v363, 64
  %v1172 = vpop.permute.xlu0 %1171
  %1173 = vrot.lane.b32.xlu0 %v368, 64
  %v1174 = vpop.permute.xlu0 %1173
  %1175 = vrot.lane.b32.xlu0 %v373, 64
  %v1176 = vpop.permute.xlu0 %1175
  %1177 = vrot.lane.b32.xlu0 %v378, 64
  %v1178 = vpop.permute.xlu0 %1177
  %1179 = vrot.lane.b32.xlu0 %v383, 64
  %v1180 = vpop.permute.xlu0 %1179
  %1181 = vrot.lane.b32.xlu0 %v388, 64
  %v1182 = vpop.permute.xlu0 %1181
  %1183 = vrot.lane.b32.xlu0 %v393, 64
  %v1184 = vpop.permute.xlu0 %1183
  %1185 = vrot.lane.b32.xlu0 %v398, 64
  %v1186 = vpop.permute.xlu0 %1185
  %1187 = vrot.lane.b32.xlu0 %v403, 64
  %v1188 = vpop.permute.xlu0 %1187
  %1189 = vrot.lane.b32.xlu0 %v408, 64
  %v1190 = vpop.permute.xlu0 %1189
  %1191 = vrot.lane.b32.xlu0 %v413, 64
  %v1192 = vpop.permute.xlu0 %1191
  %1193 = vrot.lane.b32.xlu0 %v418, 64
  %v1194 = vpop.permute.xlu0 %1193
  %1195 = vrot.lane.b32.xlu0 %v423, 64
  %v1196 = vpop.permute.xlu0 %1195
  %1197 = vrot.lane.b32.xlu0 %v428, 64
  %v1198 = vpop.permute.xlu0 %1197
  %1199 = vrot.lane.b32.xlu0 %v433, 64
  %v1200 = vpop.permute.xlu0 %1199
  %1201 = vrot.lane.b32.xlu0 %v438, 64
  %v1202 = vpop.permute.xlu0 %1201
  %1203 = vrot.lane.b32.xlu0 %v443, 64
  %v1204 = vpop.permute.xlu0 %1203
  %1205 = vrot.lane.b32.xlu0 %v448, 64
  %v1206 = vpop.permute.xlu0 %1205
  %1207 = vrot.lane.b32.xlu0 %v453, 64
  %v1208 = vpop.permute.xlu0 %1207
  %1209 = vrot.lane.b32.xlu0 %v458, 64
  %v1210 = vpop.permute.xlu0 %1209
  %1211 = vrot.lane.b32.xlu0 %v463, 64
  %v1212 = vpop.permute.xlu0 %1211
  %1213 = vrot.lane.b32.xlu0 %v468, 64
  %v1214 = vpop.permute.xlu0 %1213
  %1215 = vrot.lane.b32.xlu0 %v473, 64
  %v1216 = vpop.permute.xlu0 %1215
  %1217 = vrot.lane.b32.xlu0 %v478, 64
  %v1218 = vpop.permute.xlu0 %1217
  %1219 = vrot.lane.b32.xlu0 %v483, 64
  %v1220 = vpop.permute.xlu0 %1219
  %1221 = vrot.lane.b32.xlu0 %v488, 64
  %v1222 = vpop.permute.xlu0 %1221
  %1223 = vrot.lane.b32.xlu0 %v493, 64
  %v1224 = vpop.permute.xlu0 %1223
  %1225 = vrot.lane.b32.xlu0 %v498, 64
  %v1226 = vpop.permute.xlu0 %1225
  %1227 = vrot.lane.b32.xlu0 %v503, 64
  %v1228 = vpop.permute.xlu0 %1227
  %1229 = vrot.lane.b32.xlu0 %v508, 64
  %v1230 = vpop.permute.xlu0 %1229
  %1231 = vrot.lane.b32.xlu0 %v513, 64
  %v1232 = vpop.permute.xlu0 %1231
  %1233 = vrot.lane.b32.xlu0 %v518, 64
  %v1234 = vpop.permute.xlu0 %1233
  %1235 = vrot.lane.b32.xlu0 %v523, 64
  %v1236 = vpop.permute.xlu0 %1235
  %1237 = vrot.lane.b32.xlu0 %v528, 64
  %v1238 = vpop.permute.xlu0 %1237
  %1239 = vrot.lane.b32.xlu0 %v533, 64
  %v1240 = vpop.permute.xlu0 %1239
  %v1289 = vsel %vm599, %v1049, %v1146
  %v1290 = vsel %vm599, %v1050, %v1148
  %v1291 = vsel %vm599, %v1051, %v1150
  %v1292 = vsel %vm599, %v1052, %v1152
  %v1293 = vsel %vm599, %v1053, %v1154
  %v1294 = vsel %vm599, %v1054, %v1156
  %v1295 = vsel %vm599, %v1055, %v1158
  %v1296 = vsel %vm599, %v1056, %v1160
  %v1297 = vsel %vm599, %v1057, %v1162
  %v1298 = vsel %vm599, %v1058, %v1164
  %v1299 = vsel %vm599, %v1059, %v1166
  %v1300 = vsel %vm599, %v1060, %v1168
  %v1301 = vsel %vm599, %v1061, %v1170
  %v1302 = vsel %vm599, %v1062, %v1172
  %v1303 = vsel %vm599, %v1063, %v1174
  %v1304 = vsel %vm599, %v1064, %v1176
  %v1305 = vsel %vm599, %v1065, %v1178
  %v1306 = vsel %vm599, %v1066, %v1180
  %v1307 = vsel %vm599, %v1067, %v1182
  %v1308 = vsel %vm599, %v1068, %v1184
  %v1309 = vsel %vm599, %v1069, %v1186
  %v1310 = vsel %vm599, %v1070, %v1188
  %v1311 = vsel %vm599, %v1071, %v1190
  %v1312 = vsel %vm599, %v1072, %v1192
  %v1313 = vsel %vm599, %v1073, %v1194
  %v1314 = vsel %vm599, %v1074, %v1196
  %v1315 = vsel %vm599, %v1075, %v1198
  %v1316 = vsel %vm599, %v1076, %v1200
  %v1317 = vsel %vm599, %v1077, %v1202
  %v1318 = vsel %vm599, %v1078, %v1204
  %v1319 = vsel %vm599, %v1079, %v1206
  %v1320 = vsel %vm599, %v1080, %v1208
  %v1321 = vsel %vm599, %v1081, %v1210
  %v1322 = vsel %vm599, %v1082, %v1212
  %v1323 = vsel %vm599, %v1083, %v1214
  %v1324 = vsel %vm599, %v1084, %v1216
  %v1325 = vsel %vm599, %v1085, %v1218
  %v1326 = vsel %vm599, %v1086, %v1220
  %v1327 = vsel %vm599, %v1087, %v1222
  %v1328 = vsel %vm599, %v1088, %v1224
  %v1329 = vsel %vm599, %v1089, %v1226
  %v1330 = vsel %vm599, %v1090, %v1228
  %v1331 = vsel %vm599, %v1091, %v1230
  %v1332 = vsel %vm599, %v1092, %v1232
  %v1333 = vsel %vm599, %v1093, %v1234
  %v1334 = vsel %vm599, %v1094, %v1236
  %v1335 = vsel %vm599, %v1095, %v1238
  %v1336 = vsel %vm599, %v1096, %v1240
  %1337 = vst [vmem:[%s5] sm:$0xff] %v1289
  %1338 = vst [vmem:[%s5 + $0x8] sm:$0xff] %v1290
  %1339 = vst [vmem:[%s5 + $0x10] sm:$0xff] %v1291
  %1340 = vst [vmem:[%s5 + $0x18] sm:$0xff] %v1292
  %1341 = vst [vmem:[%s5 + $0x20] sm:$0xff] %v1293
  %1342 = vst [vmem:[%s5 + $0x28] sm:$0xff] %v1294
  %1343 = vst [vmem:[%s5 + $0x30] sm:$0xff] %v1295
  %1344 = vst [vmem:[%s5 + $0x38] sm:$0xff] %v1296
  %1345 = vst [vmem:[%s5 + $0x40] sm:$0xff] %v1297
  %1346 = vst [vmem:[%s5 + $0x48] sm:$0xff] %v1298
  %1347 = vst [vmem:[%s5 + $0x50] sm:$0xff] %v1299
  %1348 = vst [vmem:[%s5 + $0x58] sm:$0xff] %v1300
  %1349 = vst [vmem:[%s5 + $0x60] sm:$0xff] %v1301
  %1350 = vst [vmem:[%s5 + $0x68] sm:$0xff] %v1302
  %1351 = vst [vmem:[%s5 + $0x70] sm:$0xff] %v1303
  %1352 = vst [vmem:[%s5 + $0x78] sm:$0xff] %v1304
  %1353 = vst [vmem:[%s5 + $0x80] sm:$0xff] %v1305
  %1354 = vst [vmem:[%s5 + $0x88] sm:$0xff] %v1306
  %1355 = vst [vmem:[%s5 + $0x90] sm:$0xff] %v1307
  %1356 = vst [vmem:[%s5 + $0x98] sm:$0xff] %v1308
  %1357 = vst [vmem:[%s5 + $0xa0] sm:$0xff] %v1309
  %1358 = vst [vmem:[%s5 + $0xa8] sm:$0xff] %v1310
  %1359 = vst [vmem:[%s5 + $0xb0] sm:$0xff] %v1311
  %1360 = vst [vmem:[%s5 + $0xb8] sm:$0xff] %v1312
  %1361 = vst [vmem:[%s5 + $0xc0] sm:$0xff] %v1313
  %1362 = vst [vmem:[%s5 + $0xc8] sm:$0xff] %v1314
  %1363 = vst [vmem:[%s5 + $0xd0] sm:$0xff] %v1315
  %1364 = vst [vmem:[%s5 + $0xd8] sm:$0xff] %v1316
  %1365 = vst [vmem:[%s5 + $0xe0] sm:$0xff] %v1317
  %1366 = vst [vmem:[%s5 + $0xe8] sm:$0xff] %v1318
  %1367 = vst [vmem:[%s5 + $0xf0] sm:$0xff] %v1319
  %1368 = vst [vmem:[%s5 + $0xf8] sm:$0xff] %v1320
  %1369 = vst [vmem:[%s5 + $0x100] sm:$0xff] %v1321
  %1370 = vst [vmem:[%s5 + $0x108] sm:$0xff] %v1322
  %1371 = vst [vmem:[%s5 + $0x110] sm:$0xff] %v1323
  %1372 = vst [vmem:[%s5 + $0x118] sm:$0xff] %v1324
  %1373 = vst [vmem:[%s5 + $0x120] sm:$0xff] %v1325
  %1374 = vst [vmem:[%s5 + $0x128] sm:$0xff] %v1326
  %1375 = vst [vmem:[%s5 + $0x130] sm:$0xff] %v1327
  %1376 = vst [vmem:[%s5 + $0x138] sm:$0xff] %v1328
  %1377 = vst [vmem:[%s5 + $0x140] sm:$0xff] %v1329
  %1378 = vst [vmem:[%s5 + $0x148] sm:$0xff] %v1330
  %1379 = vst [vmem:[%s5 + $0x150] sm:$0xff] %v1331
  %1380 = vst [vmem:[%s5 + $0x158] sm:$0xff] %v1332
  %1381 = vst [vmem:[%s5 + $0x160] sm:$0xff] %v1333
  %1382 = vst [vmem:[%s5 + $0x168] sm:$0xff] %v1334
  %1383 = vst [vmem:[%s5 + $0x170] sm:$0xff] %v1335
  %1384 = vst [vmem:[%s5 + $0x178] sm:$0xff] %v1336
  // Predicated region
  $region22: #{model_tanh_forward.3} parent=0 // pred_check
    _
  $region23: #{model_tanh_forward.3} parent=0 // pred_check_branch
    %1386 = sbr.rel (0) target = $region25
  $region24: #{model_tanh_forward.3} parent=0 // pred_region
    _
  $region25: #{model_tanh_forward.3} parent=0 // pred_fallthru
    _
  // Predicated region
  $region26: #{model_tanh_forward.3} parent=0 // pred_check
    _
  $region27: #{model_tanh_forward.3} parent=0 // pred_check_branch
    %1388 = sbr.rel (0) target = $region29
  $region28: #{model_tanh_forward.3} parent=0 // pred_region
    _
  $region29: #{model_tanh_forward.3} parent=0 // pred_fallthru
    _

// kernel: model_tanh_forward.5
$region0: #{model_tanh_forward.5}
  #allocation0 [shape = 'u32[]', space=smem, size = 0x4, offset = 0x4, fixed_abs, tag = 'smem constant byte address 0x4 - core index']
  #allocation1 [shape = 'u32[144,128]{1,0:T(1,128)}', space=vmem, size = 0x12000, scoped, tag = 'internal scratch']
  %s0 = inlined_call_operand.vmem [shape: f32[16,6272], index: 0, kind: input, shape index: {}]
  %s1 = inlined_call_operand.vmem [shape: f32[6272,128], index: 1, kind: input, shape index: {}]
  %s2 = inlined_call_operand.vmem [shape: f32[1,128], index: 2, kind: input, shape index: {}]
  %s3 = inlined_call_operand.vmem [shape: f32[16,128], index: 3, kind: output, shape index: {}]
  %s4 = sld [smem:[#allocation0]]
  $region22: #{model_tanh_forward.5} parent=0
    _
  %s6 = ssub.s32 1, %s4
  %s7 = scalar_select 0, %s6, %s4
  // Predicated region
  $region2: #{model_tanh_forward.5} parent=0 // pred_check
    _
  $region3: #{model_tanh_forward.5} parent=0 // pred_check_branch
    %9 = sbr.rel (0) target = $region5
  $region4: #{model_tanh_forward.5} parent=0 // pred_region
    _
  $region5: #{model_tanh_forward.5} parent=0 // pred_fallthru
    _
  // Predicated region
  $region6: #{model_tanh_forward.5} parent=0 // pred_check
    _
  $region7: #{model_tanh_forward.5} parent=0 // pred_check_branch
    %11 = sbr.rel (0) target = $region9
  $region8: #{model_tanh_forward.5} parent=0 // pred_region
    _
  $region9: #{model_tanh_forward.5} parent=0 // pred_fallthru
    _
  // Predicated region
  $region10: #{model_tanh_forward.5} parent=0 // pred_check
    _
  $region11: #{model_tanh_forward.5} parent=0 // pred_check_branch
    %13 = sbr.rel (0) target = $region13
  $region12: #{model_tanh_forward.5} parent=0 // pred_region
    _
  $region13: #{model_tanh_forward.5} parent=0 // pred_fallthru
    _
  %v14 = vld [vmem:[%s0] sm:$0xff]
  %v15 = vld [vmem:[%s0 + $0x8] sm:$0xff]
  %v16 = vld [vmem:[%s0 + $0x10] sm:$0xff]
  %v17 = vld [vmem:[%s0 + $0x18] sm:$0xff]
  %v18 = vld [vmem:[%s0 + $0x20] sm:$0xff]
  %v19 = vld [vmem:[%s0 + $0x28] sm:$0xff]
  %v20 = vld [vmem:[%s0 + $0x30] sm:$0xff]
  %v21 = vld [vmem:[%s0 + $0x38] sm:$0xff]
  %v22 = vld [vmem:[%s0 + $0x40] sm:$0xff]
  %v23 = vld [vmem:[%s0 + $0x48] sm:$0xff]
  %v24 = vld [vmem:[%s0 + $0x50] sm:$0xff]
  %v25 = vld [vmem:[%s0 + $0x58] sm:$0xff]
  %v26 = vld [vmem:[%s0 + $0x60] sm:$0xff]
  %v27 = vld [vmem:[%s0 + $0x68] sm:$0xff]
  %v28 = vld [vmem:[%s0 + $0x70] sm:$0xff]
  %v29 = vld [vmem:[%s0 + $0x78] sm:$0xff]
  %v30 = vld [vmem:[%s0 + $0x80] sm:$0xff]
  %v31 = vld [vmem:[%s0 + $0x88] sm:$0xff]
  %v32 = vld [vmem:[%s0 + $0x90] sm:$0xff]
  %v33 = vld [vmem:[%s0 + $0x98] sm:$0xff]
  %v34 = vld [vmem:[%s0 + $0xa0] sm:$0xff]
  %v35 = vld [vmem:[%s0 + $0xa8] sm:$0xff]
  %v36 = vld [vmem:[%s0 + $0xb0] sm:$0xff]
  %v37 = vld [vmem:[%s0 + $0xb8] sm:$0xff]
  %v38 = vld [vmem:[%s0 + $0xc0] sm:$0xff]
  %v39 = vld [vmem:[%s0 + $0xc8] sm:$0xff]
  %v40 = vld [vmem:[%s0 + $0xd0] sm:$0xff]
  %v41 = vld [vmem:[%s0 + $0xd8] sm:$0xff]
  %v42 = vld [vmem:[%s0 + $0xe0] sm:$0xff]
  %v43 = vld [vmem:[%s0 + $0xe8] sm:$0xff]
  %v44 = vld [vmem:[%s0 + $0xf0] sm:$0xff]
  %v45 = vld [vmem:[%s0 + $0xf8] sm:$0xff]
  %v46 = vld [vmem:[%s0 + $0x100] sm:$0xff]
  %v47 = vld [vmem:[%s0 + $0x108] sm:$0xff]
  %v48 = vld [vmem:[%s0 + $0x110] sm:$0xff]
  %v49 = vld [vmem:[%s0 + $0x118] sm:$0xff]
  %v50 = vld [vmem:[%s0 + $0x120] sm:$0xff]
  %v51 = vld [vmem:[%s0 + $0x128] sm:$0xff]
  %v52 = vld [vmem:[%s0 + $0x130] sm:$0xff]
  %v53 = vld [vmem:[%s0 + $0x138] sm:$0xff]
  %v54 = vld [vmem:[%s0 + $0x140] sm:$0xff]
  %v55 = vld [vmem:[%s0 + $0x148] sm:$0xff]
  %v56 = vld [vmem:[%s0 + $0x150] sm:$0xff]
  %v57 = vld [vmem:[%s0 + $0x158] sm:$0xff]
  %v58 = vld [vmem:[%s0 + $0x160] sm:$0xff]
  %v59 = vld [vmem:[%s0 + $0x168] sm:$0xff]
  %v60 = vld [vmem:[%s0 + $0x170] sm:$0xff]
  %v61 = vld [vmem:[%s0 + $0x178] sm:$0xff]
  %v62 = vld [vmem:[%s0 + $0x180] sm:$0xff]
  %v63 = vld [vmem:[%s0 + $0x188] sm:$0xff]
  %v64 = vld [vmem:[%s0 + $0x190] sm:$0xff]
  %v65 = vld [vmem:[%s0 + $0x198] sm:$0xff]
  %v66 = vld [vmem:[%s0 + $0x1a0] sm:$0xff]
  %v67 = vld [vmem:[%s0 + $0x1a8] sm:$0xff]
  %v68 = vld [vmem:[%s0 + $0x1b0] sm:$0xff]
  %v69 = vld [vmem:[%s0 + $0x1b8] sm:$0xff]
  %v70 = vld [vmem:[%s0 + $0x1c0] sm:$0xff]
  %v71 = vld [vmem:[%s0 + $0x1c8] sm:$0xff]
  %v72 = vld [vmem:[%s0 + $0x1d0] sm:$0xff]
  %v73 = vld [vmem:[%s0 + $0x1d8] sm:$0xff]
  %v74 = vld [vmem:[%s0 + $0x1e0] sm:$0xff]
  %v75 = vld [vmem:[%s0 + $0x1e8] sm:$0xff]
  %v76 = vld [vmem:[%s0 + $0x1f0] sm:$0xff]
  %v77 = vld [vmem:[%s0 + $0x1f8] sm:$0xff]
  %v78 = vld [vmem:[%s0 + $0x200] sm:$0xff]
  %v79 = vld [vmem:[%s0 + $0x208] sm:$0xff]
  %v80 = vld [vmem:[%s0 + $0x210] sm:$0xff]
  %v81 = vld [vmem:[%s0 + $0x218] sm:$0xff]
  %v82 = vld [vmem:[%s0 + $0x220] sm:$0xff]
  %v83 = vld [vmem:[%s0 + $0x228] sm:$0xff]
  %v84 = vld [vmem:[%s0 + $0x230] sm:$0xff]
  %v85 = vld [vmem:[%s0 + $0x238] sm:$0xff]
  %v86 = vld [vmem:[%s0 + $0x240] sm:$0xff]
  %v87 = vld [vmem:[%s0 + $0x248] sm:$0xff]
  %v88 = vld [vmem:[%s0 + $0x250] sm:$0xff]
  %v89 = vld [vmem:[%s0 + $0x258] sm:$0xff]
  %v90 = vld [vmem:[%s0 + $0x260] sm:$0xff]
  %v91 = vld [vmem:[%s0 + $0x268] sm:$0xff]
  %v92 = vld [vmem:[%s0 + $0x270] sm:$0xff]
  %v93 = vld [vmem:[%s0 + $0x278] sm:$0xff]
  %v94 = vld [vmem:[%s0 + $0x280] sm:$0xff]
  %v95 = vld [vmem:[%s0 + $0x288] sm:$0xff]
  %v96 = vld [vmem:[%s0 + $0x290] sm:$0xff]
  %v97 = vld [vmem:[%s0 + $0x298] sm:$0xff]
  %v98 = vld [vmem:[%s0 + $0x2a0] sm:$0xff]
  %v99 = vld [vmem:[%s0 + $0x2a8] sm:$0xff]
  %v100 = vld [vmem:[%s0 + $0x2b0] sm:$0xff]
  %v101 = vld [vmem:[%s0 + $0x2b8] sm:$0xff]
  %v102 = vld [vmem:[%s0 + $0x2c0] sm:$0xff]
  %v103 = vld [vmem:[%s0 + $0x2c8] sm:$0xff]
  %v104 = vld [vmem:[%s0 + $0x2d0] sm:$0xff]
  %v105 = vld [vmem:[%s0 + $0x2d8] sm:$0xff]
  %v106 = vld [vmem:[%s0 + $0x2e0] sm:$0xff]
  %v107 = vld [vmem:[%s0 + $0x2e8] sm:$0xff]
  %v108 = vld [vmem:[%s0 + $0x2f0] sm:$0xff]
  %v109 = vld [vmem:[%s0 + $0x2f8] sm:$0xff]
  %v110 = vld [vmem:[%s0 + $0x300] sm:$0xff]
  %v111 = vld [vmem:[%s0 + $0x308] sm:$0xff]
  %v112 = vld [vmem:[%s1] sm:$0xff]
  %v113 = vld [vmem:[%s1 + $0x8] sm:$0xff]
  %v114 = vld [vmem:[%s1 + $0x10] sm:$0xff]
  %v115 = vld [vmem:[%s1 + $0x18] sm:$0xff]
  %v116 = vld [vmem:[%s1 + $0x20] sm:$0xff]
  %v117 = vld [vmem:[%s1 + $0x28] sm:$0xff]
  %v118 = vld [vmem:[%s1 + $0x30] sm:$0xff]
  %v119 = vld [vmem:[%s1 + $0x38] sm:$0xff]
  %v120 = vld [vmem:[%s1 + $0x40] sm:$0xff]
  %v121 = vld [vmem:[%s1 + $0x48] sm:$0xff]
  %v122 = vld [vmem:[%s1 + $0x50] sm:$0xff]
  %v123 = vld [vmem:[%s1 + $0x58] sm:$0xff]
  %v124 = vld [vmem:[%s1 + $0x60] sm:$0xff]
  %v125 = vld [vmem:[%s1 + $0x68] sm:$0xff]
  %v126 = vld [vmem:[%s1 + $0x70] sm:$0xff]
  %v127 = vld [vmem:[%s1 + $0x78] sm:$0xff]
  %v128 = vld [vmem:[%s1 + $0x80] sm:$0xff]
  %v129 = vld [vmem:[%s1 + $0x88] sm:$0xff]
  %v130 = vld [vmem:[%s1 + $0x90] sm:$0xff]
  %v131 = vld [vmem:[%s1 + $0x98] sm:$0xff]
  %v132 = vld [vmem:[%s1 + $0xa0] sm:$0xff]
  %v133 = vld [vmem:[%s1 + $0xa8] sm:$0xff]
  %v134 = vld [vmem:[%s1 + $0xb0] sm:$0xff]
  %v135 = vld [vmem:[%s1 + $0xb8] sm:$0xff]
  %v136 = vld [vmem:[%s1 + $0xc0] sm:$0xff]
  %v137 = vld [vmem:[%s1 + $0xc8] sm:$0xff]
  %v138 = vld [vmem:[%s1 + $0xd0] sm:$0xff]
  %v139 = vld [vmem:[%s1 + $0xd8] sm:$0xff]
  %v140 = vld [vmem:[%s1 + $0xe0] sm:$0xff]
  %v141 = vld [vmem:[%s1 + $0xe8] sm:$0xff]
  %v142 = vld [vmem:[%s1 + $0xf0] sm:$0xff]
  %v143 = vld [vmem:[%s1 + $0xf8] sm:$0xff]
  %v144 = vld [vmem:[%s1 + $0x100] sm:$0xff]
  %v145 = vld [vmem:[%s1 + $0x108] sm:$0xff]
  %v146 = vld [vmem:[%s1 + $0x110] sm:$0xff]
  %v147 = vld [vmem:[%s1 + $0x118] sm:$0xff]
  %v148 = vld [vmem:[%s1 + $0x120] sm:$0xff]
  %v149 = vld [vmem:[%s1 + $0x128] sm:$0xff]
  %v150 = vld [vmem:[%s1 + $0x130] sm:$0xff]
  %v151 = vld [vmem:[%s1 + $0x138] sm:$0xff]
  %v152 = vld [vmem:[%s1 + $0x140] sm:$0xff]
  %v153 = vld [vmem:[%s1 + $0x148] sm:$0xff]
  %v154 = vld [vmem:[%s1 + $0x150] sm:$0xff]
  %v155 = vld [vmem:[%s1 + $0x158] sm:$0xff]
  %v156 = vld [vmem:[%s1 + $0x160] sm:$0xff]
  %v157 = vld [vmem:[%s1 + $0x168] sm:$0xff]
  %v158 = vld [vmem:[%s1 + $0x170] sm:$0xff]
  %v159 = vld [vmem:[%s1 + $0x178] sm:$0xff]
  %v160 = vld [vmem:[%s1 + $0x180] sm:$0xff]
  %v161 = vld [vmem:[%s1 + $0x188] sm:$0xff]
  %v162 = vld [vmem:[%s1 + $0x190] sm:$0xff]
  %v163 = vld [vmem:[%s1 + $0x198] sm:$0xff]
  %v164 = vld [vmem:[%s1 + $0x1a0] sm:$0xff]
  %v165 = vld [vmem:[%s1 + $0x1a8] sm:$0xff]
  %v166 = vld [vmem:[%s1 + $0x1b0] sm:$0xff]
  %v167 = vld [vmem:[%s1 + $0x1b8] sm:$0xff]
  %v168 = vld [vmem:[%s1 + $0x1c0] sm:$0xff]
  %v169 = vld [vmem:[%s1 + $0x1c8] sm:$0xff]
  %v170 = vld [vmem:[%s1 + $0x1d0] sm:$0xff]
  %v171 = vld [vmem:[%s1 + $0x1d8] sm:$0xff]
  %v172 = vld [vmem:[%s1 + $0x1e0] sm:$0xff]
  %v173 = vld [vmem:[%s1 + $0x1e8] sm:$0xff]
  %v174 = vld [vmem:[%s1 + $0x1f0] sm:$0xff]
  %v175 = vld [vmem:[%s1 + $0x1f8] sm:$0xff]
  %v176 = vld [vmem:[%s1 + $0x200] sm:$0xff]
  %v177 = vld [vmem:[%s1 + $0x208] sm:$0xff]
  %v178 = vld [vmem:[%s1 + $0x210] sm:$0xff]
  %v179 = vld [vmem:[%s1 + $0x218] sm:$0xff]
  %v180 = vld [vmem:[%s1 + $0x220] sm:$0xff]
  %v181 = vld [vmem:[%s1 + $0x228] sm:$0xff]
  %v182 = vld [vmem:[%s1 + $0x230] sm:$0xff]
  %v183 = vld [vmem:[%s1 + $0x238] sm:$0xff]
  %v184 = vld [vmem:[%s1 + $0x240] sm:$0xff]
  %v185 = vld [vmem:[%s1 + $0x248] sm:$0xff]
  %v186 = vld [vmem:[%s1 + $0x250] sm:$0xff]
  %v187 = vld [vmem:[%s1 + $0x258] sm:$0xff]
  %v188 = vld [vmem:[%s1 + $0x260] sm:$0xff]
  %v189 = vld [vmem:[%s1 + $0x268] sm:$0xff]
  %v190 = vld [vmem:[%s1 + $0x270] sm:$0xff]
  %v191 = vld [vmem:[%s1 + $0x278] sm:$0xff]
  %v192 = vld [vmem:[%s1 + $0x280] sm:$0xff]
  %v193 = vld [vmem:[%s1 + $0x288] sm:$0xff]
  %v194 = vld [vmem:[%s1 + $0x290] sm:$0xff]
  %v195 = vld [vmem:[%s1 + $0x298] sm:$0xff]
  %v196 = vld [vmem:[%s1 + $0x2a0] sm:$0xff]
  %v197 = vld [vmem:[%s1 + $0x2a8] sm:$0xff]
  %v198 = vld [vmem:[%s1 + $0x2b0] sm:$0xff]
  %v199 = vld [vmem:[%s1 + $0x2b8] sm:$0xff]
  %v200 = vld [vmem:[%s1 + $0x2c0] sm:$0xff]
  %v201 = vld [vmem:[%s1 + $0x2c8] sm:$0xff]
  %v202 = vld [vmem:[%s1 + $0x2d0] sm:$0xff]
  %v203 = vld [vmem:[%s1 + $0x2d8] sm:$0xff]
  %v204 = vld [vmem:[%s1 + $0x2e0] sm:$0xff]
  %v205 = vld [vmem:[%s1 + $0x2e8] sm:$0xff]
  %v206 = vld [vmem:[%s1 + $0x2f0] sm:$0xff]
  %v207 = vld [vmem:[%s1 + $0x2f8] sm:$0xff]
  %v208 = vld [vmem:[%s1 + $0x300] sm:$0xff]
  %v209 = vld [vmem:[%s1 + $0x308] sm:$0xff]
  %v210 = vld [vmem:[%s1 + $0x310] sm:$0xff]
  %v211 = vld [vmem:[%s1 + $0x318] sm:$0xff]
  %v212 = vld [vmem:[%s1 + $0x320] sm:$0xff]
  %v213 = vld [vmem:[%s1 + $0x328] sm:$0xff]
  %v214 = vld [vmem:[%s1 + $0x330] sm:$0xff]
  %v215 = vld [vmem:[%s1 + $0x338] sm:$0xff]
  %v216 = vld [vmem:[%s1 + $0x340] sm:$0xff]
  %v217 = vld [vmem:[%s1 + $0x348] sm:$0xff]
  %v218 = vld [vmem:[%s1 + $0x350] sm:$0xff]
  %v219 = vld [vmem:[%s1 + $0x358] sm:$0xff]
  %v220 = vld [vmem:[%s1 + $0x360] sm:$0xff]
  %v221 = vld [vmem:[%s1 + $0x368] sm:$0xff]
  %v222 = vld [vmem:[%s1 + $0x370] sm:$0xff]
  %v223 = vld [vmem:[%s1 + $0x378] sm:$0xff]
  %v224 = vld [vmem:[%s1 + $0x380] sm:$0xff]
  %v225 = vld [vmem:[%s1 + $0x388] sm:$0xff]
  %v226 = vld [vmem:[%s1 + $0x390] sm:$0xff]
  %v227 = vld [vmem:[%s1 + $0x398] sm:$0xff]
  %v228 = vld [vmem:[%s1 + $0x3a0] sm:$0xff]
  %v229 = vld [vmem:[%s1 + $0x3a8] sm:$0xff]
  %v230 = vld [vmem:[%s1 + $0x3b0] sm:$0xff]
  %v231 = vld [vmem:[%s1 + $0x3b8] sm:$0xff]
  %v232 = vld [vmem:[%s1 + $0x3c0] sm:$0xff]
  %v233 = vld [vmem:[%s1 + $0x3c8] sm:$0xff]
  %v234 = vld [vmem:[%s1 + $0x3d0] sm:$0xff]
  %v235 = vld [vmem:[%s1 + $0x3d8] sm:$0xff]
  %v236 = vld [vmem:[%s1 + $0x3e0] sm:$0xff]
  %v237 = vld [vmem:[%s1 + $0x3e8] sm:$0xff]
  %v238 = vld [vmem:[%s1 + $0x3f0] sm:$0xff]
  %v239 = vld [vmem:[%s1 + $0x3f8] sm:$0xff]
  %v240 = vld [vmem:[%s1 + $0x400] sm:$0xff]
  %v241 = vld [vmem:[%s1 + $0x408] sm:$0xff]
  %v242 = vld [vmem:[%s1 + $0x410] sm:$0xff]
  %v243 = vld [vmem:[%s1 + $0x418] sm:$0xff]
  %v244 = vld [vmem:[%s1 + $0x420] sm:$0xff]
  %v245 = vld [vmem:[%s1 + $0x428] sm:$0xff]
  %v246 = vld [vmem:[%s1 + $0x430] sm:$0xff]
  %v247 = vld [vmem:[%s1 + $0x438] sm:$0xff]
  %v248 = vld [vmem:[%s1 + $0x440] sm:$0xff]
  %v249 = vld [vmem:[%s1 + $0x448] sm:$0xff]
  %v250 = vld [vmem:[%s1 + $0x450] sm:$0xff]
  %v251 = vld [vmem:[%s1 + $0x458] sm:$0xff]
  %v252 = vld [vmem:[%s1 + $0x460] sm:$0xff]
  %v253 = vld [vmem:[%s1 + $0x468] sm:$0xff]
  %v254 = vld [vmem:[%s1 + $0x470] sm:$0xff]
  %v255 = vld [vmem:[%s1 + $0x478] sm:$0xff]
  %v256 = vld [vmem:[%s1 + $0x480] sm:$0xff]
  %v257 = vld [vmem:[%s1 + $0x488] sm:$0xff]
  %v258 = vld [vmem:[%s1 + $0x490] sm:$0xff]
  %v259 = vld [vmem:[%s1 + $0x498] sm:$0xff]
  %v260 = vld [vmem:[%s1 + $0x4a0] sm:$0xff]
  %v261 = vld [vmem:[%s1 + $0x4a8] sm:$0xff]
  %v262 = vld [vmem:[%s1 + $0x4b0] sm:$0xff]
  %v263 = vld [vmem:[%s1 + $0x4b8] sm:$0xff]
  %v264 = vld [vmem:[%s1 + $0x4c0] sm:$0xff]
  %v265 = vld [vmem:[%s1 + $0x4c8] sm:$0xff]
  %v266 = vld [vmem:[%s1 + $0x4d0] sm:$0xff]
  %v267 = vld [vmem:[%s1 + $0x4d8] sm:$0xff]
  %v268 = vld [vmem:[%s1 + $0x4e0] sm:$0xff]
  %v269 = vld [vmem:[%s1 + $0x4e8] sm:$0xff]
  %v270 = vld [vmem:[%s1 + $0x4f0] sm:$0xff]
  %v271 = vld [vmem:[%s1 + $0x4f8] sm:$0xff]
  %v272 = vld [vmem:[%s1 + $0x500] sm:$0xff]
  %v273 = vld [vmem:[%s1 + $0x508] sm:$0xff]
  %v274 = vld [vmem:[%s1 + $0x510] sm:$0xff]
  %v275 = vld [vmem:[%s1 + $0x518] sm:$0xff]
  %v276 = vld [vmem:[%s1 + $0x520] sm:$0xff]
  %v277 = vld [vmem:[%s1 + $0x528] sm:$0xff]
  %v278 = vld [vmem:[%s1 + $0x530] sm:$0xff]
  %v279 = vld [vmem:[%s1 + $0x538] sm:$0xff]
  %v280 = vld [vmem:[%s1 + $0x540] sm:$0xff]
  %v281 = vld [vmem:[%s1 + $0x548] sm:$0xff]
  %v282 = vld [vmem:[%s1 + $0x550] sm:$0xff]
  %v283 = vld [vmem:[%s1 + $0x558] sm:$0xff]
  %v284 = vld [vmem:[%s1 + $0x560] sm:$0xff]
  %v285 = vld [vmem:[%s1 + $0x568] sm:$0xff]
  %v286 = vld [vmem:[%s1 + $0x570] sm:$0xff]
  %v287 = vld [vmem:[%s1 + $0x578] sm:$0xff]
  %v288 = vld [vmem:[%s1 + $0x580] sm:$0xff]
  %v289 = vld [vmem:[%s1 + $0x588] sm:$0xff]
  %v290 = vld [vmem:[%s1 + $0x590] sm:$0xff]
  %v291 = vld [vmem:[%s1 + $0x598] sm:$0xff]
  %v292 = vld [vmem:[%s1 + $0x5a0] sm:$0xff]
  %v293 = vld [vmem:[%s1 + $0x5a8] sm:$0xff]
  %v294 = vld [vmem:[%s1 + $0x5b0] sm:$0xff]
  %v295 = vld [vmem:[%s1 + $0x5b8] sm:$0xff]
  %v296 = vld [vmem:[%s1 + $0x5c0] sm:$0xff]
  %v297 = vld [vmem:[%s1 + $0x5c8] sm:$0xff]
  %v298 = vld [vmem:[%s1 + $0x5d0] sm:$0xff]
  %v299 = vld [vmem:[%s1 + $0x5d8] sm:$0xff]
  %v300 = vld [vmem:[%s1 + $0x5e0] sm:$0xff]
  %v301 = vld [vmem:[%s1 + $0x5e8] sm:$0xff]
  %v302 = vld [vmem:[%s1 + $0x5f0] sm:$0xff]
  %v303 = vld [vmem:[%s1 + $0x5f8] sm:$0xff]
  %v304 = vld [vmem:[%s1 + $0x600] sm:$0xff]
  %v305 = vld [vmem:[%s1 + $0x608] sm:$0xff]
  %v306 = vld [vmem:[%s1 + $0x610] sm:$0xff]
  %v307 = vld [vmem:[%s1 + $0x618] sm:$0xff]
  %v308 = vld [vmem:[%s1 + $0x620] sm:$0xff]
  %v309 = vld [vmem:[%s1 + $0x628] sm:$0xff]
  %v310 = vld [vmem:[%s1 + $0x630] sm:$0xff]
  %v311 = vld [vmem:[%s1 + $0x638] sm:$0xff]
  %v312 = vld [vmem:[%s1 + $0x640] sm:$0xff]
  %v313 = vld [vmem:[%s1 + $0x648] sm:$0xff]
  %v314 = vld [vmem:[%s1 + $0x650] sm:$0xff]
  %v315 = vld [vmem:[%s1 + $0x658] sm:$0xff]
  %v316 = vld [vmem:[%s1 + $0x660] sm:$0xff]
  %v317 = vld [vmem:[%s1 + $0x668] sm:$0xff]
  %v318 = vld [vmem:[%s1 + $0x670] sm:$0xff]
  %v319 = vld [vmem:[%s1 + $0x678] sm:$0xff]
  %v320 = vld [vmem:[%s1 + $0x680] sm:$0xff]
  %v321 = vld [vmem:[%s1 + $0x688] sm:$0xff]
  %v322 = vld [vmem:[%s1 + $0x690] sm:$0xff]
  %v323 = vld [vmem:[%s1 + $0x698] sm:$0xff]
  %v324 = vld [vmem:[%s1 + $0x6a0] sm:$0xff]
  %v325 = vld [vmem:[%s1 + $0x6a8] sm:$0xff]
  %v326 = vld [vmem:[%s1 + $0x6b0] sm:$0xff]
  %v327 = vld [vmem:[%s1 + $0x6b8] sm:$0xff]
  %v328 = vld [vmem:[%s1 + $0x6c0] sm:$0xff]
  %v329 = vld [vmem:[%s1 + $0x6c8] sm:$0xff]
  %v330 = vld [vmem:[%s1 + $0x6d0] sm:$0xff]
  %v331 = vld [vmem:[%s1 + $0x6d8] sm:$0xff]
  %v332 = vld [vmem:[%s1 + $0x6e0] sm:$0xff]
  %v333 = vld [vmem:[%s1 + $0x6e8] sm:$0xff]
  %v334 = vld [vmem:[%s1 + $0x6f0] sm:$0xff]
  %v335 = vld [vmem:[%s1 + $0x6f8] sm:$0xff]
  %v336 = vld [vmem:[%s1 + $0x700] sm:$0xff]
  %v337 = vld [vmem:[%s1 + $0x708] sm:$0xff]
  %v338 = vld [vmem:[%s1 + $0x710] sm:$0xff]
  %v339 = vld [vmem:[%s1 + $0x718] sm:$0xff]
  %v340 = vld [vmem:[%s1 + $0x720] sm:$0xff]
  %v341 = vld [vmem:[%s1 + $0x728] sm:$0xff]
  %v342 = vld [vmem:[%s1 + $0x730] sm:$0xff]
  %v343 = vld [vmem:[%s1 + $0x738] sm:$0xff]
  %v344 = vld [vmem:[%s1 + $0x740] sm:$0xff]
  %v345 = vld [vmem:[%s1 + $0x748] sm:$0xff]
  %v346 = vld [vmem:[%s1 + $0x750] sm:$0xff]
  %v347 = vld [vmem:[%s1 + $0x758] sm:$0xff]
  %v348 = vld [vmem:[%s1 + $0x760] sm:$0xff]
  %v349 = vld [vmem:[%s1 + $0x768] sm:$0xff]
  %v350 = vld [vmem:[%s1 + $0x770] sm:$0xff]
  %v351 = vld [vmem:[%s1 + $0x778] sm:$0xff]
  %v352 = vld [vmem:[%s1 + $0x780] sm:$0xff]
  %v353 = vld [vmem:[%s1 + $0x788] sm:$0xff]
  %v354 = vld [vmem:[%s1 + $0x790] sm:$0xff]
  %v355 = vld [vmem:[%s1 + $0x798] sm:$0xff]
  %v356 = vld [vmem:[%s1 + $0x7a0] sm:$0xff]
  %v357 = vld [vmem:[%s1 + $0x7a8] sm:$0xff]
  %v358 = vld [vmem:[%s1 + $0x7b0] sm:$0xff]
  %v359 = vld [vmem:[%s1 + $0x7b8] sm:$0xff]
  %v360 = vld [vmem:[%s1 + $0x7c0] sm:$0xff]
  %v361 = vld [vmem:[%s1 + $0x7c8] sm:$0xff]
  %v362 = vld [vmem:[%s1 + $0x7d0] sm:$0xff]
  %v363 = vld [vmem:[%s1 + $0x7d8] sm:$0xff]
  %v364 = vld [vmem:[%s1 + $0x7e0] sm:$0xff]
  %v365 = vld [vmem:[%s1 + $0x7e8] sm:$0xff]
  %v366 = vld [vmem:[%s1 + $0x7f0] sm:$0xff]
  %v367 = vld [vmem:[%s1 + $0x7f8] sm:$0xff]
  %v368 = vld [vmem:[%s1 + $0x800] sm:$0xff]
  %v369 = vld [vmem:[%s1 + $0x808] sm:$0xff]
  %v370 = vld [vmem:[%s1 + $0x810] sm:$0xff]
  %v371 = vld [vmem:[%s1 + $0x818] sm:$0xff]
  %v372 = vld [vmem:[%s1 + $0x820] sm:$0xff]
  %v373 = vld [vmem:[%s1 + $0x828] sm:$0xff]
  %v374 = vld [vmem:[%s1 + $0x830] sm:$0xff]
  %v375 = vld [vmem:[%s1 + $0x838] sm:$0xff]
  %v376 = vld [vmem:[%s1 + $0x840] sm:$0xff]
  %v377 = vld [vmem:[%s1 + $0x848] sm:$0xff]
  %v378 = vld [vmem:[%s1 + $0x850] sm:$0xff]
  %v379 = vld [vmem:[%s1 + $0x858] sm:$0xff]
  %v380 = vld [vmem:[%s1 + $0x860] sm:$0xff]
  %v381 = vld [vmem:[%s1 + $0x868] sm:$0xff]
  %v382 = vld [vmem:[%s1 + $0x870] sm:$0xff]
  %v383 = vld [vmem:[%s1 + $0x878] sm:$0xff]
  %v384 = vld [vmem:[%s1 + $0x880] sm:$0xff]
  %v385 = vld [vmem:[%s1 + $0x888] sm:$0xff]
  %v386 = vld [vmem:[%s1 + $0x890] sm:$0xff]
  %v387 = vld [vmem:[%s1 + $0x898] sm:$0xff]
  %v388 = vld [vmem:[%s1 + $0x8a0] sm:$0xff]
  %v389 = vld [vmem:[%s1 + $0x8a8] sm:$0xff]
  %v390 = vld [vmem:[%s1 + $0x8b0] sm:$0xff]
  %v391 = vld [vmem:[%s1 + $0x8b8] sm:$0xff]
  %v392 = vld [vmem:[%s1 + $0x8c0] sm:$0xff]
  %v393 = vld [vmem:[%s1 + $0x8c8] sm:$0xff]
  %v394 = vld [vmem:[%s1 + $0x8d0] sm:$0xff]
  %v395 = vld [vmem:[%s1 + $0x8d8] sm:$0xff]
  %v396 = vld [vmem:[%s1 + $0x8e0] sm:$0xff]
  %v397 = vld [vmem:[%s1 + $0x8e8] sm:$0xff]
  %v398 = vld [vmem:[%s1 + $0x8f0] sm:$0xff]
  %v399 = vld [vmem:[%s1 + $0x8f8] sm:$0xff]
  %v400 = vld [vmem:[%s1 + $0x900] sm:$0xff]
  %v401 = vld [vmem:[%s1 + $0x908] sm:$0xff]
  %v402 = vld [vmem:[%s1 + $0x910] sm:$0xff]
  %v403 = vld [vmem:[%s1 + $0x918] sm:$0xff]
  %v404 = vld [vmem:[%s1 + $0x920] sm:$0xff]
  %v405 = vld [vmem:[%s1 + $0x928] sm:$0xff]
  %v406 = vld [vmem:[%s1 + $0x930] sm:$0xff]
  %v407 = vld [vmem:[%s1 + $0x938] sm:$0xff]
  %v408 = vld [vmem:[%s1 + $0x940] sm:$0xff]
  %v409 = vld [vmem:[%s1 + $0x948] sm:$0xff]
  %v410 = vld [vmem:[%s1 + $0x950] sm:$0xff]
  %v411 = vld [vmem:[%s1 + $0x958] sm:$0xff]
  %v412 = vld [vmem:[%s1 + $0x960] sm:$0xff]
  %v413 = vld [vmem:[%s1 + $0x968] sm:$0xff]
  %v414 = vld [vmem:[%s1 + $0x970] sm:$0xff]
  %v415 = vld [vmem:[%s1 + $0x978] sm:$0xff]
  %v416 = vld [vmem:[%s1 + $0x980] sm:$0xff]
  %v417 = vld [vmem:[%s1 + $0x988] sm:$0xff]
  %v418 = vld [vmem:[%s1 + $0x990] sm:$0xff]
  %v419 = vld [vmem:[%s1 + $0x998] sm:$0xff]
  %v420 = vld [vmem:[%s1 + $0x9a0] sm:$0xff]
  %v421 = vld [vmem:[%s1 + $0x9a8] sm:$0xff]
  %v422 = vld [vmem:[%s1 + $0x9b0] sm:$0xff]
  %v423 = vld [vmem:[%s1 + $0x9b8] sm:$0xff]
  %v424 = vld [vmem:[%s1 + $0x9c0] sm:$0xff]
  %v425 = vld [vmem:[%s1 + $0x9c8] sm:$0xff]
  %v426 = vld [vmem:[%s1 + $0x9d0] sm:$0xff]
  %v427 = vld [vmem:[%s1 + $0x9d8] sm:$0xff]
  %v428 = vld [vmem:[%s1 + $0x9e0] sm:$0xff]
  %v429 = vld [vmem:[%s1 + $0x9e8] sm:$0xff]
  %v430 = vld [vmem:[%s1 + $0x9f0] sm:$0xff]
  %v431 = vld [vmem:[%s1 + $0x9f8] sm:$0xff]
  %v432 = vld [vmem:[%s1 + $0xa00] sm:$0xff]
  %v433 = vld [vmem:[%s1 + $0xa08] sm:$0xff]
  %v434 = vld [vmem:[%s1 + $0xa10] sm:$0xff]
  %v435 = vld [vmem:[%s1 + $0xa18] sm:$0xff]
  %v436 = vld [vmem:[%s1 + $0xa20] sm:$0xff]
  %v437 = vld [vmem:[%s1 + $0xa28] sm:$0xff]
  %v438 = vld [vmem:[%s1 + $0xa30] sm:$0xff]
  %v439 = vld [vmem:[%s1 + $0xa38] sm:$0xff]
  %v440 = vld [vmem:[%s1 + $0xa40] sm:$0xff]
  %v441 = vld [vmem:[%s1 + $0xa48] sm:$0xff]
  %v442 = vld [vmem:[%s1 + $0xa50] sm:$0xff]
  %v443 = vld [vmem:[%s1 + $0xa58] sm:$0xff]
  %v444 = vld [vmem:[%s1 + $0xa60] sm:$0xff]
  %v445 = vld [vmem:[%s1 + $0xa68] sm:$0xff]
  %v446 = vld [vmem:[%s1 + $0xa70] sm:$0xff]
  %v447 = vld [vmem:[%s1 + $0xa78] sm:$0xff]
  %v448 = vld [vmem:[%s1 + $0xa80] sm:$0xff]
  %v449 = vld [vmem:[%s1 + $0xa88] sm:$0xff]
  %v450 = vld [vmem:[%s1 + $0xa90] sm:$0xff]
  %v451 = vld [vmem:[%s1 + $0xa98] sm:$0xff]
  %v452 = vld [vmem:[%s1 + $0xaa0] sm:$0xff]
  %v453 = vld [vmem:[%s1 + $0xaa8] sm:$0xff]
  %v454 = vld [vmem:[%s1 + $0xab0] sm:$0xff]
  %v455 = vld [vmem:[%s1 + $0xab8] sm:$0xff]
  %v456 = vld [vmem:[%s1 + $0xac0] sm:$0xff]
  %v457 = vld [vmem:[%s1 + $0xac8] sm:$0xff]
  %v458 = vld [vmem:[%s1 + $0xad0] sm:$0xff]
  %v459 = vld [vmem:[%s1 + $0xad8] sm:$0xff]
  %v460 = vld [vmem:[%s1 + $0xae0] sm:$0xff]
  %v461 = vld [vmem:[%s1 + $0xae8] sm:$0xff]
  %v462 = vld [vmem:[%s1 + $0xaf0] sm:$0xff]
  %v463 = vld [vmem:[%s1 + $0xaf8] sm:$0xff]
  %v464 = vld [vmem:[%s1 + $0xb00] sm:$0xff]
  %v465 = vld [vmem:[%s1 + $0xb08] sm:$0xff]
  %v466 = vld [vmem:[%s1 + $0xb10] sm:$0xff]
  %v467 = vld [vmem:[%s1 + $0xb18] sm:$0xff]
  %v468 = vld [vmem:[%s1 + $0xb20] sm:$0xff]
  %v469 = vld [vmem:[%s1 + $0xb28] sm:$0xff]
  %v470 = vld [vmem:[%s1 + $0xb30] sm:$0xff]
  %v471 = vld [vmem:[%s1 + $0xb38] sm:$0xff]
  %v472 = vld [vmem:[%s1 + $0xb40] sm:$0xff]
  %v473 = vld [vmem:[%s1 + $0xb48] sm:$0xff]
  %v474 = vld [vmem:[%s1 + $0xb50] sm:$0xff]
  %v475 = vld [vmem:[%s1 + $0xb58] sm:$0xff]
  %v476 = vld [vmem:[%s1 + $0xb60] sm:$0xff]
  %v477 = vld [vmem:[%s1 + $0xb68] sm:$0xff]
  %v478 = vld [vmem:[%s1 + $0xb70] sm:$0xff]
  %v479 = vld [vmem:[%s1 + $0xb78] sm:$0xff]
  %v480 = vld [vmem:[%s1 + $0xb80] sm:$0xff]
  %v481 = vld [vmem:[%s1 + $0xb88] sm:$0xff]
  %v482 = vld [vmem:[%s1 + $0xb90] sm:$0xff]
  %v483 = vld [vmem:[%s1 + $0xb98] sm:$0xff]
  %v484 = vld [vmem:[%s1 + $0xba0] sm:$0xff]
  %v485 = vld [vmem:[%s1 + $0xba8] sm:$0xff]
  %v486 = vld [vmem:[%s1 + $0xbb0] sm:$0xff]
  %v487 = vld [vmem:[%s1 + $0xbb8] sm:$0xff]
  %v488 = vld [vmem:[%s1 + $0xbc0] sm:$0xff]
  %v489 = vld [vmem:[%s1 + $0xbc8] sm:$0xff]
  %v490 = vld [vmem:[%s1 + $0xbd0] sm:$0xff]
  %v491 = vld [vmem:[%s1 + $0xbd8] sm:$0xff]
  %v492 = vld [vmem:[%s1 + $0xbe0] sm:$0xff]
  %v493 = vld [vmem:[%s1 + $0xbe8] sm:$0xff]
  %v494 = vld [vmem:[%s1 + $0xbf0] sm:$0xff]
  %v495 = vld [vmem:[%s1 + $0xbf8] sm:$0xff]
  %v496 = vld [vmem:[%s1 + $0xc00] sm:$0xff]
  %v497 = vld [vmem:[%s1 + $0xc08] sm:$0xff]
  %v498 = vld [vmem:[%s1 + $0xc10] sm:$0xff]
  %v499 = vld [vmem:[%s1 + $0xc18] sm:$0xff]
  %v500 = vld [vmem:[%s1 + $0xc20] sm:$0xff]
  %v501 = vld [vmem:[%s1 + $0xc28] sm:$0xff]
  %v502 = vld [vmem:[%s1 + $0xc30] sm:$0xff]
  %v503 = vld [vmem:[%s1 + $0xc38] sm:$0xff]
  %v504 = vld [vmem:[%s1 + $0xc40] sm:$0xff]
  %v505 = vld [vmem:[%s1 + $0xc48] sm:$0xff]
  %v506 = vld [vmem:[%s1 + $0xc50] sm:$0xff]
  %v507 = vld [vmem:[%s1 + $0xc58] sm:$0xff]
  %v508 = vld [vmem:[%s1 + $0xc60] sm:$0xff]
  %v509 = vld [vmem:[%s1 + $0xc68] sm:$0xff]
  %v510 = vld [vmem:[%s1 + $0xc70] sm:$0xff]
  %v511 = vld [vmem:[%s1 + $0xc78] sm:$0xff]
  %v512 = vld [vmem:[%s1 + $0xc80] sm:$0xff]
  %v513 = vld [vmem:[%s1 + $0xc88] sm:$0xff]
  %v514 = vld [vmem:[%s1 + $0xc90] sm:$0xff]
  %v515 = vld [vmem:[%s1 + $0xc98] sm:$0xff]
  %v516 = vld [vmem:[%s1 + $0xca0] sm:$0xff]
  %v517 = vld [vmem:[%s1 + $0xca8] sm:$0xff]
  %v518 = vld [vmem:[%s1 + $0xcb0] sm:$0xff]
  %v519 = vld [vmem:[%s1 + $0xcb8] sm:$0xff]
  %v520 = vld [vmem:[%s1 + $0xcc0] sm:$0xff]
  %v521 = vld [vmem:[%s1 + $0xcc8] sm:$0xff]
  %v522 = vld [vmem:[%s1 + $0xcd0] sm:$0xff]
  %v523 = vld [vmem:[%s1 + $0xcd8] sm:$0xff]
  %v524 = vld [vmem:[%s1 + $0xce0] sm:$0xff]
  %v525 = vld [vmem:[%s1 + $0xce8] sm:$0xff]
  %v526 = vld [vmem:[%s1 + $0xcf0] sm:$0xff]
  %v527 = vld [vmem:[%s1 + $0xcf8] sm:$0xff]
  %v528 = vld [vmem:[%s1 + $0xd00] sm:$0xff]
  %v529 = vld [vmem:[%s1 + $0xd08] sm:$0xff]
  %v530 = vld [vmem:[%s1 + $0xd10] sm:$0xff]
  %v531 = vld [vmem:[%s1 + $0xd18] sm:$0xff]
  %v532 = vld [vmem:[%s1 + $0xd20] sm:$0xff]
  %v533 = vld [vmem:[%s1 + $0xd28] sm:$0xff]
  %v534 = vld [vmem:[%s1 + $0xd30] sm:$0xff]
  %v535 = vld [vmem:[%s1 + $0xd38] sm:$0xff]
  %v536 = vld [vmem:[%s1 + $0xd40] sm:$0xff]
  %v537 = vld [vmem:[%s1 + $0xd48] sm:$0xff]
  %v538 = vld [vmem:[%s1 + $0xd50] sm:$0xff]
  %v539 = vld [vmem:[%s1 + $0xd58] sm:$0xff]
  %v540 = vld [vmem:[%s1 + $0xd60] sm:$0xff]
  %v541 = vld [vmem:[%s1 + $0xd68] sm:$0xff]
  %v542 = vld [vmem:[%s1 + $0xd70] sm:$0xff]
  %v543 = vld [vmem:[%s1 + $0xd78] sm:$0xff]
  %v544 = vld [vmem:[%s1 + $0xd80] sm:$0xff]
  %v545 = vld [vmem:[%s1 + $0xd88] sm:$0xff]
  %v546 = vld [vmem:[%s1 + $0xd90] sm:$0xff]
  %v547 = vld [vmem:[%s1 + $0xd98] sm:$0xff]
  %v548 = vld [vmem:[%s1 + $0xda0] sm:$0xff]
  %v549 = vld [vmem:[%s1 + $0xda8] sm:$0xff]
  %v550 = vld [vmem:[%s1 + $0xdb0] sm:$0xff]
  %v551 = vld [vmem:[%s1 + $0xdb8] sm:$0xff]
  %v552 = vld [vmem:[%s1 + $0xdc0] sm:$0xff]
  %v553 = vld [vmem:[%s1 + $0xdc8] sm:$0xff]
  %v554 = vld [vmem:[%s1 + $0xdd0] sm:$0xff]
  %v555 = vld [vmem:[%s1 + $0xdd8] sm:$0xff]
  %v556 = vld [vmem:[%s1 + $0xde0] sm:$0xff]
  %v557 = vld [vmem:[%s1 + $0xde8] sm:$0xff]
  %v558 = vld [vmem:[%s1 + $0xdf0] sm:$0xff]
  %v559 = vld [vmem:[%s1 + $0xdf8] sm:$0xff]
  %v560 = vld [vmem:[%s1 + $0xe00] sm:$0xff]
  %v561 = vld [vmem:[%s1 + $0xe08] sm:$0xff]
  %v562 = vld [vmem:[%s1 + $0xe10] sm:$0xff]
  %v563 = vld [vmem:[%s1 + $0xe18] sm:$0xff]
  %v564 = vld [vmem:[%s1 + $0xe20] sm:$0xff]
  %v565 = vld [vmem:[%s1 + $0xe28] sm:$0xff]
  %v566 = vld [vmem:[%s1 + $0xe30] sm:$0xff]
  %v567 = vld [vmem:[%s1 + $0xe38] sm:$0xff]
  %v568 = vld [vmem:[%s1 + $0xe40] sm:$0xff]
  %v569 = vld [vmem:[%s1 + $0xe48] sm:$0xff]
  %v570 = vld [vmem:[%s1 + $0xe50] sm:$0xff]
  %v571 = vld [vmem:[%s1 + $0xe58] sm:$0xff]
  %v572 = vld [vmem:[%s1 + $0xe60] sm:$0xff]
  %v573 = vld [vmem:[%s1 + $0xe68] sm:$0xff]
  %v574 = vld [vmem:[%s1 + $0xe70] sm:$0xff]
  %v575 = vld [vmem:[%s1 + $0xe78] sm:$0xff]
  %v576 = vld [vmem:[%s1 + $0xe80] sm:$0xff]
  %v577 = vld [vmem:[%s1 + $0xe88] sm:$0xff]
  %v578 = vld [vmem:[%s1 + $0xe90] sm:$0xff]
  %v579 = vld [vmem:[%s1 + $0xe98] sm:$0xff]
  %v580 = vld [vmem:[%s1 + $0xea0] sm:$0xff]
  %v581 = vld [vmem:[%s1 + $0xea8] sm:$0xff]
  %v582 = vld [vmem:[%s1 + $0xeb0] sm:$0xff]
  %v583 = vld [vmem:[%s1 + $0xeb8] sm:$0xff]
  %v584 = vld [vmem:[%s1 + $0xec0] sm:$0xff]
  %v585 = vld [vmem:[%s1 + $0xec8] sm:$0xff]
  %v586 = vld [vmem:[%s1 + $0xed0] sm:$0xff]
  %v587 = vld [vmem:[%s1 + $0xed8] sm:$0xff]
  %v588 = vld [vmem:[%s1 + $0xee0] sm:$0xff]
  %v589 = vld [vmem:[%s1 + $0xee8] sm:$0xff]
  %v590 = vld [vmem:[%s1 + $0xef0] sm:$0xff]
  %v591 = vld [vmem:[%s1 + $0xef8] sm:$0xff]
  %v592 = vld [vmem:[%s1 + $0xf00] sm:$0xff]
  %v593 = vld [vmem:[%s1 + $0xf08] sm:$0xff]
  %v594 = vld [vmem:[%s1 + $0xf10] sm:$0xff]
  %v595 = vld [vmem:[%s1 + $0xf18] sm:$0xff]
  %v596 = vld [vmem:[%s1 + $0xf20] sm:$0xff]
  %v597 = vld [vmem:[%s1 + $0xf28] sm:$0xff]
  %v598 = vld [vmem:[%s1 + $0xf30] sm:$0xff]
  %v599 = vld [vmem:[%s1 + $0xf38] sm:$0xff]
  %v600 = vld [vmem:[%s1 + $0xf40] sm:$0xff]
  %v601 = vld [vmem:[%s1 + $0xf48] sm:$0xff]
  %v602 = vld [vmem:[%s1 + $0xf50] sm:$0xff]
  %v603 = vld [vmem:[%s1 + $0xf58] sm:$0xff]
  %v604 = vld [vmem:[%s1 + $0xf60] sm:$0xff]
  %v605 = vld [vmem:[%s1 + $0xf68] sm:$0xff]
  %v606 = vld [vmem:[%s1 + $0xf70] sm:$0xff]
  %v607 = vld [vmem:[%s1 + $0xf78] sm:$0xff]
  %v608 = vld [vmem:[%s1 + $0xf80] sm:$0xff]
  %v609 = vld [vmem:[%s1 + $0xf88] sm:$0xff]
  %v610 = vld [vmem:[%s1 + $0xf90] sm:$0xff]
  %v611 = vld [vmem:[%s1 + $0xf98] sm:$0xff]
  %v612 = vld [vmem:[%s1 + $0xfa0] sm:$0xff]
  %v613 = vld [vmem:[%s1 + $0xfa8] sm:$0xff]
  %v614 = vld [vmem:[%s1 + $0xfb0] sm:$0xff]
  %v615 = vld [vmem:[%s1 + $0xfb8] sm:$0xff]
  %v616 = vld [vmem:[%s1 + $0xfc0] sm:$0xff]
  %v617 = vld [vmem:[%s1 + $0xfc8] sm:$0xff]
  %v618 = vld [vmem:[%s1 + $0xfd0] sm:$0xff]
  %v619 = vld [vmem:[%s1 + $0xfd8] sm:$0xff]
  %v620 = vld [vmem:[%s1 + $0xfe0] sm:$0xff]
  %v621 = vld [vmem:[%s1 + $0xfe8] sm:$0xff]
  %v622 = vld [vmem:[%s1 + $0xff0] sm:$0xff]
  %v623 = vld [vmem:[%s1 + $0xff8] sm:$0xff]
  %v624 = vld [vmem:[%s1 + $0x1000] sm:$0xff]
  %v625 = vld [vmem:[%s1 + $0x1008] sm:$0xff]
  %v626 = vld [vmem:[%s1 + $0x1010] sm:$0xff]
  %v627 = vld [vmem:[%s1 + $0x1018] sm:$0xff]
  %v628 = vld [vmem:[%s1 + $0x1020] sm:$0xff]
  %v629 = vld [vmem:[%s1 + $0x1028] sm:$0xff]
  %v630 = vld [vmem:[%s1 + $0x1030] sm:$0xff]
  %v631 = vld [vmem:[%s1 + $0x1038] sm:$0xff]
  %v632 = vld [vmem:[%s1 + $0x1040] sm:$0xff]
  %v633 = vld [vmem:[%s1 + $0x1048] sm:$0xff]
  %v634 = vld [vmem:[%s1 + $0x1050] sm:$0xff]
  %v635 = vld [vmem:[%s1 + $0x1058] sm:$0xff]
  %v636 = vld [vmem:[%s1 + $0x1060] sm:$0xff]
  %v637 = vld [vmem:[%s1 + $0x1068] sm:$0xff]
  %v638 = vld [vmem:[%s1 + $0x1070] sm:$0xff]
  %v639 = vld [vmem:[%s1 + $0x1078] sm:$0xff]
  %v640 = vld [vmem:[%s1 + $0x1080] sm:$0xff]
  %v641 = vld [vmem:[%s1 + $0x1088] sm:$0xff]
  %v642 = vld [vmem:[%s1 + $0x1090] sm:$0xff]
  %v643 = vld [vmem:[%s1 + $0x1098] sm:$0xff]
  %v644 = vld [vmem:[%s1 + $0x10a0] sm:$0xff]
  %v645 = vld [vmem:[%s1 + $0x10a8] sm:$0xff]
  %v646 = vld [vmem:[%s1 + $0x10b0] sm:$0xff]
  %v647 = vld [vmem:[%s1 + $0x10b8] sm:$0xff]
  %v648 = vld [vmem:[%s1 + $0x10c0] sm:$0xff]
  %v649 = vld [vmem:[%s1 + $0x10c8] sm:$0xff]
  %v650 = vld [vmem:[%s1 + $0x10d0] sm:$0xff]
  %v651 = vld [vmem:[%s1 + $0x10d8] sm:$0xff]
  %v652 = vld [vmem:[%s1 + $0x10e0] sm:$0xff]
  %v653 = vld [vmem:[%s1 + $0x10e8] sm:$0xff]
  %v654 = vld [vmem:[%s1 + $0x10f0] sm:$0xff]
  %v655 = vld [vmem:[%s1 + $0x10f8] sm:$0xff]
  %v656 = vld [vmem:[%s1 + $0x1100] sm:$0xff]
  %v657 = vld [vmem:[%s1 + $0x1108] sm:$0xff]
  %v658 = vld [vmem:[%s1 + $0x1110] sm:$0xff]
  %v659 = vld [vmem:[%s1 + $0x1118] sm:$0xff]
  %v660 = vld [vmem:[%s1 + $0x1120] sm:$0xff]
  %v661 = vld [vmem:[%s1 + $0x1128] sm:$0xff]
  %v662 = vld [vmem:[%s1 + $0x1130] sm:$0xff]
  %v663 = vld [vmem:[%s1 + $0x1138] sm:$0xff]
  %v664 = vld [vmem:[%s1 + $0x1140] sm:$0xff]
  %v665 = vld [vmem:[%s1 + $0x1148] sm:$0xff]
  %v666 = vld [vmem:[%s1 + $0x1150] sm:$0xff]
  %v667 = vld [vmem:[%s1 + $0x1158] sm:$0xff]
  %v668 = vld [vmem:[%s1 + $0x1160] sm:$0xff]
  %v669 = vld [vmem:[%s1 + $0x1168] sm:$0xff]
  %v670 = vld [vmem:[%s1 + $0x1170] sm:$0xff]
  %v671 = vld [vmem:[%s1 + $0x1178] sm:$0xff]
  %v672 = vld [vmem:[%s1 + $0x1180] sm:$0xff]
  %v673 = vld [vmem:[%s1 + $0x1188] sm:$0xff]
  %v674 = vld [vmem:[%s1 + $0x1190] sm:$0xff]
  %v675 = vld [vmem:[%s1 + $0x1198] sm:$0xff]
  %v676 = vld [vmem:[%s1 + $0x11a0] sm:$0xff]
  %v677 = vld [vmem:[%s1 + $0x11a8] sm:$0xff]
  %v678 = vld [vmem:[%s1 + $0x11b0] sm:$0xff]
  %v679 = vld [vmem:[%s1 + $0x11b8] sm:$0xff]
  %v680 = vld [vmem:[%s1 + $0x11c0] sm:$0xff]
  %v681 = vld [vmem:[%s1 + $0x11c8] sm:$0xff]
  %v682 = vld [vmem:[%s1 + $0x11d0] sm:$0xff]
  %v683 = vld [vmem:[%s1 + $0x11d8] sm:$0xff]
  %v684 = vld [vmem:[%s1 + $0x11e0] sm:$0xff]
  %v685 = vld [vmem:[%s1 + $0x11e8] sm:$0xff]
  %v686 = vld [vmem:[%s1 + $0x11f0] sm:$0xff]
  %v687 = vld [vmem:[%s1 + $0x11f8] sm:$0xff]
  %v688 = vld [vmem:[%s1 + $0x1200] sm:$0xff]
  %v689 = vld [vmem:[%s1 + $0x1208] sm:$0xff]
  %v690 = vld [vmem:[%s1 + $0x1210] sm:$0xff]
  %v691 = vld [vmem:[%s1 + $0x1218] sm:$0xff]
  %v692 = vld [vmem:[%s1 + $0x1220] sm:$0xff]
  %v693 = vld [vmem:[%s1 + $0x1228] sm:$0xff]
  %v694 = vld [vmem:[%s1 + $0x1230] sm:$0xff]
  %v695 = vld [vmem:[%s1 + $0x1238] sm:$0xff]
  %v696 = vld [vmem:[%s1 + $0x1240] sm:$0xff]
  %v697 = vld [vmem:[%s1 + $0x1248] sm:$0xff]
  %v698 = vld [vmem:[%s1 + $0x1250] sm:$0xff]
  %v699 = vld [vmem:[%s1 + $0x1258] sm:$0xff]
  %v700 = vld [vmem:[%s1 + $0x1260] sm:$0xff]
  %v701 = vld [vmem:[%s1 + $0x1268] sm:$0xff]
  %v702 = vld [vmem:[%s1 + $0x1270] sm:$0xff]
  %v703 = vld [vmem:[%s1 + $0x1278] sm:$0xff]
  %v704 = vld [vmem:[%s1 + $0x1280] sm:$0xff]
  %v705 = vld [vmem:[%s1 + $0x1288] sm:$0xff]
  %v706 = vld [vmem:[%s1 + $0x1290] sm:$0xff]
  %v707 = vld [vmem:[%s1 + $0x1298] sm:$0xff]
  %v708 = vld [vmem:[%s1 + $0x12a0] sm:$0xff]
  %v709 = vld [vmem:[%s1 + $0x12a8] sm:$0xff]
  %v710 = vld [vmem:[%s1 + $0x12b0] sm:$0xff]
  %v711 = vld [vmem:[%s1 + $0x12b8] sm:$0xff]
  %v712 = vld [vmem:[%s1 + $0x12c0] sm:$0xff]
  %v713 = vld [vmem:[%s1 + $0x12c8] sm:$0xff]
  %v714 = vld [vmem:[%s1 + $0x12d0] sm:$0xff]
  %v715 = vld [vmem:[%s1 + $0x12d8] sm:$0xff]
  %v716 = vld [vmem:[%s1 + $0x12e0] sm:$0xff]
  %v717 = vld [vmem:[%s1 + $0x12e8] sm:$0xff]
  %v718 = vld [vmem:[%s1 + $0x12f0] sm:$0xff]
  %v719 = vld [vmem:[%s1 + $0x12f8] sm:$0xff]
  %v720 = vld [vmem:[%s1 + $0x1300] sm:$0xff]
  %v721 = vld [vmem:[%s1 + $0x1308] sm:$0xff]
  %v722 = vld [vmem:[%s1 + $0x1310] sm:$0xff]
  %v723 = vld [vmem:[%s1 + $0x1318] sm:$0xff]
  %v724 = vld [vmem:[%s1 + $0x1320] sm:$0xff]
  %v725 = vld [vmem:[%s1 + $0x1328] sm:$0xff]
  %v726 = vld [vmem:[%s1 + $0x1330] sm:$0xff]
  %v727 = vld [vmem:[%s1 + $0x1338] sm:$0xff]
  %v728 = vld [vmem:[%s1 + $0x1340] sm:$0xff]
  %v729 = vld [vmem:[%s1 + $0x1348] sm:$0xff]
  %v730 = vld [vmem:[%s1 + $0x1350] sm:$0xff]
  %v731 = vld [vmem:[%s1 + $0x1358] sm:$0xff]
  %v732 = vld [vmem:[%s1 + $0x1360] sm:$0xff]
  %v733 = vld [vmem:[%s1 + $0x1368] sm:$0xff]
  %v734 = vld [vmem:[%s1 + $0x1370] sm:$0xff]
  %v735 = vld [vmem:[%s1 + $0x1378] sm:$0xff]
  %v736 = vld [vmem:[%s1 + $0x1380] sm:$0xff]
  %v737 = vld [vmem:[%s1 + $0x1388] sm:$0xff]
  %v738 = vld [vmem:[%s1 + $0x1390] sm:$0xff]
  %v739 = vld [vmem:[%s1 + $0x1398] sm:$0xff]
  %v740 = vld [vmem:[%s1 + $0x13a0] sm:$0xff]
  %v741 = vld [vmem:[%s1 + $0x13a8] sm:$0xff]
  %v742 = vld [vmem:[%s1 + $0x13b0] sm:$0xff]
  %v743 = vld [vmem:[%s1 + $0x13b8] sm:$0xff]
  %v744 = vld [vmem:[%s1 + $0x13c0] sm:$0xff]
  %v745 = vld [vmem:[%s1 + $0x13c8] sm:$0xff]
  %v746 = vld [vmem:[%s1 + $0x13d0] sm:$0xff]
  %v747 = vld [vmem:[%s1 + $0x13d8] sm:$0xff]
  %v748 = vld [vmem:[%s1 + $0x13e0] sm:$0xff]
  %v749 = vld [vmem:[%s1 + $0x13e8] sm:$0xff]
  %v750 = vld [vmem:[%s1 + $0x13f0] sm:$0xff]
  %v751 = vld [vmem:[%s1 + $0x13f8] sm:$0xff]
  %v752 = vld [vmem:[%s1 + $0x1400] sm:$0xff]
  %v753 = vld [vmem:[%s1 + $0x1408] sm:$0xff]
  %v754 = vld [vmem:[%s1 + $0x1410] sm:$0xff]
  %v755 = vld [vmem:[%s1 + $0x1418] sm:$0xff]
  %v756 = vld [vmem:[%s1 + $0x1420] sm:$0xff]
  %v757 = vld [vmem:[%s1 + $0x1428] sm:$0xff]
  %v758 = vld [vmem:[%s1 + $0x1430] sm:$0xff]
  %v759 = vld [vmem:[%s1 + $0x1438] sm:$0xff]
  %v760 = vld [vmem:[%s1 + $0x1440] sm:$0xff]
  %v761 = vld [vmem:[%s1 + $0x1448] sm:$0xff]
  %v762 = vld [vmem:[%s1 + $0x1450] sm:$0xff]
  %v763 = vld [vmem:[%s1 + $0x1458] sm:$0xff]
  %v764 = vld [vmem:[%s1 + $0x1460] sm:$0xff]
  %v765 = vld [vmem:[%s1 + $0x1468] sm:$0xff]
  %v766 = vld [vmem:[%s1 + $0x1470] sm:$0xff]
  %v767 = vld [vmem:[%s1 + $0x1478] sm:$0xff]
  %v768 = vld [vmem:[%s1 + $0x1480] sm:$0xff]
  %v769 = vld [vmem:[%s1 + $0x1488] sm:$0xff]
  %v770 = vld [vmem:[%s1 + $0x1490] sm:$0xff]
  %v771 = vld [vmem:[%s1 + $0x1498] sm:$0xff]
  %v772 = vld [vmem:[%s1 + $0x14a0] sm:$0xff]
  %v773 = vld [vmem:[%s1 + $0x14a8] sm:$0xff]
  %v774 = vld [vmem:[%s1 + $0x14b0] sm:$0xff]
  %v775 = vld [vmem:[%s1 + $0x14b8] sm:$0xff]
  %v776 = vld [vmem:[%s1 + $0x14c0] sm:$0xff]
  %v777 = vld [vmem:[%s1 + $0x14c8] sm:$0xff]
  %v778 = vld [vmem:[%s1 + $0x14d0] sm:$0xff]
  %v779 = vld [vmem:[%s1 + $0x14d8] sm:$0xff]
  %v780 = vld [vmem:[%s1 + $0x14e0] sm:$0xff]
  %v781 = vld [vmem:[%s1 + $0x14e8] sm:$0xff]
  %v782 = vld [vmem:[%s1 + $0x14f0] sm:$0xff]
  %v783 = vld [vmem:[%s1 + $0x14f8] sm:$0xff]
  %v784 = vld [vmem:[%s1 + $0x1500] sm:$0xff]
  %v785 = vld [vmem:[%s1 + $0x1508] sm:$0xff]
  %v786 = vld [vmem:[%s1 + $0x1510] sm:$0xff]
  %v787 = vld [vmem:[%s1 + $0x1518] sm:$0xff]
  %v788 = vld [vmem:[%s1 + $0x1520] sm:$0xff]
  %v789 = vld [vmem:[%s1 + $0x1528] sm:$0xff]
  %v790 = vld [vmem:[%s1 + $0x1530] sm:$0xff]
  %v791 = vld [vmem:[%s1 + $0x1538] sm:$0xff]
  %v792 = vld [vmem:[%s1 + $0x1540] sm:$0xff]
  %v793 = vld [vmem:[%s1 + $0x1548] sm:$0xff]
  %v794 = vld [vmem:[%s1 + $0x1550] sm:$0xff]
  %v795 = vld [vmem:[%s1 + $0x1558] sm:$0xff]
  %v796 = vld [vmem:[%s1 + $0x1560] sm:$0xff]
  %v797 = vld [vmem:[%s1 + $0x1568] sm:$0xff]
  %v798 = vld [vmem:[%s1 + $0x1570] sm:$0xff]
  %v799 = vld [vmem:[%s1 + $0x1578] sm:$0xff]
  %v800 = vld [vmem:[%s1 + $0x1580] sm:$0xff]
  %v801 = vld [vmem:[%s1 + $0x1588] sm:$0xff]
  %v802 = vld [vmem:[%s1 + $0x1590] sm:$0xff]
  %v803 = vld [vmem:[%s1 + $0x1598] sm:$0xff]
  %v804 = vld [vmem:[%s1 + $0x15a0] sm:$0xff]
  %v805 = vld [vmem:[%s1 + $0x15a8] sm:$0xff]
  %v806 = vld [vmem:[%s1 + $0x15b0] sm:$0xff]
  %v807 = vld [vmem:[%s1 + $0x15b8] sm:$0xff]
  %v808 = vld [vmem:[%s1 + $0x15c0] sm:$0xff]
  %v809 = vld [vmem:[%s1 + $0x15c8] sm:$0xff]
  %v810 = vld [vmem:[%s1 + $0x15d0] sm:$0xff]
  %v811 = vld [vmem:[%s1 + $0x15d8] sm:$0xff]
  %v812 = vld [vmem:[%s1 + $0x15e0] sm:$0xff]
  %v813 = vld [vmem:[%s1 + $0x15e8] sm:$0xff]
  %v814 = vld [vmem:[%s1 + $0x15f0] sm:$0xff]
  %v815 = vld [vmem:[%s1 + $0x15f8] sm:$0xff]
  %v816 = vld [vmem:[%s1 + $0x1600] sm:$0xff]
  %v817 = vld [vmem:[%s1 + $0x1608] sm:$0xff]
  %v818 = vld [vmem:[%s1 + $0x1610] sm:$0xff]
  %v819 = vld [vmem:[%s1 + $0x1618] sm:$0xff]
  %v820 = vld [vmem:[%s1 + $0x1620] sm:$0xff]
  %v821 = vld [vmem:[%s1 + $0x1628] sm:$0xff]
  %v822 = vld [vmem:[%s1 + $0x1630] sm:$0xff]
  %v823 = vld [vmem:[%s1 + $0x1638] sm:$0xff]
  %v824 = vld [vmem:[%s1 + $0x1640] sm:$0xff]
  %v825 = vld [vmem:[%s1 + $0x1648] sm:$0xff]
  %v826 = vld [vmem:[%s1 + $0x1650] sm:$0xff]
  %v827 = vld [vmem:[%s1 + $0x1658] sm:$0xff]
  %v828 = vld [vmem:[%s1 + $0x1660] sm:$0xff]
  %v829 = vld [vmem:[%s1 + $0x1668] sm:$0xff]
  %v830 = vld [vmem:[%s1 + $0x1670] sm:$0xff]
  %v831 = vld [vmem:[%s1 + $0x1678] sm:$0xff]
  %v832 = vld [vmem:[%s1 + $0x1680] sm:$0xff]
  %v833 = vld [vmem:[%s1 + $0x1688] sm:$0xff]
  %v834 = vld [vmem:[%s1 + $0x1690] sm:$0xff]
  %v835 = vld [vmem:[%s1 + $0x1698] sm:$0xff]
  %v836 = vld [vmem:[%s1 + $0x16a0] sm:$0xff]
  %v837 = vld [vmem:[%s1 + $0x16a8] sm:$0xff]
  %v838 = vld [vmem:[%s1 + $0x16b0] sm:$0xff]
  %v839 = vld [vmem:[%s1 + $0x16b8] sm:$0xff]
  %v840 = vld [vmem:[%s1 + $0x16c0] sm:$0xff]
  %v841 = vld [vmem:[%s1 + $0x16c8] sm:$0xff]
  %v842 = vld [vmem:[%s1 + $0x16d0] sm:$0xff]
  %v843 = vld [vmem:[%s1 + $0x16d8] sm:$0xff]
  %v844 = vld [vmem:[%s1 + $0x16e0] sm:$0xff]
  %v845 = vld [vmem:[%s1 + $0x16e8] sm:$0xff]
  %v846 = vld [vmem:[%s1 + $0x16f0] sm:$0xff]
  %v847 = vld [vmem:[%s1 + $0x16f8] sm:$0xff]
  %v848 = vld [vmem:[%s1 + $0x1700] sm:$0xff]
  %v849 = vld [vmem:[%s1 + $0x1708] sm:$0xff]
  %v850 = vld [vmem:[%s1 + $0x1710] sm:$0xff]
  %v851 = vld [vmem:[%s1 + $0x1718] sm:$0xff]
  %v852 = vld [vmem:[%s1 + $0x1720] sm:$0xff]
  %v853 = vld [vmem:[%s1 + $0x1728] sm:$0xff]
  %v854 = vld [vmem:[%s1 + $0x1730] sm:$0xff]
  %v855 = vld [vmem:[%s1 + $0x1738] sm:$0xff]
  %v856 = vld [vmem:[%s1 + $0x1740] sm:$0xff]
  %v857 = vld [vmem:[%s1 + $0x1748] sm:$0xff]
  %v858 = vld [vmem:[%s1 + $0x1750] sm:$0xff]
  %v859 = vld [vmem:[%s1 + $0x1758] sm:$0xff]
  %v860 = vld [vmem:[%s1 + $0x1760] sm:$0xff]
  %v861 = vld [vmem:[%s1 + $0x1768] sm:$0xff]
  %v862 = vld [vmem:[%s1 + $0x1770] sm:$0xff]
  %v863 = vld [vmem:[%s1 + $0x1778] sm:$0xff]
  %v864 = vld [vmem:[%s1 + $0x1780] sm:$0xff]
  %v865 = vld [vmem:[%s1 + $0x1788] sm:$0xff]
  %v866 = vld [vmem:[%s1 + $0x1790] sm:$0xff]
  %v867 = vld [vmem:[%s1 + $0x1798] sm:$0xff]
  %v868 = vld [vmem:[%s1 + $0x17a0] sm:$0xff]
  %v869 = vld [vmem:[%s1 + $0x17a8] sm:$0xff]
  %v870 = vld [vmem:[%s1 + $0x17b0] sm:$0xff]
  %v871 = vld [vmem:[%s1 + $0x17b8] sm:$0xff]
  %v872 = vld [vmem:[%s1 + $0x17c0] sm:$0xff]
  %v873 = vld [vmem:[%s1 + $0x17c8] sm:$0xff]
  %v874 = vld [vmem:[%s1 + $0x17d0] sm:$0xff]
  %v875 = vld [vmem:[%s1 + $0x17d8] sm:$0xff]
  %v876 = vld [vmem:[%s1 + $0x17e0] sm:$0xff]
  %v877 = vld [vmem:[%s1 + $0x17e8] sm:$0xff]
  %v878 = vld [vmem:[%s1 + $0x17f0] sm:$0xff]
  %v879 = vld [vmem:[%s1 + $0x17f8] sm:$0xff]
  %v880 = vld [vmem:[%s1 + $0x1800] sm:$0xff]
  %v881 = vld [vmem:[%s1 + $0x1808] sm:$0xff]
  %v882 = vld [vmem:[%s1 + $0x1810] sm:$0xff]
  %v883 = vld [vmem:[%s1 + $0x1818] sm:$0xff]
  %v884 = vld [vmem:[%s1 + $0x1820] sm:$0xff]
  %v885 = vld [vmem:[%s1 + $0x1828] sm:$0xff]
  %v886 = vld [vmem:[%s1 + $0x1830] sm:$0xff]
  %v887 = vld [vmem:[%s1 + $0x1838] sm:$0xff]
  %v888 = vld [vmem:[%s1 + $0x1840] sm:$0xff]
  %v889 = vld [vmem:[%s1 + $0x1848] sm:$0xff]
  %v890 = vld [vmem:[%s1 + $0x1850] sm:$0xff]
  %v891 = vld [vmem:[%s1 + $0x1858] sm:$0xff]
  %v892 = vld [vmem:[%s1 + $0x1860] sm:$0xff]
  %v893 = vld [vmem:[%s1 + $0x1868] sm:$0xff]
  %v894 = vld [vmem:[%s1 + $0x1870] sm:$0xff]
  %v895 = vld [vmem:[%s1 + $0x1878] sm:$0xff]
  %v896 = vld [vmem:[%s2] sm:$0x1]
  %v898 = vlaneseq
  %v899 = vshrl.u32 %v898, 7
  %v900 = vsub.s32 0, %v899
  %v901 = vrot.slane %v896, %v900
  %903 = vmatprep.subr.mxu0 0.0
  %904 = vmatpush1.msra.mxu0 %v127
  %905 = vmatprep.subr.mxu0 0.0
  %906 = vmatpush1.msra.mxu0 %v126
  %907 = vmatprep.subr.mxu0 0.0
  %908 = vmatpush1.msra.mxu0 %v125
  %909 = vmatprep.subr.mxu0 0.0
  %910 = vmatpush1.msra.mxu0 %v124
  %911 = vmatprep.subr.mxu0 0.0
  %912 = vmatpush1.msra.mxu0 %v123
  %913 = vmatprep.subr.mxu0 0.0
  %914 = vmatpush1.msra.mxu0 %v122
  %915 = vmatprep.subr.mxu0 0.0
  %916 = vmatpush1.msra.mxu0 %v121
  %917 = vmatprep.subr.mxu0 0.0
  %918 = vmatpush1.msra.mxu0 %v120
  %919 = vmatprep.subr.mxu0 0.0
  %920 = vmatpush1.msra.mxu0 %v119
  %921 = vmatprep.subr.mxu0 0.0
  %922 = vmatpush1.msra.mxu0 %v118
  %923 = vmatprep.subr.mxu0 0.0
  %924 = vmatpush1.msra.mxu0 %v117
  %925 = vmatprep.subr.mxu0 0.0
  %926 = vmatpush1.msra.mxu0 %v116
  %927 = vmatprep.subr.mxu0 0.0
  %928 = vmatpush1.msra.mxu0 %v115
  %929 = vmatprep.subr.mxu0 0.0
  %930 = vmatpush1.msra.mxu0 %v114
  %931 = vmatprep.subr.mxu0 0.0
  %932 = vmatpush1.msra.mxu0 %v113
  %933 = vmatprep.subr.mxu0 0.0
  %934 = vmatpush1.msra.mxu0 %v112
  %935 = vmatprep.subr.mxu0 0.0
  %936 = vmatpush2.msra.mxu0 %v143
  %937 = vmatprep.subr.mxu0 0.0
  %938 = vmatpush2.msra.mxu0 %v142
  %939 = vmatprep.subr.mxu0 0.0
  %940 = vmatpush2.msra.mxu0 %v141
  %941 = vmatprep.subr.mxu0 0.0
  %942 = vmatpush2.msra.mxu0 %v140
  %943 = vmatprep.subr.mxu0 0.0
  %944 = vmatpush2.msra.mxu0 %v139
  %945 = vmatprep.subr.mxu0 0.0
  %946 = vmatpush2.msra.mxu0 %v138
  %947 = vmatprep.subr.mxu0 0.0
  %948 = vmatpush2.msra.mxu0 %v137
  %949 = vmatprep.subr.mxu0 0.0
  %950 = vmatpush2.msra.mxu0 %v136
  %951 = vmatprep.subr.mxu0 0.0
  %952 = vmatpush2.msra.mxu0 %v135
  %953 = vmatprep.subr.mxu0 0.0
  %954 = vmatpush2.msra.mxu0 %v134
  %955 = vmatprep.subr.mxu0 0.0
  %956 = vmatpush2.msra.mxu0 %v133
  %957 = vmatprep.subr.mxu0 0.0
  %958 = vmatpush2.msra.mxu0 %v132
  %959 = vmatprep.subr.mxu0 0.0
  %960 = vmatpush2.msra.mxu0 %v131
  %961 = vmatprep.subr.mxu0 0.0
  %962 = vmatpush2.msra.mxu0 %v130
  %963 = vmatprep.subr.mxu0 0.0
  %964 = vmatpush2.msra.mxu0 %v129
  %965 = vmatprep.subr.mxu0 0.0
  %966 = vmatpush2.msra.mxu0 %v128
  %967 = vmatprep.mubr.f32.mxu0 %v15
  %968 = vmatmul.mubr.f32.gmra.mxu0 %v14
  %v969 = vpop.f32.mrf.mxu0
  %v970 = vadd.f32 %v901, %v969
  %v971 = vpop.f32.mrf.mxu0
  %972 = vmatprep.mubr.f32.mxu0 %v64
  %973 = vmatmul.mubr.f32.gmra.mxu0 %v63
  %v974 = vpop.f32.mrf.mxu0
  %v975 = vadd.f32 %v901, %v974
  %v976 = vpop.f32.mrf.mxu0
  %977 = vdwg.mxu0
  %978 = vmatprep.subr.mxu0 0.0
  %979 = vmatpush1.msra.mxu0 %v159
  %980 = vmatprep.subr.mxu0 0.0
  %981 = vmatpush1.msra.mxu0 %v158
  %982 = vmatprep.subr.mxu0 0.0
  %983 = vmatpush1.msra.mxu0 %v157
  %984 = vmatprep.subr.mxu0 0.0
  %985 = vmatpush1.msra.mxu0 %v156
  %986 = vmatprep.subr.mxu0 0.0
  %987 = vmatpush1.msra.mxu0 %v155
  %988 = vmatprep.subr.mxu0 0.0
  %989 = vmatpush1.msra.mxu0 %v154
  %990 = vmatprep.subr.mxu0 0.0
  %991 = vmatpush1.msra.mxu0 %v153
  %992 = vmatprep.subr.mxu0 0.0
  %993 = vmatpush1.msra.mxu0 %v152
  %994 = vmatprep.subr.mxu0 0.0
  %995 = vmatpush1.msra.mxu0 %v151
  %996 = vmatprep.subr.mxu0 0.0
  %997 = vmatpush1.msra.mxu0 %v150
  %998 = vmatprep.subr.mxu0 0.0
  %999 = vmatpush1.msra.mxu0 %v149
  %1000 = vmatprep.subr.mxu0 0.0
  %1001 = vmatpush1.msra.mxu0 %v148
  %1002 = vmatprep.subr.mxu0 0.0
  %1003 = vmatpush1.msra.mxu0 %v147
  %1004 = vmatprep.subr.mxu0 0.0
  %1005 = vmatpush1.msra.mxu0 %v146
  %1006 = vmatprep.subr.mxu0 0.0
  %1007 = vmatpush1.msra.mxu0 %v145
  %1008 = vmatprep.subr.mxu0 0.0
  %1009 = vmatpush1.msra.mxu0 %v144
  %1010 = vmatprep.subr.mxu0 0.0
  %1011 = vmatpush2.msra.mxu0 %v175
  %1012 = vmatprep.subr.mxu0 0.0
  %1013 = vmatpush2.msra.mxu0 %v174
  %1014 = vmatprep.subr.mxu0 0.0
  %1015 = vmatpush2.msra.mxu0 %v173
  %1016 = vmatprep.subr.mxu0 0.0
  %1017 = vmatpush2.msra.mxu0 %v172
  %1018 = vmatprep.subr.mxu0 0.0
  %1019 = vmatpush2.msra.mxu0 %v171
  %1020 = vmatprep.subr.mxu0 0.0
  %1021 = vmatpush2.msra.mxu0 %v170
  %1022 = vmatprep.subr.mxu0 0.0
  %1023 = vmatpush2.msra.mxu0 %v169
  %1024 = vmatprep.subr.mxu0 0.0
  %1025 = vmatpush2.msra.mxu0 %v168
  %1026 = vmatprep.subr.mxu0 0.0
  %1027 = vmatpush2.msra.mxu0 %v167
  %1028 = vmatprep.subr.mxu0 0.0
  %1029 = vmatpush2.msra.mxu0 %v166
  %1030 = vmatprep.subr.mxu0 0.0
  %1031 = vmatpush2.msra.mxu0 %v165
  %1032 = vmatprep.subr.mxu0 0.0
  %1033 = vmatpush2.msra.mxu0 %v164
  %1034 = vmatprep.subr.mxu0 0.0
  %1035 = vmatpush2.msra.mxu0 %v163
  %1036 = vmatprep.subr.mxu0 0.0
  %1037 = vmatpush2.msra.mxu0 %v162
  %1038 = vmatprep.subr.mxu0 0.0
  %1039 = vmatpush2.msra.mxu0 %v161
  %1040 = vmatprep.subr.mxu0 0.0
  %1041 = vmatpush2.msra.mxu0 %v160
  %1042 = vmatprep.mubr.f32.mxu0 %v17
  %1043 = vmatmul.mubr.f32.gmra.mxu0 %v16
  %v1044 = vpop.f32.mrf.mxu0
  %v1045 = vadd.f32 %v970, %v1044
  %v1046 = vpop.f32.mrf.mxu0
  %1047 = vmatprep.mubr.f32.mxu0 %v66
  %1048 = vmatmul.mubr.f32.gmra.mxu0 %v65
  %v1049 = vpop.f32.mrf.mxu0
  %v1050 = vadd.f32 %v975, %v1049
  %v1051 = vpop.f32.mrf.mxu0
  %1052 = vdwg.mxu0
  %1053 = vmatprep.subr.mxu0 0.0
  %1054 = vmatpush1.msra.mxu0 %v191
  %1055 = vmatprep.subr.mxu0 0.0
  %1056 = vmatpush1.msra.mxu0 %v190
  %1057 = vmatprep.subr.mxu0 0.0
  %1058 = vmatpush1.msra.mxu0 %v189
  %1059 = vmatprep.subr.mxu0 0.0
  %1060 = vmatpush1.msra.mxu0 %v188
  %1061 = vmatprep.subr.mxu0 0.0
  %1062 = vmatpush1.msra.mxu0 %v187
  %1063 = vmatprep.subr.mxu0 0.0
  %1064 = vmatpush1.msra.mxu0 %v186
  %1065 = vmatprep.subr.mxu0 0.0
  %1066 = vmatpush1.msra.mxu0 %v185
  %1067 = vmatprep.subr.mxu0 0.0
  %1068 = vmatpush1.msra.mxu0 %v184
  %1069 = vmatprep.subr.mxu0 0.0
  %1070 = vmatpush1.msra.mxu0 %v183
  %1071 = vmatprep.subr.mxu0 0.0
  %1072 = vmatpush1.msra.mxu0 %v182
  %1073 = vmatprep.subr.mxu0 0.0
  %1074 = vmatpush1.msra.mxu0 %v181
  %1075 = vmatprep.subr.mxu0 0.0
  %1076 = vmatpush1.msra.mxu0 %v180
  %1077 = vmatprep.subr.mxu0 0.0
  %1078 = vmatpush1.msra.mxu0 %v179
  %1079 = vmatprep.subr.mxu0 0.0
  %1080 = vmatpush1.msra.mxu0 %v178
  %1081 = vmatprep.subr.mxu0 0.0
  %1082 = vmatpush1.msra.mxu0 %v177
  %1083 = vmatprep.subr.mxu0 0.0
  %1084 = vmatpush1.msra.mxu0 %v176
  %1085 = vmatprep.subr.mxu0 0.0
  %1086 = vmatpush2.msra.mxu0 %v207
  %1087 = vmatprep.subr.mxu0 0.0
  %1088 = vmatpush2.msra.mxu0 %v206
  %1089 = vmatprep.subr.mxu0 0.0
  %1090 = vmatpush2.msra.mxu0 %v205
  %1091 = vmatprep.subr.mxu0 0.0
  %1092 = vmatpush2.msra.mxu0 %v204
  %1093 = vmatprep.subr.mxu0 0.0
  %1094 = vmatpush2.msra.mxu0 %v203
  %1095 = vmatprep.subr.mxu0 0.0
  %1096 = vmatpush2.msra.mxu0 %v202
  %1097 = vmatprep.subr.mxu0 0.0
  %1098 = vmatpush2.msra.mxu0 %v201
  %1099 = vmatprep.subr.mxu0 0.0
  %1100 = vmatpush2.msra.mxu0 %v200
  %1101 = vmatprep.subr.mxu0 0.0
  %1102 = vmatpush2.msra.mxu0 %v199
  %1103 = vmatprep.subr.mxu0 0.0
  %1104 = vmatpush2.msra.mxu0 %v198
  %1105 = vmatprep.subr.mxu0 0.0
  %1106 = vmatpush2.msra.mxu0 %v197
  %1107 = vmatprep.subr.mxu0 0.0
  %1108 = vmatpush2.msra.mxu0 %v196
  %1109 = vmatprep.subr.mxu0 0.0
  %1110 = vmatpush2.msra.mxu0 %v195
  %1111 = vmatprep.subr.mxu0 0.0
  %1112 = vmatpush2.msra.mxu0 %v194
  %1113 = vmatprep.subr.mxu0 0.0
  %1114 = vmatpush2.msra.mxu0 %v193
  %1115 = vmatprep.subr.mxu0 0.0
  %1116 = vmatpush2.msra.mxu0 %v192
  %1117 = vmatprep.mubr.f32.mxu0 %v19
  %1118 = vmatmul.mubr.f32.gmra.mxu0 %v18
  %v1119 = vpop.f32.mrf.mxu0
  %v1120 = vadd.f32 %v1045, %v1119
  %v1121 = vpop.f32.mrf.mxu0
  %1122 = vmatprep.mubr.f32.mxu0 %v68
  %1123 = vmatmul.mubr.f32.gmra.mxu0 %v67
  %v1124 = vpop.f32.mrf.mxu0
  %v1125 = vadd.f32 %v1050, %v1124
  %v1126 = vpop.f32.mrf.mxu0
  %1127 = vdwg.mxu0
  %1128 = vmatprep.subr.mxu0 0.0
  %1129 = vmatpush1.msra.mxu0 %v223
  %1130 = vmatprep.subr.mxu0 0.0
  %1131 = vmatpush1.msra.mxu0 %v222
  %1132 = vmatprep.subr.mxu0 0.0
  %1133 = vmatpush1.msra.mxu0 %v221
  %1134 = vmatprep.subr.mxu0 0.0
  %1135 = vmatpush1.msra.mxu0 %v220
  %1136 = vmatprep.subr.mxu0 0.0
  %1137 = vmatpush1.msra.mxu0 %v219
  %1138 = vmatprep.subr.mxu0 0.0
  %1139 = vmatpush1.msra.mxu0 %v218
  %1140 = vmatprep.subr.mxu0 0.0
  %1141 = vmatpush1.msra.mxu0 %v217
  %1142 = vmatprep.subr.mxu0 0.0
  %1143 = vmatpush1.msra.mxu0 %v216
  %1144 = vmatprep.subr.mxu0 0.0
  %1145 = vmatpush1.msra.mxu0 %v215
  %1146 = vmatprep.subr.mxu0 0.0
  %1147 = vmatpush1.msra.mxu0 %v214
  %1148 = vmatprep.subr.mxu0 0.0
  %1149 = vmatpush1.msra.mxu0 %v213
  %1150 = vmatprep.subr.mxu0 0.0
  %1151 = vmatpush1.msra.mxu0 %v212
  %1152 = vmatprep.subr.mxu0 0.0
  %1153 = vmatpush1.msra.mxu0 %v211
  %1154 = vmatprep.subr.mxu0 0.0
  %1155 = vmatpush1.msra.mxu0 %v210
  %1156 = vmatprep.subr.mxu0 0.0
  %1157 = vmatpush1.msra.mxu0 %v209
  %1158 = vmatprep.subr.mxu0 0.0
  %1159 = vmatpush1.msra.mxu0 %v208
  %1160 = vmatprep.subr.mxu0 0.0
  %1161 = vmatpush2.msra.mxu0 %v239
  %1162 = vmatprep.subr.mxu0 0.0
  %1163 = vmatpush2.msra.mxu0 %v238
  %1164 = vmatprep.subr.mxu0 0.0
  %1165 = vmatpush2.msra.mxu0 %v237
  %1166 = vmatprep.subr.mxu0 0.0
  %1167 = vmatpush2.msra.mxu0 %v236
  %1168 = vmatprep.subr.mxu0 0.0
  %1169 = vmatpush2.msra.mxu0 %v235
  %1170 = vmatprep.subr.mxu0 0.0
  %1171 = vmatpush2.msra.mxu0 %v234
  %1172 = vmatprep.subr.mxu0 0.0
  %1173 = vmatpush2.msra.mxu0 %v233
  %1174 = vmatprep.subr.mxu0 0.0
  %1175 = vmatpush2.msra.mxu0 %v232
  %1176 = vmatprep.subr.mxu0 0.0
  %1177 = vmatpush2.msra.mxu0 %v231
  %1178 = vmatprep.subr.mxu0 0.0
  %1179 = vmatpush2.msra.mxu0 %v230
  %1180 = vmatprep.subr.mxu0 0.0
  %1181 = vmatpush2.msra.mxu0 %v229
  %1182 = vmatprep.subr.mxu0 0.0
  %1183 = vmatpush2.msra.mxu0 %v228
  %1184 = vmatprep.subr.mxu0 0.0
  %1185 = vmatpush2.msra.mxu0 %v227
  %1186 = vmatprep.subr.mxu0 0.0
  %1187 = vmatpush2.msra.mxu0 %v226
  %1188 = vmatprep.subr.mxu0 0.0
  %1189 = vmatpush2.msra.mxu0 %v225
  %1190 = vmatprep.subr.mxu0 0.0
  %1191 = vmatpush2.msra.mxu0 %v224
  %1192 = vmatprep.mubr.f32.mxu0 %v21
  %1193 = vmatmul.mubr.f32.gmra.mxu0 %v20
  %v1194 = vpop.f32.mrf.mxu0
  %v1195 = vadd.f32 %v1120, %v1194
  %v1196 = vpop.f32.mrf.mxu0
  %1197 = vmatprep.mubr.f32.mxu0 %v70
  %1198 = vmatmul.mubr.f32.gmra.mxu0 %v69
  %v1199 = vpop.f32.mrf.mxu0
  %v1200 = vadd.f32 %v1125, %v1199
  %v1201 = vpop.f32.mrf.mxu0
  %1202 = vdwg.mxu0
  %1203 = vmatprep.subr.mxu0 0.0
  %1204 = vmatpush1.msra.mxu0 %v255
  %1205 = vmatprep.subr.mxu0 0.0
  %1206 = vmatpush1.msra.mxu0 %v254
  %1207 = vmatprep.subr.mxu0 0.0
  %1208 = vmatpush1.msra.mxu0 %v253
  %1209 = vmatprep.subr.mxu0 0.0
  %1210 = vmatpush1.msra.mxu0 %v252
  %1211 = vmatprep.subr.mxu0 0.0
  %1212 = vmatpush1.msra.mxu0 %v251
  %1213 = vmatprep.subr.mxu0 0.0
  %1214 = vmatpush1.msra.mxu0 %v250
  %1215 = vmatprep.subr.mxu0 0.0
  %1216 = vmatpush1.msra.mxu0 %v249
  %1217 = vmatprep.subr.mxu0 0.0
  %1218 = vmatpush1.msra.mxu0 %v248
  %1219 = vmatprep.subr.mxu0 0.0
  %1220 = vmatpush1.msra.mxu0 %v247
  %1221 = vmatprep.subr.mxu0 0.0
  %1222 = vmatpush1.msra.mxu0 %v246
  %1223 = vmatprep.subr.mxu0 0.0
  %1224 = vmatpush1.msra.mxu0 %v245
  %1225 = vmatprep.subr.mxu0 0.0
  %1226 = vmatpush1.msra.mxu0 %v244
  %1227 = vmatprep.subr.mxu0 0.0
  %1228 = vmatpush1.msra.mxu0 %v243
  %1229 = vmatprep.subr.mxu0 0.0
  %1230 = vmatpush1.msra.mxu0 %v242
  %1231 = vmatprep.subr.mxu0 0.0
  %1232 = vmatpush1.msra.mxu0 %v241
  %1233 = vmatprep.subr.mxu0 0.0
  %1234 = vmatpush1.msra.mxu0 %v240
  %1235 = vmatprep.subr.mxu0 0.0
  %1236 = vmatpush2.msra.mxu0 %v271
  %1237 = vmatprep.subr.mxu0 0.0
  %1238 = vmatpush2.msra.mxu0 %v270
  %1239 = vmatprep.subr.mxu0 0.0
  %1240 = vmatpush2.msra.mxu0 %v269
  %1241 = vmatprep.subr.mxu0 0.0
  %1242 = vmatpush2.msra.mxu0 %v268
  %1243 = vmatprep.subr.mxu0 0.0
  %1244 = vmatpush2.msra.mxu0 %v267
  %1245 = vmatprep.subr.mxu0 0.0
  %1246 = vmatpush2.msra.mxu0 %v266
  %1247 = vmatprep.subr.mxu0 0.0
  %1248 = vmatpush2.msra.mxu0 %v265
  %1249 = vmatprep.subr.mxu0 0.0
  %1250 = vmatpush2.msra.mxu0 %v264
  %1251 = vmatprep.subr.mxu0 0.0
  %1252 = vmatpush2.msra.mxu0 %v263
  %1253 = vmatprep.subr.mxu0 0.0
  %1254 = vmatpush2.msra.mxu0 %v262
  %1255 = vmatprep.subr.mxu0 0.0
  %1256 = vmatpush2.msra.mxu0 %v261
  %1257 = vmatprep.subr.mxu0 0.0
  %1258 = vmatpush2.msra.mxu0 %v260
  %1259 = vmatprep.subr.mxu0 0.0
  %1260 = vmatpush2.msra.mxu0 %v259
  %1261 = vmatprep.subr.mxu0 0.0
  %1262 = vmatpush2.msra.mxu0 %v258
  %1263 = vmatprep.subr.mxu0 0.0
  %1264 = vmatpush2.msra.mxu0 %v257
  %1265 = vmatprep.subr.mxu0 0.0
  %1266 = vmatpush2.msra.mxu0 %v256
  %1267 = vmatprep.mubr.f32.mxu0 %v23
  %1268 = vmatmul.mubr.f32.gmra.mxu0 %v22
  %v1269 = vpop.f32.mrf.mxu0
  %v1270 = vadd.f32 %v1195, %v1269
  %v1271 = vpop.f32.mrf.mxu0
  %1272 = vmatprep.mubr.f32.mxu0 %v72
  %1273 = vmatmul.mubr.f32.gmra.mxu0 %v71
  %v1274 = vpop.f32.mrf.mxu0
  %v1275 = vadd.f32 %v1200, %v1274
  %v1276 = vpop.f32.mrf.mxu0
  %1277 = vdwg.mxu0
  %1278 = vmatprep.subr.mxu0 0.0
  %1279 = vmatpush1.msra.mxu0 %v287
  %1280 = vmatprep.subr.mxu0 0.0
  %1281 = vmatpush1.msra.mxu0 %v286
  %1282 = vmatprep.subr.mxu0 0.0
  %1283 = vmatpush1.msra.mxu0 %v285
  %1284 = vmatprep.subr.mxu0 0.0
  %1285 = vmatpush1.msra.mxu0 %v284
  %1286 = vmatprep.subr.mxu0 0.0
  %1287 = vmatpush1.msra.mxu0 %v283
  %1288 = vmatprep.subr.mxu0 0.0
  %1289 = vmatpush1.msra.mxu0 %v282
  %1290 = vmatprep.subr.mxu0 0.0
  %1291 = vmatpush1.msra.mxu0 %v281
  %1292 = vmatprep.subr.mxu0 0.0
  %1293 = vmatpush1.msra.mxu0 %v280
  %1294 = vmatprep.subr.mxu0 0.0
  %1295 = vmatpush1.msra.mxu0 %v279
  %1296 = vmatprep.subr.mxu0 0.0
  %1297 = vmatpush1.msra.mxu0 %v278
  %1298 = vmatprep.subr.mxu0 0.0
  %1299 = vmatpush1.msra.mxu0 %v277
  %1300 = vmatprep.subr.mxu0 0.0
  %1301 = vmatpush1.msra.mxu0 %v276
  %1302 = vmatprep.subr.mxu0 0.0
  %1303 = vmatpush1.msra.mxu0 %v275
  %1304 = vmatprep.subr.mxu0 0.0
  %1305 = vmatpush1.msra.mxu0 %v274
  %1306 = vmatprep.subr.mxu0 0.0
  %1307 = vmatpush1.msra.mxu0 %v273
  %1308 = vmatprep.subr.mxu0 0.0
  %1309 = vmatpush1.msra.mxu0 %v272
  %1310 = vmatprep.subr.mxu0 0.0
  %1311 = vmatpush2.msra.mxu0 %v303
  %1312 = vmatprep.subr.mxu0 0.0
  %1313 = vmatpush2.msra.mxu0 %v302
  %1314 = vmatprep.subr.mxu0 0.0
  %1315 = vmatpush2.msra.mxu0 %v301
  %1316 = vmatprep.subr.mxu0 0.0
  %1317 = vmatpush2.msra.mxu0 %v300
  %1318 = vmatprep.subr.mxu0 0.0
  %1319 = vmatpush2.msra.mxu0 %v299
  %1320 = vmatprep.subr.mxu0 0.0
  %1321 = vmatpush2.msra.mxu0 %v298
  %1322 = vmatprep.subr.mxu0 0.0
  %1323 = vmatpush2.msra.mxu0 %v297
  %1324 = vmatprep.subr.mxu0 0.0
  %1325 = vmatpush2.msra.mxu0 %v296
  %1326 = vmatprep.subr.mxu0 0.0
  %1327 = vmatpush2.msra.mxu0 %v295
  %1328 = vmatprep.subr.mxu0 0.0
  %1329 = vmatpush2.msra.mxu0 %v294
  %1330 = vmatprep.subr.mxu0 0.0
  %1331 = vmatpush2.msra.mxu0 %v293
  %1332 = vmatprep.subr.mxu0 0.0
  %1333 = vmatpush2.msra.mxu0 %v292
  %1334 = vmatprep.subr.mxu0 0.0
  %1335 = vmatpush2.msra.mxu0 %v291
  %1336 = vmatprep.subr.mxu0 0.0
  %1337 = vmatpush2.msra.mxu0 %v290
  %1338 = vmatprep.subr.mxu0 0.0
  %1339 = vmatpush2.msra.mxu0 %v289
  %1340 = vmatprep.subr.mxu0 0.0
  %1341 = vmatpush2.msra.mxu0 %v288
  %1342 = vmatprep.mubr.f32.mxu0 %v25
  %1343 = vmatmul.mubr.f32.gmra.mxu0 %v24
  %v1344 = vpop.f32.mrf.mxu0
  %v1345 = vadd.f32 %v1270, %v1344
  %v1346 = vpop.f32.mrf.mxu0
  %1347 = vmatprep.mubr.f32.mxu0 %v74
  %1348 = vmatmul.mubr.f32.gmra.mxu0 %v73
  %v1349 = vpop.f32.mrf.mxu0
  %v1350 = vadd.f32 %v1275, %v1349
  %v1351 = vpop.f32.mrf.mxu0
  %1352 = vdwg.mxu0
  %1353 = vmatprep.subr.mxu0 0.0
  %1354 = vmatpush1.msra.mxu0 %v319
  %1355 = vmatprep.subr.mxu0 0.0
  %1356 = vmatpush1.msra.mxu0 %v318
  %1357 = vmatprep.subr.mxu0 0.0
  %1358 = vmatpush1.msra.mxu0 %v317
  %1359 = vmatprep.subr.mxu0 0.0
  %1360 = vmatpush1.msra.mxu0 %v316
  %1361 = vmatprep.subr.mxu0 0.0
  %1362 = vmatpush1.msra.mxu0 %v315
  %1363 = vmatprep.subr.mxu0 0.0
  %1364 = vmatpush1.msra.mxu0 %v314
  %1365 = vmatprep.subr.mxu0 0.0
  %1366 = vmatpush1.msra.mxu0 %v313
  %1367 = vmatprep.subr.mxu0 0.0
  %1368 = vmatpush1.msra.mxu0 %v312
  %1369 = vmatprep.subr.mxu0 0.0
  %1370 = vmatpush1.msra.mxu0 %v311
  %1371 = vmatprep.subr.mxu0 0.0
  %1372 = vmatpush1.msra.mxu0 %v310
  %1373 = vmatprep.subr.mxu0 0.0
  %1374 = vmatpush1.msra.mxu0 %v309
  %1375 = vmatprep.subr.mxu0 0.0
  %1376 = vmatpush1.msra.mxu0 %v308
  %1377 = vmatprep.subr.mxu0 0.0
  %1378 = vmatpush1.msra.mxu0 %v307
  %1379 = vmatprep.subr.mxu0 0.0
  %1380 = vmatpush1.msra.mxu0 %v306
  %1381 = vmatprep.subr.mxu0 0.0
  %1382 = vmatpush1.msra.mxu0 %v305
  %1383 = vmatprep.subr.mxu0 0.0
  %1384 = vmatpush1.msra.mxu0 %v304
  %1385 = vmatprep.subr.mxu0 0.0
  %1386 = vmatpush2.msra.mxu0 %v335
  %1387 = vmatprep.subr.mxu0 0.0
  %1388 = vmatpush2.msra.mxu0 %v334
  %1389 = vmatprep.subr.mxu0 0.0
  %1390 = vmatpush2.msra.mxu0 %v333
  %1391 = vmatprep.subr.mxu0 0.0
  %1392 = vmatpush2.msra.mxu0 %v332
  %1393 = vmatprep.subr.mxu0 0.0
  %1394 = vmatpush2.msra.mxu0 %v331
  %1395 = vmatprep.subr.mxu0 0.0
  %1396 = vmatpush2.msra.mxu0 %v330
  %1397 = vmatprep.subr.mxu0 0.0
  %1398 = vmatpush2.msra.mxu0 %v329
  %1399 = vmatprep.subr.mxu0 0.0
  %1400 = vmatpush2.msra.mxu0 %v328
  %1401 = vmatprep.subr.mxu0 0.0
  %1402 = vmatpush2.msra.mxu0 %v327
  %1403 = vmatprep.subr.mxu0 0.0
  %1404 = vmatpush2.msra.mxu0 %v326
  %1405 = vmatprep.subr.mxu0 0.0
  %1406 = vmatpush2.msra.mxu0 %v325
  %1407 = vmatprep.subr.mxu0 0.0
  %1408 = vmatpush2.msra.mxu0 %v324
  %1409 = vmatprep.subr.mxu0 0.0
  %1410 = vmatpush2.msra.mxu0 %v323
  %1411 = vmatprep.subr.mxu0 0.0
  %1412 = vmatpush2.msra.mxu0 %v322
  %1413 = vmatprep.subr.mxu0 0.0
  %1414 = vmatpush2.msra.mxu0 %v321
  %1415 = vmatprep.subr.mxu0 0.0
  %1416 = vmatpush2.msra.mxu0 %v320
  %1417 = vmatprep.mubr.f32.mxu0 %v27
  %1418 = vmatmul.mubr.f32.gmra.mxu0 %v26
  %v1419 = vpop.f32.mrf.mxu0
  %v1420 = vadd.f32 %v1345, %v1419
  %v1421 = vpop.f32.mrf.mxu0
  %1422 = vmatprep.mubr.f32.mxu0 %v76
  %1423 = vmatmul.mubr.f32.gmra.mxu0 %v75
  %v1424 = vpop.f32.mrf.mxu0
  %v1425 = vadd.f32 %v1350, %v1424
  %v1426 = vpop.f32.mrf.mxu0
  %1427 = vdwg.mxu0
  %1428 = vmatprep.subr.mxu0 0.0
  %1429 = vmatpush1.msra.mxu0 %v351
  %1430 = vmatprep.subr.mxu0 0.0
  %1431 = vmatpush1.msra.mxu0 %v350
  %1432 = vmatprep.subr.mxu0 0.0
  %1433 = vmatpush1.msra.mxu0 %v349
  %1434 = vmatprep.subr.mxu0 0.0
  %1435 = vmatpush1.msra.mxu0 %v348
  %1436 = vmatprep.subr.mxu0 0.0
  %1437 = vmatpush1.msra.mxu0 %v347
  %1438 = vmatprep.subr.mxu0 0.0
  %1439 = vmatpush1.msra.mxu0 %v346
  %1440 = vmatprep.subr.mxu0 0.0
  %1441 = vmatpush1.msra.mxu0 %v345
  %1442 = vmatprep.subr.mxu0 0.0
  %1443 = vmatpush1.msra.mxu0 %v344
  %1444 = vmatprep.subr.mxu0 0.0
  %1445 = vmatpush1.msra.mxu0 %v343
  %1446 = vmatprep.subr.mxu0 0.0
  %1447 = vmatpush1.msra.mxu0 %v342
  %1448 = vmatprep.subr.mxu0 0.0
  %1449 = vmatpush1.msra.mxu0 %v341
  %1450 = vmatprep.subr.mxu0 0.0
  %1451 = vmatpush1.msra.mxu0 %v340
  %1452 = vmatprep.subr.mxu0 0.0
  %1453 = vmatpush1.msra.mxu0 %v339
  %1454 = vmatprep.subr.mxu0 0.0
  %1455 = vmatpush1.msra.mxu0 %v338
  %1456 = vmatprep.subr.mxu0 0.0
  %1457 = vmatpush1.msra.mxu0 %v337
  %1458 = vmatprep.subr.mxu0 0.0
  %1459 = vmatpush1.msra.mxu0 %v336
  %1460 = vmatprep.subr.mxu0 0.0
  %1461 = vmatpush2.msra.mxu0 %v367
  %1462 = vmatprep.subr.mxu0 0.0
  %1463 = vmatpush2.msra.mxu0 %v366
  %1464 = vmatprep.subr.mxu0 0.0
  %1465 = vmatpush2.msra.mxu0 %v365
  %1466 = vmatprep.subr.mxu0 0.0
  %1467 = vmatpush2.msra.mxu0 %v364
  %1468 = vmatprep.subr.mxu0 0.0
  %1469 = vmatpush2.msra.mxu0 %v363
  %1470 = vmatprep.subr.mxu0 0.0
  %1471 = vmatpush2.msra.mxu0 %v362
  %1472 = vmatprep.subr.mxu0 0.0
  %1473 = vmatpush2.msra.mxu0 %v361
  %1474 = vmatprep.subr.mxu0 0.0
  %1475 = vmatpush2.msra.mxu0 %v360
  %1476 = vmatprep.subr.mxu0 0.0
  %1477 = vmatpush2.msra.mxu0 %v359
  %1478 = vmatprep.subr.mxu0 0.0
  %1479 = vmatpush2.msra.mxu0 %v358
  %1480 = vmatprep.subr.mxu0 0.0
  %1481 = vmatpush2.msra.mxu0 %v357
  %1482 = vmatprep.subr.mxu0 0.0
  %1483 = vmatpush2.msra.mxu0 %v356
  %1484 = vmatprep.subr.mxu0 0.0
  %1485 = vmatpush2.msra.mxu0 %v355
  %1486 = vmatprep.subr.mxu0 0.0
  %1487 = vmatpush2.msra.mxu0 %v354
  %1488 = vmatprep.subr.mxu0 0.0
  %1489 = vmatpush2.msra.mxu0 %v353
  %1490 = vmatprep.subr.mxu0 0.0
  %1491 = vmatpush2.msra.mxu0 %v352
  %1492 = vmatprep.mubr.f32.mxu0 %v29
  %1493 = vmatmul.mubr.f32.gmra.mxu0 %v28
  %v1494 = vpop.f32.mrf.mxu0
  %v1495 = vadd.f32 %v1420, %v1494
  %v1496 = vpop.f32.mrf.mxu0
  %1497 = vmatprep.mubr.f32.mxu0 %v78
  %1498 = vmatmul.mubr.f32.gmra.mxu0 %v77
  %v1499 = vpop.f32.mrf.mxu0
  %v1500 = vadd.f32 %v1425, %v1499
  %v1501 = vpop.f32.mrf.mxu0
  %1502 = vdwg.mxu0
  %1503 = vmatprep.subr.mxu0 0.0
  %1504 = vmatpush1.msra.mxu0 %v383
  %1505 = vmatprep.subr.mxu0 0.0
  %1506 = vmatpush1.msra.mxu0 %v382
  %1507 = vmatprep.subr.mxu0 0.0
  %1508 = vmatpush1.msra.mxu0 %v381
  %1509 = vmatprep.subr.mxu0 0.0
  %1510 = vmatpush1.msra.mxu0 %v380
  %1511 = vmatprep.subr.mxu0 0.0
  %1512 = vmatpush1.msra.mxu0 %v379
  %1513 = vmatprep.subr.mxu0 0.0
  %1514 = vmatpush1.msra.mxu0 %v378
  %1515 = vmatprep.subr.mxu0 0.0
  %1516 = vmatpush1.msra.mxu0 %v377
  %1517 = vmatprep.subr.mxu0 0.0
  %1518 = vmatpush1.msra.mxu0 %v376
  %1519 = vmatprep.subr.mxu0 0.0
  %1520 = vmatpush1.msra.mxu0 %v375
  %1521 = vmatprep.subr.mxu0 0.0
  %1522 = vmatpush1.msra.mxu0 %v374
  %1523 = vmatprep.subr.mxu0 0.0
  %1524 = vmatpush1.msra.mxu0 %v373
  %1525 = vmatprep.subr.mxu0 0.0
  %1526 = vmatpush1.msra.mxu0 %v372
  %1527 = vmatprep.subr.mxu0 0.0
  %1528 = vmatpush1.msra.mxu0 %v371
  %1529 = vmatprep.subr.mxu0 0.0
  %1530 = vmatpush1.msra.mxu0 %v370
  %1531 = vmatprep.subr.mxu0 0.0
  %1532 = vmatpush1.msra.mxu0 %v369
  %1533 = vmatprep.subr.mxu0 0.0
  %1534 = vmatpush1.msra.mxu0 %v368
  %1535 = vmatprep.subr.mxu0 0.0
  %1536 = vmatpush2.msra.mxu0 %v399
  %1537 = vmatprep.subr.mxu0 0.0
  %1538 = vmatpush2.msra.mxu0 %v398
  %1539 = vmatprep.subr.mxu0 0.0
  %1540 = vmatpush2.msra.mxu0 %v397
  %1541 = vmatprep.subr.mxu0 0.0
  %1542 = vmatpush2.msra.mxu0 %v396
  %1543 = vmatprep.subr.mxu0 0.0
  %1544 = vmatpush2.msra.mxu0 %v395
  %1545 = vmatprep.subr.mxu0 0.0
  %1546 = vmatpush2.msra.mxu0 %v394
  %1547 = vmatprep.subr.mxu0 0.0
  %1548 = vmatpush2.msra.mxu0 %v393
  %1549 = vmatprep.subr.mxu0 0.0
  %1550 = vmatpush2.msra.mxu0 %v392
  %1551 = vmatprep.subr.mxu0 0.0
  %1552 = vmatpush2.msra.mxu0 %v391
  %1553 = vmatprep.subr.mxu0 0.0
  %1554 = vmatpush2.msra.mxu0 %v390
  %1555 = vmatprep.subr.mxu0 0.0
  %1556 = vmatpush2.msra.mxu0 %v389
  %1557 = vmatprep.subr.mxu0 0.0
  %1558 = vmatpush2.msra.mxu0 %v388
  %1559 = vmatprep.subr.mxu0 0.0
  %1560 = vmatpush2.msra.mxu0 %v387
  %1561 = vmatprep.subr.mxu0 0.0
  %1562 = vmatpush2.msra.mxu0 %v386
  %1563 = vmatprep.subr.mxu0 0.0
  %1564 = vmatpush2.msra.mxu0 %v385
  %1565 = vmatprep.subr.mxu0 0.0
  %1566 = vmatpush2.msra.mxu0 %v384
  %1567 = vmatprep.mubr.f32.mxu0 %v31
  %1568 = vmatmul.mubr.f32.gmra.mxu0 %v30
  %v1569 = vpop.f32.mrf.mxu0
  %v1570 = vadd.f32 %v1495, %v1569
  %v1571 = vpop.f32.mrf.mxu0
  %1572 = vmatprep.mubr.f32.mxu0 %v80
  %1573 = vmatmul.mubr.f32.gmra.mxu0 %v79
  %v1574 = vpop.f32.mrf.mxu0
  %v1575 = vadd.f32 %v1500, %v1574
  %v1576 = vpop.f32.mrf.mxu0
  %1577 = vdwg.mxu0
  %1578 = vmatprep.subr.mxu0 0.0
  %1579 = vmatpush1.msra.mxu0 %v415
  %1580 = vmatprep.subr.mxu0 0.0
  %1581 = vmatpush1.msra.mxu0 %v414
  %1582 = vmatprep.subr.mxu0 0.0
  %1583 = vmatpush1.msra.mxu0 %v413
  %1584 = vmatprep.subr.mxu0 0.0
  %1585 = vmatpush1.msra.mxu0 %v412
  %1586 = vmatprep.subr.mxu0 0.0
  %1587 = vmatpush1.msra.mxu0 %v411
  %1588 = vmatprep.subr.mxu0 0.0
  %1589 = vmatpush1.msra.mxu0 %v410
  %1590 = vmatprep.subr.mxu0 0.0
  %1591 = vmatpush1.msra.mxu0 %v409
  %1592 = vmatprep.subr.mxu0 0.0
  %1593 = vmatpush1.msra.mxu0 %v408
  %1594 = vmatprep.subr.mxu0 0.0
  %1595 = vmatpush1.msra.mxu0 %v407
  %1596 = vmatprep.subr.mxu0 0.0
  %1597 = vmatpush1.msra.mxu0 %v406
  %1598 = vmatprep.subr.mxu0 0.0
  %1599 = vmatpush1.msra.mxu0 %v405
  %1600 = vmatprep.subr.mxu0 0.0
  %1601 = vmatpush1.msra.mxu0 %v404
  %1602 = vmatprep.subr.mxu0 0.0
  %1603 = vmatpush1.msra.mxu0 %v403
  %1604 = vmatprep.subr.mxu0 0.0
  %1605 = vmatpush1.msra.mxu0 %v402
  %1606 = vmatprep.subr.mxu0 0.0
  %1607 = vmatpush1.msra.mxu0 %v401
  %1608 = vmatprep.subr.mxu0 0.0
  %1609 = vmatpush1.msra.mxu0 %v400
  %1610 = vmatprep.subr.mxu0 0.0
  %1611 = vmatpush2.msra.mxu0 %v431
  %1612 = vmatprep.subr.mxu0 0.0
  %1613 = vmatpush2.msra.mxu0 %v430
  %1614 = vmatprep.subr.mxu0 0.0
  %1615 = vmatpush2.msra.mxu0 %v429
  %1616 = vmatprep.subr.mxu0 0.0
  %1617 = vmatpush2.msra.mxu0 %v428
  %1618 = vmatprep.subr.mxu0 0.0
  %1619 = vmatpush2.msra.mxu0 %v427
  %1620 = vmatprep.subr.mxu0 0.0
  %1621 = vmatpush2.msra.mxu0 %v426
  %1622 = vmatprep.subr.mxu0 0.0
  %1623 = vmatpush2.msra.mxu0 %v425
  %1624 = vmatprep.subr.mxu0 0.0
  %1625 = vmatpush2.msra.mxu0 %v424
  %1626 = vmatprep.subr.mxu0 0.0
  %1627 = vmatpush2.msra.mxu0 %v423
  %1628 = vmatprep.subr.mxu0 0.0
  %1629 = vmatpush2.msra.mxu0 %v422
  %1630 = vmatprep.subr.mxu0 0.0
  %1631 = vmatpush2.msra.mxu0 %v421
  %1632 = vmatprep.subr.mxu0 0.0
  %1633 = vmatpush2.msra.mxu0 %v420
  %1634 = vmatprep.subr.mxu0 0.0
  %1635 = vmatpush2.msra.mxu0 %v419
  %1636 = vmatprep.subr.mxu0 0.0
  %1637 = vmatpush2.msra.mxu0 %v418
  %1638 = vmatprep.subr.mxu0 0.0
  %1639 = vmatpush2.msra.mxu0 %v417
  %1640 = vmatprep.subr.mxu0 0.0
  %1641 = vmatpush2.msra.mxu0 %v416
  %1642 = vmatprep.mubr.f32.mxu0 %v33
  %1643 = vmatmul.mubr.f32.gmra.mxu0 %v32
  %v1644 = vpop.f32.mrf.mxu0
  %v1645 = vadd.f32 %v1570, %v1644
  %v1646 = vpop.f32.mrf.mxu0
  %1647 = vmatprep.mubr.f32.mxu0 %v82
  %1648 = vmatmul.mubr.f32.gmra.mxu0 %v81
  %v1649 = vpop.f32.mrf.mxu0
  %v1650 = vadd.f32 %v1575, %v1649
  %v1651 = vpop.f32.mrf.mxu0
  %1652 = vdwg.mxu0
  %1653 = vmatprep.subr.mxu0 0.0
  %1654 = vmatpush1.msra.mxu0 %v447
  %1655 = vmatprep.subr.mxu0 0.0
  %1656 = vmatpush1.msra.mxu0 %v446
  %1657 = vmatprep.subr.mxu0 0.0
  %1658 = vmatpush1.msra.mxu0 %v445
  %1659 = vmatprep.subr.mxu0 0.0
  %1660 = vmatpush1.msra.mxu0 %v444
  %1661 = vmatprep.subr.mxu0 0.0
  %1662 = vmatpush1.msra.mxu0 %v443
  %1663 = vmatprep.subr.mxu0 0.0
  %1664 = vmatpush1.msra.mxu0 %v442
  %1665 = vmatprep.subr.mxu0 0.0
  %1666 = vmatpush1.msra.mxu0 %v441
  %1667 = vmatprep.subr.mxu0 0.0
  %1668 = vmatpush1.msra.mxu0 %v440
  %1669 = vmatprep.subr.mxu0 0.0
  %1670 = vmatpush1.msra.mxu0 %v439
  %1671 = vmatprep.subr.mxu0 0.0
  %1672 = vmatpush1.msra.mxu0 %v438
  %1673 = vmatprep.subr.mxu0 0.0
  %1674 = vmatpush1.msra.mxu0 %v437
  %1675 = vmatprep.subr.mxu0 0.0
  %1676 = vmatpush1.msra.mxu0 %v436
  %1677 = vmatprep.subr.mxu0 0.0
  %1678 = vmatpush1.msra.mxu0 %v435
  %1679 = vmatprep.subr.mxu0 0.0
  %1680 = vmatpush1.msra.mxu0 %v434
  %1681 = vmatprep.subr.mxu0 0.0
  %1682 = vmatpush1.msra.mxu0 %v433
  %1683 = vmatprep.subr.mxu0 0.0
  %1684 = vmatpush1.msra.mxu0 %v432
  %1685 = vmatprep.subr.mxu0 0.0
  %1686 = vmatpush2.msra.mxu0 %v463
  %1687 = vmatprep.subr.mxu0 0.0
  %1688 = vmatpush2.msra.mxu0 %v462
  %1689 = vmatprep.subr.mxu0 0.0
  %1690 = vmatpush2.msra.mxu0 %v461
  %1691 = vmatprep.subr.mxu0 0.0
  %1692 = vmatpush2.msra.mxu0 %v460
  %1693 = vmatprep.subr.mxu0 0.0
  %1694 = vmatpush2.msra.mxu0 %v459
  %1695 = vmatprep.subr.mxu0 0.0
  %1696 = vmatpush2.msra.mxu0 %v458
  %1697 = vmatprep.subr.mxu0 0.0
  %1698 = vmatpush2.msra.mxu0 %v457
  %1699 = vmatprep.subr.mxu0 0.0
  %1700 = vmatpush2.msra.mxu0 %v456
  %1701 = vmatprep.subr.mxu0 0.0
  %1702 = vmatpush2.msra.mxu0 %v455
  %1703 = vmatprep.subr.mxu0 0.0
  %1704 = vmatpush2.msra.mxu0 %v454
  %1705 = vmatprep.subr.mxu0 0.0
  %1706 = vmatpush2.msra.mxu0 %v453
  %1707 = vmatprep.subr.mxu0 0.0
  %1708 = vmatpush2.msra.mxu0 %v452
  %1709 = vmatprep.subr.mxu0 0.0
  %1710 = vmatpush2.msra.mxu0 %v451
  %1711 = vmatprep.subr.mxu0 0.0
  %1712 = vmatpush2.msra.mxu0 %v450
  %1713 = vmatprep.subr.mxu0 0.0
  %1714 = vmatpush2.msra.mxu0 %v449
  %1715 = vmatprep.subr.mxu0 0.0
  %1716 = vmatpush2.msra.mxu0 %v448
  %1717 = vmatprep.mubr.f32.mxu0 %v35
  %1718 = vmatmul.mubr.f32.gmra.mxu0 %v34
  %v1719 = vpop.f32.mrf.mxu0
  %v1720 = vadd.f32 %v1645, %v1719
  %v1721 = vpop.f32.mrf.mxu0
  %1722 = vmatprep.mubr.f32.mxu0 %v84
  %1723 = vmatmul.mubr.f32.gmra.mxu0 %v83
  %v1724 = vpop.f32.mrf.mxu0
  %v1725 = vadd.f32 %v1650, %v1724
  %v1726 = vpop.f32.mrf.mxu0
  %1727 = vdwg.mxu0
  %1728 = vmatprep.subr.mxu0 0.0
  %1729 = vmatpush1.msra.mxu0 %v479
  %1730 = vmatprep.subr.mxu0 0.0
  %1731 = vmatpush1.msra.mxu0 %v478
  %1732 = vmatprep.subr.mxu0 0.0
  %1733 = vmatpush1.msra.mxu0 %v477
  %1734 = vmatprep.subr.mxu0 0.0
  %1735 = vmatpush1.msra.mxu0 %v476
  %1736 = vmatprep.subr.mxu0 0.0
  %1737 = vmatpush1.msra.mxu0 %v475
  %1738 = vmatprep.subr.mxu0 0.0
  %1739 = vmatpush1.msra.mxu0 %v474
  %1740 = vmatprep.subr.mxu0 0.0
  %1741 = vmatpush1.msra.mxu0 %v473
  %1742 = vmatprep.subr.mxu0 0.0
  %1743 = vmatpush1.msra.mxu0 %v472
  %1744 = vmatprep.subr.mxu0 0.0
  %1745 = vmatpush1.msra.mxu0 %v471
  %1746 = vmatprep.subr.mxu0 0.0
  %1747 = vmatpush1.msra.mxu0 %v470
  %1748 = vmatprep.subr.mxu0 0.0
  %1749 = vmatpush1.msra.mxu0 %v469
  %1750 = vmatprep.subr.mxu0 0.0
  %1751 = vmatpush1.msra.mxu0 %v468
  %1752 = vmatprep.subr.mxu0 0.0
  %1753 = vmatpush1.msra.mxu0 %v467
  %1754 = vmatprep.subr.mxu0 0.0
  %1755 = vmatpush1.msra.mxu0 %v466
  %1756 = vmatprep.subr.mxu0 0.0
  %1757 = vmatpush1.msra.mxu0 %v465
  %1758 = vmatprep.subr.mxu0 0.0
  %1759 = vmatpush1.msra.mxu0 %v464
  %1760 = vmatprep.subr.mxu0 0.0
  %1761 = vmatpush2.msra.mxu0 %v495
  %1762 = vmatprep.subr.mxu0 0.0
  %1763 = vmatpush2.msra.mxu0 %v494
  %1764 = vmatprep.subr.mxu0 0.0
  %1765 = vmatpush2.msra.mxu0 %v493
  %1766 = vmatprep.subr.mxu0 0.0
  %1767 = vmatpush2.msra.mxu0 %v492
  %1768 = vmatprep.subr.mxu0 0.0
  %1769 = vmatpush2.msra.mxu0 %v491
  %1770 = vmatprep.subr.mxu0 0.0
  %1771 = vmatpush2.msra.mxu0 %v490
  %1772 = vmatprep.subr.mxu0 0.0
  %1773 = vmatpush2.msra.mxu0 %v489
  %1774 = vmatprep.subr.mxu0 0.0
  %1775 = vmatpush2.msra.mxu0 %v488
  %1776 = vmatprep.subr.mxu0 0.0
  %1777 = vmatpush2.msra.mxu0 %v487
  %1778 = vmatprep.subr.mxu0 0.0
  %1779 = vmatpush2.msra.mxu0 %v486
  %1780 = vmatprep.subr.mxu0 0.0
  %1781 = vmatpush2.msra.mxu0 %v485
  %1782 = vmatprep.subr.mxu0 0.0
  %1783 = vmatpush2.msra.mxu0 %v484
  %1784 = vmatprep.subr.mxu0 0.0
  %1785 = vmatpush2.msra.mxu0 %v483
  %1786 = vmatprep.subr.mxu0 0.0
  %1787 = vmatpush2.msra.mxu0 %v482
  %1788 = vmatprep.subr.mxu0 0.0
  %1789 = vmatpush2.msra.mxu0 %v481
  %1790 = vmatprep.subr.mxu0 0.0
  %1791 = vmatpush2.msra.mxu0 %v480
  %1792 = vmatprep.mubr.f32.mxu0 %v37
  %1793 = vmatmul.mubr.f32.gmra.mxu0 %v36
  %v1794 = vpop.f32.mrf.mxu0
  %v1795 = vadd.f32 %v1720, %v1794
  %v1796 = vpop.f32.mrf.mxu0
  %1797 = vmatprep.mubr.f32.mxu0 %v86
  %1798 = vmatmul.mubr.f32.gmra.mxu0 %v85
  %v1799 = vpop.f32.mrf.mxu0
  %v1800 = vadd.f32 %v1725, %v1799
  %v1801 = vpop.f32.mrf.mxu0
  %1802 = vdwg.mxu0
  %1803 = vmatprep.subr.mxu0 0.0
  %1804 = vmatpush1.msra.mxu0 %v511
  %1805 = vmatprep.subr.mxu0 0.0
  %1806 = vmatpush1.msra.mxu0 %v510
  %1807 = vmatprep.subr.mxu0 0.0
  %1808 = vmatpush1.msra.mxu0 %v509
  %1809 = vmatprep.subr.mxu0 0.0
  %1810 = vmatpush1.msra.mxu0 %v508
  %1811 = vmatprep.subr.mxu0 0.0
  %1812 = vmatpush1.msra.mxu0 %v507
  %1813 = vmatprep.subr.mxu0 0.0
  %1814 = vmatpush1.msra.mxu0 %v506
  %1815 = vmatprep.subr.mxu0 0.0
  %1816 = vmatpush1.msra.mxu0 %v505
  %1817 = vmatprep.subr.mxu0 0.0
  %1818 = vmatpush1.msra.mxu0 %v504
  %1819 = vmatprep.subr.mxu0 0.0
  %1820 = vmatpush1.msra.mxu0 %v503
  %1821 = vmatprep.subr.mxu0 0.0
  %1822 = vmatpush1.msra.mxu0 %v502
  %1823 = vmatprep.subr.mxu0 0.0
  %1824 = vmatpush1.msra.mxu0 %v501
  %1825 = vmatprep.subr.mxu0 0.0
  %1826 = vmatpush1.msra.mxu0 %v500
  %1827 = vmatprep.subr.mxu0 0.0
  %1828 = vmatpush1.msra.mxu0 %v499
  %1829 = vmatprep.subr.mxu0 0.0
  %1830 = vmatpush1.msra.mxu0 %v498
  %1831 = vmatprep.subr.mxu0 0.0
  %1832 = vmatpush1.msra.mxu0 %v497
  %1833 = vmatprep.subr.mxu0 0.0
  %1834 = vmatpush1.msra.mxu0 %v496
  %1835 = vmatprep.subr.mxu0 0.0
  %1836 = vmatpush2.msra.mxu0 %v527
  %1837 = vmatprep.subr.mxu0 0.0
  %1838 = vmatpush2.msra.mxu0 %v526
  %1839 = vmatprep.subr.mxu0 0.0
  %1840 = vmatpush2.msra.mxu0 %v525
  %1841 = vmatprep.subr.mxu0 0.0
  %1842 = vmatpush2.msra.mxu0 %v524
  %1843 = vmatprep.subr.mxu0 0.0
  %1844 = vmatpush2.msra.mxu0 %v523
  %1845 = vmatprep.subr.mxu0 0.0
  %1846 = vmatpush2.msra.mxu0 %v522
  %1847 = vmatprep.subr.mxu0 0.0
  %1848 = vmatpush2.msra.mxu0 %v521
  %1849 = vmatprep.subr.mxu0 0.0
  %1850 = vmatpush2.msra.mxu0 %v520
  %1851 = vmatprep.subr.mxu0 0.0
  %1852 = vmatpush2.msra.mxu0 %v519
  %1853 = vmatprep.subr.mxu0 0.0
  %1854 = vmatpush2.msra.mxu0 %v518
  %1855 = vmatprep.subr.mxu0 0.0
  %1856 = vmatpush2.msra.mxu0 %v517
  %1857 = vmatprep.subr.mxu0 0.0
  %1858 = vmatpush2.msra.mxu0 %v516
  %1859 = vmatprep.subr.mxu0 0.0
  %1860 = vmatpush2.msra.mxu0 %v515
  %1861 = vmatprep.subr.mxu0 0.0
  %1862 = vmatpush2.msra.mxu0 %v514
  %1863 = vmatprep.subr.mxu0 0.0
  %1864 = vmatpush2.msra.mxu0 %v513
  %1865 = vmatprep.subr.mxu0 0.0
  %1866 = vmatpush2.msra.mxu0 %v512
  %1867 = vmatprep.mubr.f32.mxu0 %v39
  %1868 = vmatmul.mubr.f32.gmra.mxu0 %v38
  %v1869 = vpop.f32.mrf.mxu0
  %v1870 = vadd.f32 %v1795, %v1869
  %v1871 = vpop.f32.mrf.mxu0
  %1872 = vmatprep.mubr.f32.mxu0 %v88
  %1873 = vmatmul.mubr.f32.gmra.mxu0 %v87
  %v1874 = vpop.f32.mrf.mxu0
  %v1875 = vadd.f32 %v1800, %v1874
  %v1876 = vpop.f32.mrf.mxu0
  %1877 = vdwg.mxu0
  %1878 = vmatprep.subr.mxu0 0.0
  %1879 = vmatpush1.msra.mxu0 %v543
  %1880 = vmatprep.subr.mxu0 0.0
  %1881 = vmatpush1.msra.mxu0 %v542
  %1882 = vmatprep.subr.mxu0 0.0
  %1883 = vmatpush1.msra.mxu0 %v541
  %1884 = vmatprep.subr.mxu0 0.0
  %1885 = vmatpush1.msra.mxu0 %v540
  %1886 = vmatprep.subr.mxu0 0.0
  %1887 = vmatpush1.msra.mxu0 %v539
  %1888 = vmatprep.subr.mxu0 0.0
  %1889 = vmatpush1.msra.mxu0 %v538
  %1890 = vmatprep.subr.mxu0 0.0
  %1891 = vmatpush1.msra.mxu0 %v537
  %1892 = vmatprep.subr.mxu0 0.0
  %1893 = vmatpush1.msra.mxu0 %v536
  %1894 = vmatprep.subr.mxu0 0.0
  %1895 = vmatpush1.msra.mxu0 %v535
  %1896 = vmatprep.subr.mxu0 0.0
  %1897 = vmatpush1.msra.mxu0 %v534
  %1898 = vmatprep.subr.mxu0 0.0
  %1899 = vmatpush1.msra.mxu0 %v533
  %1900 = vmatprep.subr.mxu0 0.0
  %1901 = vmatpush1.msra.mxu0 %v532
  %1902 = vmatprep.subr.mxu0 0.0
  %1903 = vmatpush1.msra.mxu0 %v531
  %1904 = vmatprep.subr.mxu0 0.0
  %1905 = vmatpush1.msra.mxu0 %v530
  %1906 = vmatprep.subr.mxu0 0.0
  %1907 = vmatpush1.msra.mxu0 %v529
  %1908 = vmatprep.subr.mxu0 0.0
  %1909 = vmatpush1.msra.mxu0 %v528
  %1910 = vmatprep.subr.mxu0 0.0
  %1911 = vmatpush2.msra.mxu0 %v559
  %1912 = vmatprep.subr.mxu0 0.0
  %1913 = vmatpush2.msra.mxu0 %v558
  %1914 = vmatprep.subr.mxu0 0.0
  %1915 = vmatpush2.msra.mxu0 %v557
  %1916 = vmatprep.subr.mxu0 0.0
  %1917 = vmatpush2.msra.mxu0 %v556
  %1918 = vmatprep.subr.mxu0 0.0
  %1919 = vmatpush2.msra.mxu0 %v555
  %1920 = vmatprep.subr.mxu0 0.0
  %1921 = vmatpush2.msra.mxu0 %v554
  %1922 = vmatprep.subr.mxu0 0.0
  %1923 = vmatpush2.msra.mxu0 %v553
  %1924 = vmatprep.subr.mxu0 0.0
  %1925 = vmatpush2.msra.mxu0 %v552
  %1926 = vmatprep.subr.mxu0 0.0
  %1927 = vmatpush2.msra.mxu0 %v551
  %1928 = vmatprep.subr.mxu0 0.0
  %1929 = vmatpush2.msra.mxu0 %v550
  %1930 = vmatprep.subr.mxu0 0.0
  %1931 = vmatpush2.msra.mxu0 %v549
  %1932 = vmatprep.subr.mxu0 0.0
  %1933 = vmatpush2.msra.mxu0 %v548
  %1934 = vmatprep.subr.mxu0 0.0
  %1935 = vmatpush2.msra.mxu0 %v547
  %1936 = vmatprep.subr.mxu0 0.0
  %1937 = vmatpush2.msra.mxu0 %v546
  %1938 = vmatprep.subr.mxu0 0.0
  %1939 = vmatpush2.msra.mxu0 %v545
  %1940 = vmatprep.subr.mxu0 0.0
  %1941 = vmatpush2.msra.mxu0 %v544
  %1942 = vmatprep.mubr.f32.mxu0 %v41
  %1943 = vmatmul.mubr.f32.gmra.mxu0 %v40
  %v1944 = vpop.f32.mrf.mxu0
  %v1945 = vadd.f32 %v1870, %v1944
  %v1946 = vpop.f32.mrf.mxu0
  %1947 = vmatprep.mubr.f32.mxu0 %v90
  %1948 = vmatmul.mubr.f32.gmra.mxu0 %v89
  %v1949 = vpop.f32.mrf.mxu0
  %v1950 = vadd.f32 %v1875, %v1949
  %v1951 = vpop.f32.mrf.mxu0
  %1952 = vdwg.mxu0
  %1953 = vmatprep.subr.mxu0 0.0
  %1954 = vmatpush1.msra.mxu0 %v575
  %1955 = vmatprep.subr.mxu0 0.0
  %1956 = vmatpush1.msra.mxu0 %v574
  %1957 = vmatprep.subr.mxu0 0.0
  %1958 = vmatpush1.msra.mxu0 %v573
  %1959 = vmatprep.subr.mxu0 0.0
  %1960 = vmatpush1.msra.mxu0 %v572
  %1961 = vmatprep.subr.mxu0 0.0
  %1962 = vmatpush1.msra.mxu0 %v571
  %1963 = vmatprep.subr.mxu0 0.0
  %1964 = vmatpush1.msra.mxu0 %v570
  %1965 = vmatprep.subr.mxu0 0.0
  %1966 = vmatpush1.msra.mxu0 %v569
  %1967 = vmatprep.subr.mxu0 0.0
  %1968 = vmatpush1.msra.mxu0 %v568
  %1969 = vmatprep.subr.mxu0 0.0
  %1970 = vmatpush1.msra.mxu0 %v567
  %1971 = vmatprep.subr.mxu0 0.0
  %1972 = vmatpush1.msra.mxu0 %v566
  %1973 = vmatprep.subr.mxu0 0.0
  %1974 = vmatpush1.msra.mxu0 %v565
  %1975 = vmatprep.subr.mxu0 0.0
  %1976 = vmatpush1.msra.mxu0 %v564
  %1977 = vmatprep.subr.mxu0 0.0
  %1978 = vmatpush1.msra.mxu0 %v563
  %1979 = vmatprep.subr.mxu0 0.0
  %1980 = vmatpush1.msra.mxu0 %v562
  %1981 = vmatprep.subr.mxu0 0.0
  %1982 = vmatpush1.msra.mxu0 %v561
  %1983 = vmatprep.subr.mxu0 0.0
  %1984 = vmatpush1.msra.mxu0 %v560
  %1985 = vmatprep.subr.mxu0 0.0
  %1986 = vmatpush2.msra.mxu0 %v591
  %1987 = vmatprep.subr.mxu0 0.0
  %1988 = vmatpush2.msra.mxu0 %v590
  %1989 = vmatprep.subr.mxu0 0.0
  %1990 = vmatpush2.msra.mxu0 %v589
  %1991 = vmatprep.subr.mxu0 0.0
  %1992 = vmatpush2.msra.mxu0 %v588
  %1993 = vmatprep.subr.mxu0 0.0
  %1994 = vmatpush2.msra.mxu0 %v587
  %1995 = vmatprep.subr.mxu0 0.0
  %1996 = vmatpush2.msra.mxu0 %v586
  %1997 = vmatprep.subr.mxu0 0.0
  %1998 = vmatpush2.msra.mxu0 %v585
  %1999 = vmatprep.subr.mxu0 0.0
  %2000 = vmatpush2.msra.mxu0 %v584
  %2001 = vmatprep.subr.mxu0 0.0
  %2002 = vmatpush2.msra.mxu0 %v583
  %2003 = vmatprep.subr.mxu0 0.0
  %2004 = vmatpush2.msra.mxu0 %v582
  %2005 = vmatprep.subr.mxu0 0.0
  %2006 = vmatpush2.msra.mxu0 %v581
  %2007 = vmatprep.subr.mxu0 0.0
  %2008 = vmatpush2.msra.mxu0 %v580
  %2009 = vmatprep.subr.mxu0 0.0
  %2010 = vmatpush2.msra.mxu0 %v579
  %2011 = vmatprep.subr.mxu0 0.0
  %2012 = vmatpush2.msra.mxu0 %v578
  %2013 = vmatprep.subr.mxu0 0.0
  %2014 = vmatpush2.msra.mxu0 %v577
  %2015 = vmatprep.subr.mxu0 0.0
  %2016 = vmatpush2.msra.mxu0 %v576
  %2017 = vmatprep.mubr.f32.mxu0 %v43
  %2018 = vmatmul.mubr.f32.gmra.mxu0 %v42
  %v2019 = vpop.f32.mrf.mxu0
  %v2020 = vadd.f32 %v1945, %v2019
  %v2021 = vpop.f32.mrf.mxu0
  %2022 = vmatprep.mubr.f32.mxu0 %v92
  %2023 = vmatmul.mubr.f32.gmra.mxu0 %v91
  %v2024 = vpop.f32.mrf.mxu0
  %v2025 = vadd.f32 %v1950, %v2024
  %v2026 = vpop.f32.mrf.mxu0
  %2027 = vdwg.mxu0
  %2028 = vmatprep.subr.mxu0 0.0
  %2029 = vmatpush1.msra.mxu0 %v607
  %2030 = vmatprep.subr.mxu0 0.0
  %2031 = vmatpush1.msra.mxu0 %v606
  %2032 = vmatprep.subr.mxu0 0.0
  %2033 = vmatpush1.msra.mxu0 %v605
  %2034 = vmatprep.subr.mxu0 0.0
  %2035 = vmatpush1.msra.mxu0 %v604
  %2036 = vmatprep.subr.mxu0 0.0
  %2037 = vmatpush1.msra.mxu0 %v603
  %2038 = vmatprep.subr.mxu0 0.0
  %2039 = vmatpush1.msra.mxu0 %v602
  %2040 = vmatprep.subr.mxu0 0.0
  %2041 = vmatpush1.msra.mxu0 %v601
  %2042 = vmatprep.subr.mxu0 0.0
  %2043 = vmatpush1.msra.mxu0 %v600
  %2044 = vmatprep.subr.mxu0 0.0
  %2045 = vmatpush1.msra.mxu0 %v599
  %2046 = vmatprep.subr.mxu0 0.0
  %2047 = vmatpush1.msra.mxu0 %v598
  %2048 = vmatprep.subr.mxu0 0.0
  %2049 = vmatpush1.msra.mxu0 %v597
  %2050 = vmatprep.subr.mxu0 0.0
  %2051 = vmatpush1.msra.mxu0 %v596
  %2052 = vmatprep.subr.mxu0 0.0
  %2053 = vmatpush1.msra.mxu0 %v595
  %2054 = vmatprep.subr.mxu0 0.0
  %2055 = vmatpush1.msra.mxu0 %v594
  %2056 = vmatprep.subr.mxu0 0.0
  %2057 = vmatpush1.msra.mxu0 %v593
  %2058 = vmatprep.subr.mxu0 0.0
  %2059 = vmatpush1.msra.mxu0 %v592
  %2060 = vmatprep.subr.mxu0 0.0
  %2061 = vmatpush2.msra.mxu0 %v623
  %2062 = vmatprep.subr.mxu0 0.0
  %2063 = vmatpush2.msra.mxu0 %v622
  %2064 = vmatprep.subr.mxu0 0.0
  %2065 = vmatpush2.msra.mxu0 %v621
  %2066 = vmatprep.subr.mxu0 0.0
  %2067 = vmatpush2.msra.mxu0 %v620
  %2068 = vmatprep.subr.mxu0 0.0
  %2069 = vmatpush2.msra.mxu0 %v619
  %2070 = vmatprep.subr.mxu0 0.0
  %2071 = vmatpush2.msra.mxu0 %v618
  %2072 = vmatprep.subr.mxu0 0.0
  %2073 = vmatpush2.msra.mxu0 %v617
  %2074 = vmatprep.subr.mxu0 0.0
  %2075 = vmatpush2.msra.mxu0 %v616
  %2076 = vmatprep.subr.mxu0 0.0
  %2077 = vmatpush2.msra.mxu0 %v615
  %2078 = vmatprep.subr.mxu0 0.0
  %2079 = vmatpush2.msra.mxu0 %v614
  %2080 = vmatprep.subr.mxu0 0.0
  %2081 = vmatpush2.msra.mxu0 %v613
  %2082 = vmatprep.subr.mxu0 0.0
  %2083 = vmatpush2.msra.mxu0 %v612
  %2084 = vmatprep.subr.mxu0 0.0
  %2085 = vmatpush2.msra.mxu0 %v611
  %2086 = vmatprep.subr.mxu0 0.0
  %2087 = vmatpush2.msra.mxu0 %v610
  %2088 = vmatprep.subr.mxu0 0.0
  %2089 = vmatpush2.msra.mxu0 %v609
  %2090 = vmatprep.subr.mxu0 0.0
  %2091 = vmatpush2.msra.mxu0 %v608
  %2092 = vmatprep.mubr.f32.mxu0 %v45
  %2093 = vmatmul.mubr.f32.gmra.mxu0 %v44
  %v2094 = vpop.f32.mrf.mxu0
  %v2095 = vadd.f32 %v2020, %v2094
  %v2096 = vpop.f32.mrf.mxu0
  %2097 = vmatprep.mubr.f32.mxu0 %v94
  %2098 = vmatmul.mubr.f32.gmra.mxu0 %v93
  %v2099 = vpop.f32.mrf.mxu0
  %v2100 = vadd.f32 %v2025, %v2099
  %v2101 = vpop.f32.mrf.mxu0
  %2102 = vdwg.mxu0
  %2103 = vmatprep.subr.mxu0 0.0
  %2104 = vmatpush1.msra.mxu0 %v639
  %2105 = vmatprep.subr.mxu0 0.0
  %2106 = vmatpush1.msra.mxu0 %v638
  %2107 = vmatprep.subr.mxu0 0.0
  %2108 = vmatpush1.msra.mxu0 %v637
  %2109 = vmatprep.subr.mxu0 0.0
  %2110 = vmatpush1.msra.mxu0 %v636
  %2111 = vmatprep.subr.mxu0 0.0
  %2112 = vmatpush1.msra.mxu0 %v635
  %2113 = vmatprep.subr.mxu0 0.0
  %2114 = vmatpush1.msra.mxu0 %v634
  %2115 = vmatprep.subr.mxu0 0.0
  %2116 = vmatpush1.msra.mxu0 %v633
  %2117 = vmatprep.subr.mxu0 0.0
  %2118 = vmatpush1.msra.mxu0 %v632
  %2119 = vmatprep.subr.mxu0 0.0
  %2120 = vmatpush1.msra.mxu0 %v631
  %2121 = vmatprep.subr.mxu0 0.0
  %2122 = vmatpush1.msra.mxu0 %v630
  %2123 = vmatprep.subr.mxu0 0.0
  %2124 = vmatpush1.msra.mxu0 %v629
  %2125 = vmatprep.subr.mxu0 0.0
  %2126 = vmatpush1.msra.mxu0 %v628
  %2127 = vmatprep.subr.mxu0 0.0
  %2128 = vmatpush1.msra.mxu0 %v627
  %2129 = vmatprep.subr.mxu0 0.0
  %2130 = vmatpush1.msra.mxu0 %v626
  %2131 = vmatprep.subr.mxu0 0.0
  %2132 = vmatpush1.msra.mxu0 %v625
  %2133 = vmatprep.subr.mxu0 0.0
  %2134 = vmatpush1.msra.mxu0 %v624
  %2135 = vmatprep.subr.mxu0 0.0
  %2136 = vmatpush2.msra.mxu0 %v655
  %2137 = vmatprep.subr.mxu0 0.0
  %2138 = vmatpush2.msra.mxu0 %v654
  %2139 = vmatprep.subr.mxu0 0.0
  %2140 = vmatpush2.msra.mxu0 %v653
  %2141 = vmatprep.subr.mxu0 0.0
  %2142 = vmatpush2.msra.mxu0 %v652
  %2143 = vmatprep.subr.mxu0 0.0
  %2144 = vmatpush2.msra.mxu0 %v651
  %2145 = vmatprep.subr.mxu0 0.0
  %2146 = vmatpush2.msra.mxu0 %v650
  %2147 = vmatprep.subr.mxu0 0.0
  %2148 = vmatpush2.msra.mxu0 %v649
  %2149 = vmatprep.subr.mxu0 0.0
  %2150 = vmatpush2.msra.mxu0 %v648
  %2151 = vmatprep.subr.mxu0 0.0
  %2152 = vmatpush2.msra.mxu0 %v647
  %2153 = vmatprep.subr.mxu0 0.0
  %2154 = vmatpush2.msra.mxu0 %v646
  %2155 = vmatprep.subr.mxu0 0.0
  %2156 = vmatpush2.msra.mxu0 %v645
  %2157 = vmatprep.subr.mxu0 0.0
  %2158 = vmatpush2.msra.mxu0 %v644
  %2159 = vmatprep.subr.mxu0 0.0
  %2160 = vmatpush2.msra.mxu0 %v643
  %2161 = vmatprep.subr.mxu0 0.0
  %2162 = vmatpush2.msra.mxu0 %v642
  %2163 = vmatprep.subr.mxu0 0.0
  %2164 = vmatpush2.msra.mxu0 %v641
  %2165 = vmatprep.subr.mxu0 0.0
  %2166 = vmatpush2.msra.mxu0 %v640
  %2167 = vmatprep.mubr.f32.mxu0 %v47
  %2168 = vmatmul.mubr.f32.gmra.mxu0 %v46
  %v2169 = vpop.f32.mrf.mxu0
  %v2170 = vadd.f32 %v2095, %v2169
  %v2171 = vpop.f32.mrf.mxu0
  %2172 = vmatprep.mubr.f32.mxu0 %v96
  %2173 = vmatmul.mubr.f32.gmra.mxu0 %v95
  %v2174 = vpop.f32.mrf.mxu0
  %v2175 = vadd.f32 %v2100, %v2174
  %v2176 = vpop.f32.mrf.mxu0
  %2177 = vdwg.mxu0
  %2178 = vmatprep.subr.mxu0 0.0
  %2179 = vmatpush1.msra.mxu0 %v671
  %2180 = vmatprep.subr.mxu0 0.0
  %2181 = vmatpush1.msra.mxu0 %v670
  %2182 = vmatprep.subr.mxu0 0.0
  %2183 = vmatpush1.msra.mxu0 %v669
  %2184 = vmatprep.subr.mxu0 0.0
  %2185 = vmatpush1.msra.mxu0 %v668
  %2186 = vmatprep.subr.mxu0 0.0
  %2187 = vmatpush1.msra.mxu0 %v667
  %2188 = vmatprep.subr.mxu0 0.0
  %2189 = vmatpush1.msra.mxu0 %v666
  %2190 = vmatprep.subr.mxu0 0.0
  %2191 = vmatpush1.msra.mxu0 %v665
  %2192 = vmatprep.subr.mxu0 0.0
  %2193 = vmatpush1.msra.mxu0 %v664
  %2194 = vmatprep.subr.mxu0 0.0
  %2195 = vmatpush1.msra.mxu0 %v663
  %2196 = vmatprep.subr.mxu0 0.0
  %2197 = vmatpush1.msra.mxu0 %v662
  %2198 = vmatprep.subr.mxu0 0.0
  %2199 = vmatpush1.msra.mxu0 %v661
  %2200 = vmatprep.subr.mxu0 0.0
  %2201 = vmatpush1.msra.mxu0 %v660
  %2202 = vmatprep.subr.mxu0 0.0
  %2203 = vmatpush1.msra.mxu0 %v659
  %2204 = vmatprep.subr.mxu0 0.0
  %2205 = vmatpush1.msra.mxu0 %v658
  %2206 = vmatprep.subr.mxu0 0.0
  %2207 = vmatpush1.msra.mxu0 %v657
  %2208 = vmatprep.subr.mxu0 0.0
  %2209 = vmatpush1.msra.mxu0 %v656
  %2210 = vmatprep.subr.mxu0 0.0
  %2211 = vmatpush2.msra.mxu0 %v687
  %2212 = vmatprep.subr.mxu0 0.0
  %2213 = vmatpush2.msra.mxu0 %v686
  %2214 = vmatprep.subr.mxu0 0.0
  %2215 = vmatpush2.msra.mxu0 %v685
  %2216 = vmatprep.subr.mxu0 0.0
  %2217 = vmatpush2.msra.mxu0 %v684
  %2218 = vmatprep.subr.mxu0 0.0
  %2219 = vmatpush2.msra.mxu0 %v683
  %2220 = vmatprep.subr.mxu0 0.0
  %2221 = vmatpush2.msra.mxu0 %v682
  %2222 = vmatprep.subr.mxu0 0.0
  %2223 = vmatpush2.msra.mxu0 %v681
  %2224 = vmatprep.subr.mxu0 0.0
  %2225 = vmatpush2.msra.mxu0 %v680
  %2226 = vmatprep.subr.mxu0 0.0
  %2227 = vmatpush2.msra.mxu0 %v679
  %2228 = vmatprep.subr.mxu0 0.0
  %2229 = vmatpush2.msra.mxu0 %v678
  %2230 = vmatprep.subr.mxu0 0.0
  %2231 = vmatpush2.msra.mxu0 %v677
  %2232 = vmatprep.subr.mxu0 0.0
  %2233 = vmatpush2.msra.mxu0 %v676
  %2234 = vmatprep.subr.mxu0 0.0
  %2235 = vmatpush2.msra.mxu0 %v675
  %2236 = vmatprep.subr.mxu0 0.0
  %2237 = vmatpush2.msra.mxu0 %v674
  %2238 = vmatprep.subr.mxu0 0.0
  %2239 = vmatpush2.msra.mxu0 %v673
  %2240 = vmatprep.subr.mxu0 0.0
  %2241 = vmatpush2.msra.mxu0 %v672
  %2242 = vmatprep.mubr.f32.mxu0 %v49
  %2243 = vmatmul.mubr.f32.gmra.mxu0 %v48
  %v2244 = vpop.f32.mrf.mxu0
  %v2245 = vadd.f32 %v2170, %v2244
  %v2246 = vpop.f32.mrf.mxu0
  %2247 = vmatprep.mubr.f32.mxu0 %v98
  %2248 = vmatmul.mubr.f32.gmra.mxu0 %v97
  %v2249 = vpop.f32.mrf.mxu0
  %v2250 = vadd.f32 %v2175, %v2249
  %v2251 = vpop.f32.mrf.mxu0
  %2252 = vdwg.mxu0
  %2253 = vmatprep.subr.mxu0 0.0
  %2254 = vmatpush1.msra.mxu0 %v703
  %2255 = vmatprep.subr.mxu0 0.0
  %2256 = vmatpush1.msra.mxu0 %v702
  %2257 = vmatprep.subr.mxu0 0.0
  %2258 = vmatpush1.msra.mxu0 %v701
  %2259 = vmatprep.subr.mxu0 0.0
  %2260 = vmatpush1.msra.mxu0 %v700
  %2261 = vmatprep.subr.mxu0 0.0
  %2262 = vmatpush1.msra.mxu0 %v699
  %2263 = vmatprep.subr.mxu0 0.0
  %2264 = vmatpush1.msra.mxu0 %v698
  %2265 = vmatprep.subr.mxu0 0.0
  %2266 = vmatpush1.msra.mxu0 %v697
  %2267 = vmatprep.subr.mxu0 0.0
  %2268 = vmatpush1.msra.mxu0 %v696
  %2269 = vmatprep.subr.mxu0 0.0
  %2270 = vmatpush1.msra.mxu0 %v695
  %2271 = vmatprep.subr.mxu0 0.0
  %2272 = vmatpush1.msra.mxu0 %v694
  %2273 = vmatprep.subr.mxu0 0.0
  %2274 = vmatpush1.msra.mxu0 %v693
  %2275 = vmatprep.subr.mxu0 0.0
  %2276 = vmatpush1.msra.mxu0 %v692
  %2277 = vmatprep.subr.mxu0 0.0
  %2278 = vmatpush1.msra.mxu0 %v691
  %2279 = vmatprep.subr.mxu0 0.0
  %2280 = vmatpush1.msra.mxu0 %v690
  %2281 = vmatprep.subr.mxu0 0.0
  %2282 = vmatpush1.msra.mxu0 %v689
  %2283 = vmatprep.subr.mxu0 0.0
  %2284 = vmatpush1.msra.mxu0 %v688
  %2285 = vmatprep.subr.mxu0 0.0
  %2286 = vmatpush2.msra.mxu0 %v719
  %2287 = vmatprep.subr.mxu0 0.0
  %2288 = vmatpush2.msra.mxu0 %v718
  %2289 = vmatprep.subr.mxu0 0.0
  %2290 = vmatpush2.msra.mxu0 %v717
  %2291 = vmatprep.subr.mxu0 0.0
  %2292 = vmatpush2.msra.mxu0 %v716
  %2293 = vmatprep.subr.mxu0 0.0
  %2294 = vmatpush2.msra.mxu0 %v715
  %2295 = vmatprep.subr.mxu0 0.0
  %2296 = vmatpush2.msra.mxu0 %v714
  %2297 = vmatprep.subr.mxu0 0.0
  %2298 = vmatpush2.msra.mxu0 %v713
  %2299 = vmatprep.subr.mxu0 0.0
  %2300 = vmatpush2.msra.mxu0 %v712
  %2301 = vmatprep.subr.mxu0 0.0
  %2302 = vmatpush2.msra.mxu0 %v711
  %2303 = vmatprep.subr.mxu0 0.0
  %2304 = vmatpush2.msra.mxu0 %v710
  %2305 = vmatprep.subr.mxu0 0.0
  %2306 = vmatpush2.msra.mxu0 %v709
  %2307 = vmatprep.subr.mxu0 0.0
  %2308 = vmatpush2.msra.mxu0 %v708
  %2309 = vmatprep.subr.mxu0 0.0
  %2310 = vmatpush2.msra.mxu0 %v707
  %2311 = vmatprep.subr.mxu0 0.0
  %2312 = vmatpush2.msra.mxu0 %v706
  %2313 = vmatprep.subr.mxu0 0.0
  %2314 = vmatpush2.msra.mxu0 %v705
  %2315 = vmatprep.subr.mxu0 0.0
  %2316 = vmatpush2.msra.mxu0 %v704
  %2317 = vmatprep.mubr.f32.mxu0 %v51
  %2318 = vmatmul.mubr.f32.gmra.mxu0 %v50
  %v2319 = vpop.f32.mrf.mxu0
  %v2320 = vadd.f32 %v2245, %v2319
  %v2321 = vpop.f32.mrf.mxu0
  %2322 = vmatprep.mubr.f32.mxu0 %v100
  %2323 = vmatmul.mubr.f32.gmra.mxu0 %v99
  %v2324 = vpop.f32.mrf.mxu0
  %v2325 = vadd.f32 %v2250, %v2324
  %v2326 = vpop.f32.mrf.mxu0
  %2327 = vdwg.mxu0
  %2328 = vmatprep.subr.mxu0 0.0
  %2329 = vmatpush1.msra.mxu0 %v735
  %2330 = vmatprep.subr.mxu0 0.0
  %2331 = vmatpush1.msra.mxu0 %v734
  %2332 = vmatprep.subr.mxu0 0.0
  %2333 = vmatpush1.msra.mxu0 %v733
  %2334 = vmatprep.subr.mxu0 0.0
  %2335 = vmatpush1.msra.mxu0 %v732
  %2336 = vmatprep.subr.mxu0 0.0
  %2337 = vmatpush1.msra.mxu0 %v731
  %2338 = vmatprep.subr.mxu0 0.0
  %2339 = vmatpush1.msra.mxu0 %v730
  %2340 = vmatprep.subr.mxu0 0.0
  %2341 = vmatpush1.msra.mxu0 %v729
  %2342 = vmatprep.subr.mxu0 0.0
  %2343 = vmatpush1.msra.mxu0 %v728
  %2344 = vmatprep.subr.mxu0 0.0
  %2345 = vmatpush1.msra.mxu0 %v727
  %2346 = vmatprep.subr.mxu0 0.0
  %2347 = vmatpush1.msra.mxu0 %v726
  %2348 = vmatprep.subr.mxu0 0.0
  %2349 = vmatpush1.msra.mxu0 %v725
  %2350 = vmatprep.subr.mxu0 0.0
  %2351 = vmatpush1.msra.mxu0 %v724
  %2352 = vmatprep.subr.mxu0 0.0
  %2353 = vmatpush1.msra.mxu0 %v723
  %2354 = vmatprep.subr.mxu0 0.0
  %2355 = vmatpush1.msra.mxu0 %v722
  %2356 = vmatprep.subr.mxu0 0.0
  %2357 = vmatpush1.msra.mxu0 %v721
  %2358 = vmatprep.subr.mxu0 0.0
  %2359 = vmatpush1.msra.mxu0 %v720
  %2360 = vmatprep.subr.mxu0 0.0
  %2361 = vmatpush2.msra.mxu0 %v751
  %2362 = vmatprep.subr.mxu0 0.0
  %2363 = vmatpush2.msra.mxu0 %v750
  %2364 = vmatprep.subr.mxu0 0.0
  %2365 = vmatpush2.msra.mxu0 %v749
  %2366 = vmatprep.subr.mxu0 0.0
  %2367 = vmatpush2.msra.mxu0 %v748
  %2368 = vmatprep.subr.mxu0 0.0
  %2369 = vmatpush2.msra.mxu0 %v747
  %2370 = vmatprep.subr.mxu0 0.0
  %2371 = vmatpush2.msra.mxu0 %v746
  %2372 = vmatprep.subr.mxu0 0.0
  %2373 = vmatpush2.msra.mxu0 %v745
  %2374 = vmatprep.subr.mxu0 0.0
  %2375 = vmatpush2.msra.mxu0 %v744
  %2376 = vmatprep.subr.mxu0 0.0
  %2377 = vmatpush2.msra.mxu0 %v743
  %2378 = vmatprep.subr.mxu0 0.0
  %2379 = vmatpush2.msra.mxu0 %v742
  %2380 = vmatprep.subr.mxu0 0.0
  %2381 = vmatpush2.msra.mxu0 %v741
  %2382 = vmatprep.subr.mxu0 0.0
  %2383 = vmatpush2.msra.mxu0 %v740
  %2384 = vmatprep.subr.mxu0 0.0
  %2385 = vmatpush2.msra.mxu0 %v739
  %2386 = vmatprep.subr.mxu0 0.0
  %2387 = vmatpush2.msra.mxu0 %v738
  %2388 = vmatprep.subr.mxu0 0.0
  %2389 = vmatpush2.msra.mxu0 %v737
  %2390 = vmatprep.subr.mxu0 0.0
  %2391 = vmatpush2.msra.mxu0 %v736
  %2392 = vmatprep.mubr.f32.mxu0 %v53
  %2393 = vmatmul.mubr.f32.gmra.mxu0 %v52
  %v2394 = vpop.f32.mrf.mxu0
  %v2395 = vadd.f32 %v2320, %v2394
  %v2396 = vpop.f32.mrf.mxu0
  %2397 = vmatprep.mubr.f32.mxu0 %v102
  %2398 = vmatmul.mubr.f32.gmra.mxu0 %v101
  %v2399 = vpop.f32.mrf.mxu0
  %v2400 = vadd.f32 %v2325, %v2399
  %v2401 = vpop.f32.mrf.mxu0
  %2402 = vdwg.mxu0
  %2403 = vmatprep.subr.mxu0 0.0
  %2404 = vmatpush1.msra.mxu0 %v767
  %2405 = vmatprep.subr.mxu0 0.0
  %2406 = vmatpush1.msra.mxu0 %v766
  %2407 = vmatprep.subr.mxu0 0.0
  %2408 = vmatpush1.msra.mxu0 %v765
  %2409 = vmatprep.subr.mxu0 0.0
  %2410 = vmatpush1.msra.mxu0 %v764
  %2411 = vmatprep.subr.mxu0 0.0
  %2412 = vmatpush1.msra.mxu0 %v763
  %2413 = vmatprep.subr.mxu0 0.0
  %2414 = vmatpush1.msra.mxu0 %v762
  %2415 = vmatprep.subr.mxu0 0.0
  %2416 = vmatpush1.msra.mxu0 %v761
  %2417 = vmatprep.subr.mxu0 0.0
  %2418 = vmatpush1.msra.mxu0 %v760
  %2419 = vmatprep.subr.mxu0 0.0
  %2420 = vmatpush1.msra.mxu0 %v759
  %2421 = vmatprep.subr.mxu0 0.0
  %2422 = vmatpush1.msra.mxu0 %v758
  %2423 = vmatprep.subr.mxu0 0.0
  %2424 = vmatpush1.msra.mxu0 %v757
  %2425 = vmatprep.subr.mxu0 0.0
  %2426 = vmatpush1.msra.mxu0 %v756
  %2427 = vmatprep.subr.mxu0 0.0
  %2428 = vmatpush1.msra.mxu0 %v755
  %2429 = vmatprep.subr.mxu0 0.0
  %2430 = vmatpush1.msra.mxu0 %v754
  %2431 = vmatprep.subr.mxu0 0.0
  %2432 = vmatpush1.msra.mxu0 %v753
  %2433 = vmatprep.subr.mxu0 0.0
  %2434 = vmatpush1.msra.mxu0 %v752
  %2435 = vmatprep.subr.mxu0 0.0
  %2436 = vmatpush2.msra.mxu0 %v783
  %2437 = vmatprep.subr.mxu0 0.0
  %2438 = vmatpush2.msra.mxu0 %v782
  %2439 = vmatprep.subr.mxu0 0.0
  %2440 = vmatpush2.msra.mxu0 %v781
  %2441 = vmatprep.subr.mxu0 0.0
  %2442 = vmatpush2.msra.mxu0 %v780
  %2443 = vmatprep.subr.mxu0 0.0
  %2444 = vmatpush2.msra.mxu0 %v779
  %2445 = vmatprep.subr.mxu0 0.0
  %2446 = vmatpush2.msra.mxu0 %v778
  %2447 = vmatprep.subr.mxu0 0.0
  %2448 = vmatpush2.msra.mxu0 %v777
  %2449 = vmatprep.subr.mxu0 0.0
  %2450 = vmatpush2.msra.mxu0 %v776
  %2451 = vmatprep.subr.mxu0 0.0
  %2452 = vmatpush2.msra.mxu0 %v775
  %2453 = vmatprep.subr.mxu0 0.0
  %2454 = vmatpush2.msra.mxu0 %v774
  %2455 = vmatprep.subr.mxu0 0.0
  %2456 = vmatpush2.msra.mxu0 %v773
  %2457 = vmatprep.subr.mxu0 0.0
  %2458 = vmatpush2.msra.mxu0 %v772
  %2459 = vmatprep.subr.mxu0 0.0
  %2460 = vmatpush2.msra.mxu0 %v771
  %2461 = vmatprep.subr.mxu0 0.0
  %2462 = vmatpush2.msra.mxu0 %v770
  %2463 = vmatprep.subr.mxu0 0.0
  %2464 = vmatpush2.msra.mxu0 %v769
  %2465 = vmatprep.subr.mxu0 0.0
  %2466 = vmatpush2.msra.mxu0 %v768
  %2467 = vmatprep.mubr.f32.mxu0 %v55
  %2468 = vmatmul.mubr.f32.gmra.mxu0 %v54
  %v2469 = vpop.f32.mrf.mxu0
  %v2470 = vadd.f32 %v2395, %v2469
  %v2471 = vpop.f32.mrf.mxu0
  %2472 = vmatprep.mubr.f32.mxu0 %v104
  %2473 = vmatmul.mubr.f32.gmra.mxu0 %v103
  %v2474 = vpop.f32.mrf.mxu0
  %v2475 = vadd.f32 %v2400, %v2474
  %v2476 = vpop.f32.mrf.mxu0
  %2477 = vdwg.mxu0
  %2478 = vmatprep.subr.mxu0 0.0
  %2479 = vmatpush1.msra.mxu0 %v799
  %2480 = vmatprep.subr.mxu0 0.0
  %2481 = vmatpush1.msra.mxu0 %v798
  %2482 = vmatprep.subr.mxu0 0.0
  %2483 = vmatpush1.msra.mxu0 %v797
  %2484 = vmatprep.subr.mxu0 0.0
  %2485 = vmatpush1.msra.mxu0 %v796
  %2486 = vmatprep.subr.mxu0 0.0
  %2487 = vmatpush1.msra.mxu0 %v795
  %2488 = vmatprep.subr.mxu0 0.0
  %2489 = vmatpush1.msra.mxu0 %v794
  %2490 = vmatprep.subr.mxu0 0.0
  %2491 = vmatpush1.msra.mxu0 %v793
  %2492 = vmatprep.subr.mxu0 0.0
  %2493 = vmatpush1.msra.mxu0 %v792
  %2494 = vmatprep.subr.mxu0 0.0
  %2495 = vmatpush1.msra.mxu0 %v791
  %2496 = vmatprep.subr.mxu0 0.0
  %2497 = vmatpush1.msra.mxu0 %v790
  %2498 = vmatprep.subr.mxu0 0.0
  %2499 = vmatpush1.msra.mxu0 %v789
  %2500 = vmatprep.subr.mxu0 0.0
  %2501 = vmatpush1.msra.mxu0 %v788
  %2502 = vmatprep.subr.mxu0 0.0
  %2503 = vmatpush1.msra.mxu0 %v787
  %2504 = vmatprep.subr.mxu0 0.0
  %2505 = vmatpush1.msra.mxu0 %v786
  %2506 = vmatprep.subr.mxu0 0.0
  %2507 = vmatpush1.msra.mxu0 %v785
  %2508 = vmatprep.subr.mxu0 0.0
  %2509 = vmatpush1.msra.mxu0 %v784
  %2510 = vmatprep.subr.mxu0 0.0
  %2511 = vmatpush2.msra.mxu0 %v815
  %2512 = vmatprep.subr.mxu0 0.0
  %2513 = vmatpush2.msra.mxu0 %v814
  %2514 = vmatprep.subr.mxu0 0.0
  %2515 = vmatpush2.msra.mxu0 %v813
  %2516 = vmatprep.subr.mxu0 0.0
  %2517 = vmatpush2.msra.mxu0 %v812
  %2518 = vmatprep.subr.mxu0 0.0
  %2519 = vmatpush2.msra.mxu0 %v811
  %2520 = vmatprep.subr.mxu0 0.0
  %2521 = vmatpush2.msra.mxu0 %v810
  %2522 = vmatprep.subr.mxu0 0.0
  %2523 = vmatpush2.msra.mxu0 %v809
  %2524 = vmatprep.subr.mxu0 0.0
  %2525 = vmatpush2.msra.mxu0 %v808
  %2526 = vmatprep.subr.mxu0 0.0
  %2527 = vmatpush2.msra.mxu0 %v807
  %2528 = vmatprep.subr.mxu0 0.0
  %2529 = vmatpush2.msra.mxu0 %v806
  %2530 = vmatprep.subr.mxu0 0.0
  %2531 = vmatpush2.msra.mxu0 %v805
  %2532 = vmatprep.subr.mxu0 0.0
  %2533 = vmatpush2.msra.mxu0 %v804
  %2534 = vmatprep.subr.mxu0 0.0
  %2535 = vmatpush2.msra.mxu0 %v803
  %2536 = vmatprep.subr.mxu0 0.0
  %2537 = vmatpush2.msra.mxu0 %v802
  %2538 = vmatprep.subr.mxu0 0.0
  %2539 = vmatpush2.msra.mxu0 %v801
  %2540 = vmatprep.subr.mxu0 0.0
  %2541 = vmatpush2.msra.mxu0 %v800
  %2542 = vmatprep.mubr.f32.mxu0 %v57
  %2543 = vmatmul.mubr.f32.gmra.mxu0 %v56
  %v2544 = vpop.f32.mrf.mxu0
  %v2545 = vadd.f32 %v2470, %v2544
  %v2546 = vpop.f32.mrf.mxu0
  %2547 = vmatprep.mubr.f32.mxu0 %v106
  %2548 = vmatmul.mubr.f32.gmra.mxu0 %v105
  %v2549 = vpop.f32.mrf.mxu0
  %v2550 = vadd.f32 %v2475, %v2549
  %v2551 = vpop.f32.mrf.mxu0
  %2552 = vdwg.mxu0
  %2553 = vmatprep.subr.mxu0 0.0
  %2554 = vmatpush1.msra.mxu0 %v831
  %2555 = vmatprep.subr.mxu0 0.0
  %2556 = vmatpush1.msra.mxu0 %v830
  %2557 = vmatprep.subr.mxu0 0.0
  %2558 = vmatpush1.msra.mxu0 %v829
  %2559 = vmatprep.subr.mxu0 0.0
  %2560 = vmatpush1.msra.mxu0 %v828
  %2561 = vmatprep.subr.mxu0 0.0
  %2562 = vmatpush1.msra.mxu0 %v827
  %2563 = vmatprep.subr.mxu0 0.0
  %2564 = vmatpush1.msra.mxu0 %v826
  %2565 = vmatprep.subr.mxu0 0.0
  %2566 = vmatpush1.msra.mxu0 %v825
  %2567 = vmatprep.subr.mxu0 0.0
  %2568 = vmatpush1.msra.mxu0 %v824
  %2569 = vmatprep.subr.mxu0 0.0
  %2570 = vmatpush1.msra.mxu0 %v823
  %2571 = vmatprep.subr.mxu0 0.0
  %2572 = vmatpush1.msra.mxu0 %v822
  %2573 = vmatprep.subr.mxu0 0.0
  %2574 = vmatpush1.msra.mxu0 %v821
  %2575 = vmatprep.subr.mxu0 0.0
  %2576 = vmatpush1.msra.mxu0 %v820
  %2577 = vmatprep.subr.mxu0 0.0
  %2578 = vmatpush1.msra.mxu0 %v819
  %2579 = vmatprep.subr.mxu0 0.0
  %2580 = vmatpush1.msra.mxu0 %v818
  %2581 = vmatprep.subr.mxu0 0.0
  %2582 = vmatpush1.msra.mxu0 %v817
  %2583 = vmatprep.subr.mxu0 0.0
  %2584 = vmatpush1.msra.mxu0 %v816
  %2585 = vmatprep.subr.mxu0 0.0
  %2586 = vmatpush2.msra.mxu0 %v847
  %2587 = vmatprep.subr.mxu0 0.0
  %2588 = vmatpush2.msra.mxu0 %v846
  %2589 = vmatprep.subr.mxu0 0.0
  %2590 = vmatpush2.msra.mxu0 %v845
  %2591 = vmatprep.subr.mxu0 0.0
  %2592 = vmatpush2.msra.mxu0 %v844
  %2593 = vmatprep.subr.mxu0 0.0
  %2594 = vmatpush2.msra.mxu0 %v843
  %2595 = vmatprep.subr.mxu0 0.0
  %2596 = vmatpush2.msra.mxu0 %v842
  %2597 = vmatprep.subr.mxu0 0.0
  %2598 = vmatpush2.msra.mxu0 %v841
  %2599 = vmatprep.subr.mxu0 0.0
  %2600 = vmatpush2.msra.mxu0 %v840
  %2601 = vmatprep.subr.mxu0 0.0
  %2602 = vmatpush2.msra.mxu0 %v839
  %2603 = vmatprep.subr.mxu0 0.0
  %2604 = vmatpush2.msra.mxu0 %v838
  %2605 = vmatprep.subr.mxu0 0.0
  %2606 = vmatpush2.msra.mxu0 %v837
  %2607 = vmatprep.subr.mxu0 0.0
  %2608 = vmatpush2.msra.mxu0 %v836
  %2609 = vmatprep.subr.mxu0 0.0
  %2610 = vmatpush2.msra.mxu0 %v835
  %2611 = vmatprep.subr.mxu0 0.0
  %2612 = vmatpush2.msra.mxu0 %v834
  %2613 = vmatprep.subr.mxu0 0.0
  %2614 = vmatpush2.msra.mxu0 %v833
  %2615 = vmatprep.subr.mxu0 0.0
  %2616 = vmatpush2.msra.mxu0 %v832
  %2617 = vmatprep.mubr.f32.mxu0 %v59
  %2618 = vmatmul.mubr.f32.gmra.mxu0 %v58
  %v2619 = vpop.f32.mrf.mxu0
  %v2620 = vadd.f32 %v2545, %v2619
  %v2621 = vpop.f32.mrf.mxu0
  %2622 = vmatprep.mubr.f32.mxu0 %v108
  %2623 = vmatmul.mubr.f32.gmra.mxu0 %v107
  %v2624 = vpop.f32.mrf.mxu0
  %v2625 = vadd.f32 %v2550, %v2624
  %v2626 = vpop.f32.mrf.mxu0
  %2627 = vdwg.mxu0
  %2628 = vmatprep.subr.mxu0 0.0
  %2629 = vmatpush1.msra.mxu0 %v863
  %2630 = vmatprep.subr.mxu0 0.0
  %2631 = vmatpush1.msra.mxu0 %v862
  %2632 = vmatprep.subr.mxu0 0.0
  %2633 = vmatpush1.msra.mxu0 %v861
  %2634 = vmatprep.subr.mxu0 0.0
  %2635 = vmatpush1.msra.mxu0 %v860
  %2636 = vmatprep.subr.mxu0 0.0
  %2637 = vmatpush1.msra.mxu0 %v859
  %2638 = vmatprep.subr.mxu0 0.0
  %2639 = vmatpush1.msra.mxu0 %v858
  %2640 = vmatprep.subr.mxu0 0.0
  %2641 = vmatpush1.msra.mxu0 %v857
  %2642 = vmatprep.subr.mxu0 0.0
  %2643 = vmatpush1.msra.mxu0 %v856
  %2644 = vmatprep.subr.mxu0 0.0
  %2645 = vmatpush1.msra.mxu0 %v855
  %2646 = vmatprep.subr.mxu0 0.0
  %2647 = vmatpush1.msra.mxu0 %v854
  %2648 = vmatprep.subr.mxu0 0.0
  %2649 = vmatpush1.msra.mxu0 %v853
  %2650 = vmatprep.subr.mxu0 0.0
  %2651 = vmatpush1.msra.mxu0 %v852
  %2652 = vmatprep.subr.mxu0 0.0
  %2653 = vmatpush1.msra.mxu0 %v851
  %2654 = vmatprep.subr.mxu0 0.0
  %2655 = vmatpush1.msra.mxu0 %v850
  %2656 = vmatprep.subr.mxu0 0.0
  %2657 = vmatpush1.msra.mxu0 %v849
  %2658 = vmatprep.subr.mxu0 0.0
  %2659 = vmatpush1.msra.mxu0 %v848
  %2660 = vmatprep.subr.mxu0 0.0
  %2661 = vmatpush2.msra.mxu0 %v879
  %2662 = vmatprep.subr.mxu0 0.0
  %2663 = vmatpush2.msra.mxu0 %v878
  %2664 = vmatprep.subr.mxu0 0.0
  %2665 = vmatpush2.msra.mxu0 %v877
  %2666 = vmatprep.subr.mxu0 0.0
  %2667 = vmatpush2.msra.mxu0 %v876
  %2668 = vmatprep.subr.mxu0 0.0
  %2669 = vmatpush2.msra.mxu0 %v875
  %2670 = vmatprep.subr.mxu0 0.0
  %2671 = vmatpush2.msra.mxu0 %v874
  %2672 = vmatprep.subr.mxu0 0.0
  %2673 = vmatpush2.msra.mxu0 %v873
  %2674 = vmatprep.subr.mxu0 0.0
  %2675 = vmatpush2.msra.mxu0 %v872
  %2676 = vmatprep.subr.mxu0 0.0
  %2677 = vmatpush2.msra.mxu0 %v871
  %2678 = vmatprep.subr.mxu0 0.0
  %2679 = vmatpush2.msra.mxu0 %v870
  %2680 = vmatprep.subr.mxu0 0.0
  %2681 = vmatpush2.msra.mxu0 %v869
  %2682 = vmatprep.subr.mxu0 0.0
  %2683 = vmatpush2.msra.mxu0 %v868
  %2684 = vmatprep.subr.mxu0 0.0
  %2685 = vmatpush2.msra.mxu0 %v867
  %2686 = vmatprep.subr.mxu0 0.0
  %2687 = vmatpush2.msra.mxu0 %v866
  %2688 = vmatprep.subr.mxu0 0.0
  %2689 = vmatpush2.msra.mxu0 %v865
  %2690 = vmatprep.subr.mxu0 0.0
  %2691 = vmatpush2.msra.mxu0 %v864
  %2692 = vmatprep.mubr.f32.mxu0 %v61
  %2693 = vmatmul.mubr.f32.gmra.mxu0 %v60
  %v2694 = vpop.f32.mrf.mxu0
  %v2695 = vadd.f32 %v2620, %v2694
  %v2696 = vpop.f32.mrf.mxu0
  %2697 = vmatprep.mubr.f32.mxu0 %v110
  %2698 = vmatmul.mubr.f32.gmra.mxu0 %v109
  %v2699 = vpop.f32.mrf.mxu0
  %v2700 = vadd.f32 %v2625, %v2699
  %v2701 = vpop.f32.mrf.mxu0
  %2702 = vdwg.mxu0
  %2703 = vmatprep.subr.mxu0 0.0
  %2704 = vmatpush1.msra.mxu0 %v895
  %2705 = vmatprep.subr.mxu0 0.0
  %2706 = vmatpush1.msra.mxu0 %v894
  %2707 = vmatprep.subr.mxu0 0.0
  %2708 = vmatpush1.msra.mxu0 %v893
  %2709 = vmatprep.subr.mxu0 0.0
  %2710 = vmatpush1.msra.mxu0 %v892
  %2711 = vmatprep.subr.mxu0 0.0
  %2712 = vmatpush1.msra.mxu0 %v891
  %2713 = vmatprep.subr.mxu0 0.0
  %2714 = vmatpush1.msra.mxu0 %v890
  %2715 = vmatprep.subr.mxu0 0.0
  %2716 = vmatpush1.msra.mxu0 %v889
  %2717 = vmatprep.subr.mxu0 0.0
  %2718 = vmatpush1.msra.mxu0 %v888
  %2719 = vmatprep.subr.mxu0 0.0
  %2720 = vmatpush1.msra.mxu0 %v887
  %2721 = vmatprep.subr.mxu0 0.0
  %2722 = vmatpush1.msra.mxu0 %v886
  %2723 = vmatprep.subr.mxu0 0.0
  %2724 = vmatpush1.msra.mxu0 %v885
  %2725 = vmatprep.subr.mxu0 0.0
  %2726 = vmatpush1.msra.mxu0 %v884
  %2727 = vmatprep.subr.mxu0 0.0
  %2728 = vmatpush1.msra.mxu0 %v883
  %2729 = vmatprep.subr.mxu0 0.0
  %2730 = vmatpush1.msra.mxu0 %v882
  %2731 = vmatprep.subr.mxu0 0.0
  %2732 = vmatpush1.msra.mxu0 %v881
  %2733 = vmatprep.subr.mxu0 0.0
  %2734 = vmatpush1.msra.mxu0 %v880
  %2735 = vmatprep.subr.mxu0 0.0
  %2736 = vmatpush2.msra.mxu0 0.0
  %2737 = vmatprep.subr.mxu0 0.0
  %2738 = vmatpush2.msra.mxu0 0.0
  %2739 = vmatprep.subr.mxu0 0.0
  %2740 = vmatpush2.msra.mxu0 0.0
  %2741 = vmatprep.subr.mxu0 0.0
  %2742 = vmatpush2.msra.mxu0 0.0
  %2743 = vmatprep.subr.mxu0 0.0
  %2744 = vmatpush2.msra.mxu0 0.0
  %2745 = vmatprep.subr.mxu0 0.0
  %2746 = vmatpush2.msra.mxu0 0.0
  %2747 = vmatprep.subr.mxu0 0.0
  %2748 = vmatpush2.msra.mxu0 0.0
  %2749 = vmatprep.subr.mxu0 0.0
  %2750 = vmatpush2.msra.mxu0 0.0
  %2751 = vmatprep.subr.mxu0 0.0
  %2752 = vmatpush2.msra.mxu0 0.0
  %2753 = vmatprep.subr.mxu0 0.0
  %2754 = vmatpush2.msra.mxu0 0.0
  %2755 = vmatprep.subr.mxu0 0.0
  %2756 = vmatpush2.msra.mxu0 0.0
  %2757 = vmatprep.subr.mxu0 0.0
  %2758 = vmatpush2.msra.mxu0 0.0
  %2759 = vmatprep.subr.mxu0 0.0
  %2760 = vmatpush2.msra.mxu0 0.0
  %2761 = vmatprep.subr.mxu0 0.0
  %2762 = vmatpush2.msra.mxu0 0.0
  %2763 = vmatprep.subr.mxu0 0.0
  %2764 = vmatpush2.msra.mxu0 0.0
  %2765 = vmatprep.subr.mxu0 0.0
  %2766 = vmatpush2.msra.mxu0 0.0
  %2767 = vmatprep.mubr.f32.mxu0 0.0
  %2768 = vmatmul.mubr.f32.gmra.mxu0 %v62
  %v2769 = vpop.f32.mrf.mxu0
  %v2770 = vadd.f32 %v2695, %v2769
  %v2771 = vpop.f32.mrf.mxu0
  %2772 = vmatprep.mubr.f32.mxu0 0.0
  %2773 = vmatmul.mubr.f32.gmra.mxu0 %v111
  %v2774 = vpop.f32.mrf.mxu0
  %v2775 = vadd.f32 %v2700, %v2774
  %v2776 = vpop.f32.mrf.mxu0
  %2777 = vdwg.mxu0
  %2778 = vst [vmem:[%s3] sm:$0xff] %v2770
  %2779 = vst [vmem:[%s3 + $0x8] sm:$0xff] %v2775
  // Predicated region
  $region14: #{model_tanh_forward.5} parent=0 // pred_check
    _
  $region15: #{model_tanh_forward.5} parent=0 // pred_check_branch
    %2781 = sbr.rel (0) target = $region17
  $region16: #{model_tanh_forward.5} parent=0 // pred_region
    _
  $region17: #{model_tanh_forward.5} parent=0 // pred_fallthru
    _
  // Predicated region
  $region18: #{model_tanh_forward.5} parent=0 // pred_check
    _
  $region19: #{model_tanh_forward.5} parent=0 // pred_check_branch
    %2783 = sbr.rel (0) target = $region21
  $region20: #{model_tanh_forward.5} parent=0 // pred_region
    _
  $region21: #{model_tanh_forward.5} parent=0 // pred_fallthru
    _

</llo_original>
